<compile_context>
chip_gen: v7x
topology: tpu7x:2x2x1
jax: 0.10.0
libtpu: 0.0.40
codegen_flags: <defaults>
</compile_context>

<pallas_src>
import functools

import jax
import jax.numpy as jnp
from jax.experimental import pallas as pl
from jax.experimental.pallas import tpu as pltpu


def _pick_tile(n, candidates):
    """Largest candidate that evenly divides n, else n itself (full extent)."""
    for c in candidates:
        if n % c == 0:
            return c
    return n


# ----------------------------------------------------------------------------
# Pallas kernel 1: fused bidirectional LSTM layer, time-chunked recurrence.
#   Inputs  : proj_fwd, proj_bwd : (T, B, 4H)  (x @ W_ih + bias, precomputed)
#             whh_fwd, whh_bwd   : (H, 4H)
#   Outputs : h_fwd, h_bwd       : (T, B, H)
#   Grid    : (T // Tc,)  sequential ("arbitrary"); state lives in VMEM scratch.
# ----------------------------------------------------------------------------
def _bidir_lstm_kernel(pf_ref, pb_ref, whf_ref, whb_ref, of_ref, ob_ref,
                       hf_scr, cf_scr, hb_scr, cb_scr):
    c = pl.program_id(0)
    Tc = pf_ref.shape[0]
    H = hf_scr.shape[-1]

    @pl.when(c == 0)
    def _():
        hf_scr[...] = jnp.zeros_like(hf_scr)
        cf_scr[...] = jnp.zeros_like(cf_scr)
        hb_scr[...] = jnp.zeros_like(hb_scr)
        cb_scr[...] = jnp.zeros_like(cb_scr)

    whf = whf_ref[...]          # (H, 4H) resident for the whole chunk
    whb = whb_ref[...]

    def cell(x_t, h_prev, c_prev, whh):
        # x_t already contains x @ W_ih + (b_ih + b_hh)
        gates = x_t + jnp.dot(h_prev, whh, preferred_element_type=jnp.float32)
        i = jax.nn.sigmoid(gates[:, 0 * H:1 * H])
        f = jax.nn.sigmoid(gates[:, 1 * H:2 * H])
        g = jnp.tanh(gates[:, 2 * H:3 * H])
        o = jax.nn.sigmoid(gates[:, 3 * H:4 * H])
        c_new = f * c_prev + i * g
        h_new = o * jnp.tanh(c_new)
        return h_new, c_new

    def step(s, carry):
        # ---- forward direction: local time s of chunk c ----
        hf_new, cf_new = cell(pf_ref[s], hf_scr[...], cf_scr[...], whf)
        hf_scr[...] = hf_new
        cf_scr[...] = cf_new
        of_ref[s] = hf_new

        # ---- backward direction: local time Tc-1-s of chunk nc-1-c ----
        sr = Tc - 1 - s
        hb_new, cb_new = cell(pb_ref[sr], hb_scr[...], cb_scr[...], whb)
        hb_scr[...] = hb_new
        cb_scr[...] = cb_new
        ob_ref[sr] = hb_new
        return carry

    jax.lax.fori_loop(0, Tc, step, 0, unroll=True)


def bidir_lstm_layer(proj_f, proj_b, whh_f_t, whh_b_t):
    """proj_*: (T, B, 4H) time-major. Returns (h_fwd, h_bwd), each (T, B, H)."""
    T, B, G = proj_f.shape
    H = whh_f_t.shape[0]
    Tc = _pick_tile(T, (32, 16, 8))
    nc = T // Tc

    return pl.pallas_call(
        _bidir_lstm_kernel,
        out_shape=(jax.ShapeDtypeStruct((T, B, H), jnp.float32),
                   jax.ShapeDtypeStruct((T, B, H), jnp.float32)),
        grid_spec=pltpu.PrefetchScalarGridSpec(
            num_scalar_prefetch=0,
            grid=(nc,),
            in_specs=[
                pl.BlockSpec((Tc, B, G), lambda c: (c, 0, 0)),            # fwd chunk c
                pl.BlockSpec((Tc, B, G), lambda c: (nc - 1 - c, 0, 0)),   # bwd chunk nc-1-c
                pl.BlockSpec((H, G), lambda c: (0, 0)),
                pl.BlockSpec((H, G), lambda c: (0, 0)),
            ],
            out_specs=(
                pl.BlockSpec((Tc, B, H), lambda c: (c, 0, 0)),
                pl.BlockSpec((Tc, B, H), lambda c: (nc - 1 - c, 0, 0)),
            ),
            scratch_shapes=[
                pltpu.VMEM((B, H), jnp.float32),   # h fwd
                pltpu.VMEM((B, H), jnp.float32),   # c fwd
                pltpu.VMEM((B, H), jnp.float32),   # h bwd
                pltpu.VMEM((B, H), jnp.float32),   # c bwd
            ],
        ),
        compiler_params=pltpu.CompilerParams(
            dimension_semantics=("arbitrary",)),   # state carried across chunks
    )(proj_f, proj_b, whh_f_t, whh_b_t)


# ----------------------------------------------------------------------------
# Pallas kernel 2: fused LayerNorm(2H) + Linear(2H -> V), tiled over rows and
# vocab columns.  Takes the fwd/bwd feature halves as separate inputs so the
# concatenated (N, 2H) tensor is never materialized in HBM.
# ----------------------------------------------------------------------------
def _norm_fc_kernel(xf_ref, xb_ref, gf_ref, gb_ref, bf_ref, bb_ref,
                    wf_ref, wb_ref, bias_ref, o_ref):
    xf = xf_ref[...]                                   # (Rt, H)
    xb = xb_ref[...]                                   # (Rt, H)
    h2 = xf.shape[-1] + xb.shape[-1]

    # single-pass moments over the (virtual) concatenation of xf|xb
    s1 = jnp.sum(xf, axis=-1, keepdims=True) + jnp.sum(xb, axis=-1, keepdims=True)
    s2 = (jnp.sum(xf * xf, axis=-1, keepdims=True)
          + jnp.sum(xb * xb, axis=-1, keepdims=True))
    mean = s1 / h2
    var = s2 / h2 - mean * mean
    rstd = jax.lax.rsqrt(var + 1e-5)

    yf = (xf - mean) * rstd * gf_ref[...] + bf_ref[...]
    yb = (xb - mean) * rstd * gb_ref[...] + bb_ref[...]

    o_ref[...] = (jnp.dot(yf, wf_ref[...], preferred_element_type=jnp.float32)
                  + jnp.dot(yb, wb_ref[...], preferred_element_type=jnp.float32)
                  + bias_ref[...])


def norm_fc(xf, xb, gamma_f, gamma_b, beta_f, beta_b, wf_t, wb_t, bias):
    """xf, xb: (N, H).  Returns logits (N, V)."""
    N, H = xf.shape
    V = wf_t.shape[1]
    Rt = _pick_tile(N, (512, 256, 128, 64, 32, 16, 8))
    Vt = _pick_tile(V, (512, 256, 128))
    grid = (N // Rt, V // Vt)

    row_spec = pl.BlockSpec((Rt, H), lambda i, j: (i, 0))
    vec_spec = pl.BlockSpec((1, H), lambda i, j: (0, 0))
    w_spec = pl.BlockSpec((H, Vt), lambda i, j: (0, j))

    return pl.pallas_call(
        _norm_fc_kernel,
        out_shape=jax.ShapeDtypeStruct((N, V), jnp.float32),
        grid_spec=pltpu.PrefetchScalarGridSpec(
            num_scalar_prefetch=0,
            grid=grid,
            in_specs=[row_spec, row_spec,
                      vec_spec, vec_spec, vec_spec, vec_spec,
                      w_spec, w_spec,
                      pl.BlockSpec((1, Vt), lambda i, j: (0, j))],
            out_specs=pl.BlockSpec((Rt, Vt), lambda i, j: (i, j)),
        ),
        compiler_params=pltpu.CompilerParams(
            dimension_semantics=("parallel", "parallel")),
    )(xf, xb, gamma_f, gamma_b, beta_f, beta_b, wf_t, wb_t, bias)


# ----------------------------------------------------------------------------
# Full model forward
# ----------------------------------------------------------------------------
def lstm_corrector_forward(src, params):
    """src: (B, T) int32.  Returns logits (B, T, vocab)."""
    B, T = src.shape

    # Embedding lookup (glue; gather).  padding_idx=0 handled by zeroed row 0.
    embed = jnp.take(params["embedding"], src, axis=0)          # (B, T, E)
    # Dropout(0.3): identity in eval mode.

    x = jnp.transpose(embed, (1, 0, 2))                         # (T, B, E) time-major

    hf = hb = None
    for li, layer in enumerate(params["lstm_layers"]):
        # Hoisted input projection: one big MXU matmul (+ folded bias) per dir.
        if li == 0:
            x_flat = x.reshape(T * B, -1)
            proj_f = x_flat @ layer["fwd"]["wih_t"] + layer["fwd"]["bias"]
            proj_b = x_flat @ layer["bwd"]["wih_t"] + layer["bwd"]["bias"]
        else:
            H = hf.shape[-1]
            hf_flat = hf.reshape(T * B, H)
            hb_flat = hb.reshape(T * B, H)
            wfT = layer["fwd"]["wih_t"]                          # (2H, 4H)
            wbT = layer["bwd"]["wih_t"]
            # equals concat([hf, hb], -1) @ W  without materializing the concat
            proj_f = hf_flat @ wfT[:H] + hb_flat @ wfT[H:] + layer["fwd"]["bias"]
            proj_b = hf_flat @ wbT[:H] + hb_flat @ wbT[H:] + layer["bwd"]["bias"]

        proj_f = proj_f.reshape(T, B, -1)
        proj_b = proj_b.reshape(T, B, -1)
        hf, hb = bidir_lstm_layer(proj_f, proj_b,
                                  layer["fwd"]["whh_t"], layer["bwd"]["whh_t"])

    # Batch-major rows for the fused LayerNorm + FC (so the logits reshape
    # to (B, T, V) is free; the transposes happen on the narrow H tensors).
    H = hf.shape[-1]
    hf_bm = jnp.transpose(hf, (1, 0, 2)).reshape(B * T, H)
    hb_bm = jnp.transpose(hb, (1, 0, 2)).reshape(B * T, H)

    gamma = params["ln_gamma"]                                   # (1, 2H)
    beta = params["ln_beta"]
    w_t = params["fc_w_t"]                                       # (2H, V)
    logits_flat = norm_fc(hf_bm, hb_bm,
                          gamma[:, :H], gamma[:, H:],
                          beta[:, :H], beta[:, H:],
                          w_t[:H], w_t[H:],
                          params["fc_b"])
    V = logits_flat.shape[-1]
    return logits_flat.reshape(B, T, V)


# ----------------------------------------------------------------------------
# Deterministic parameter init (mirrors shapes of the PyTorch module)
# ----------------------------------------------------------------------------
def init_params(key, vocab_size, embed_size, hidden_size, num_layers):
    keys = jax.random.split(key, 4 + num_layers * 2 * 4)
    kidx = 0

    def nxt():
        nonlocal kidx
        k = keys[kidx]
        kidx += 1
        return k

    emb = jax.random.normal(nxt(), (vocab_size, embed_size), jnp.float32) * 0.1
    emb = emb.at[0].set(0.0)                                    # padding_idx=0

    H = hidden_size
    k_lstm = 1.0 / jnp.sqrt(jnp.float32(H))
    layers = []
    for layer in range(num_layers):
        in_feat = embed_size if layer == 0 else 2 * H
        dirs = {}
        for d in ("fwd", "bwd"):
            wih = jax.random.uniform(nxt(), (4 * H, in_feat), jnp.float32, -k_lstm, k_lstm)
            whh = jax.random.uniform(nxt(), (4 * H, H), jnp.float32, -k_lstm, k_lstm)
            bih = jax.random.uniform(nxt(), (4 * H,), jnp.float32, -k_lstm, k_lstm)
            bhh = jax.random.uniform(nxt(), (4 * H,), jnp.float32, -k_lstm, k_lstm)
            dirs[d] = {
                "wih_t": wih.T,                                 # (in_feat, 4H)
                "whh_t": whh.T,                                 # (H, 4H)
                "bias": (bih + bhh).reshape(1, 4 * H),
            }
        layers.append(dirs)

    k_fc = 1.0 / jnp.sqrt(jnp.float32(2 * H))
    fc_w = jax.random.uniform(nxt(), (vocab_size, 2 * H), jnp.float32, -k_fc, k_fc)
    fc_b = jax.random.uniform(nxt(), (vocab_size,), jnp.float32, -k_fc, k_fc)

    return {
        "embedding": emb,
        "lstm_layers": layers,
        "ln_gamma": jnp.ones((1, 2 * H), jnp.float32),
        "ln_beta": jnp.zeros((1, 2 * H), jnp.float32),
        "fc_w_t": fc_w.T,                                       # (2H, V)
        "fc_b": fc_b.reshape(1, vocab_size),
    }


# ----------------------------------------------------------------------------
# Pure-JAX reference (for a correctness sanity check)
# ----------------------------------------------------------------------------
def _ref_lstm_dir(x, wih_t, whh_t, bias):
    T, B, _ = x.shape
    H = whh_t.shape[0]

    def step(carry, xt):
        h, c = carry
        gates = xt @ wih_t + h @ whh_t + bias
        i = jax.nn.sigmoid(gates[:, :H])
        f = jax.nn.sigmoid(gates[:, H:2 * H])
        g = jnp.tanh(gates[:, 2 * H:3 * H])
        o = jax.nn.sigmoid(gates[:, 3 * H:])
        c = f * c + i * g
        h = o * jnp.tanh(c)
        return (h, c), h

    (_, _), hs = jax.lax.scan(step, (jnp.zeros((B, H)), jnp.zeros((B, H))), x)
    return hs


def _ref_forward(src, params):
    embed = jnp.take(params["embedding"], src, axis=0)
    x = jnp.transpose(embed, (1, 0, 2))
    for layer in params["lstm_layers"]:
        hf = _ref_lstm_dir(x, layer["fwd"]["wih_t"], layer["fwd"]["whh_t"], layer["fwd"]["bias"])
        hb = jnp.flip(_ref_lstm_dir(jnp.flip(x, 0), layer["bwd"]["wih_t"],
                                    layer["bwd"]["whh_t"], layer["bwd"]["bias"]), 0)
        x = jnp.concatenate([hf, hb], axis=-1)
    enc = jnp.transpose(x, (1, 0, 2))
    mean = jnp.mean(enc, -1, keepdims=True)
    var = jnp.mean((enc - mean) ** 2, -1, keepdims=True)
    y = (enc - mean) * jax.lax.rsqrt(var + 1e-5) * params["ln_gamma"][0] + params["ln_beta"][0]
    return y @ params["fc_w_t"] + params["fc_b"][0]


if __name__ == "__main__":
    VOCAB, EMBED, HIDDEN, LAYERS = 64, 32, 32, 2
    B, T = 2, 8

    key = jax.random.PRNGKey(0)
    k_param, k_src = jax.random.split(key)
    params = init_params(k_param, VOCAB, EMBED, HIDDEN, LAYERS)
    src = jax.random.randint(k_src, (B, T), 0, VOCAB, dtype=jnp.int32)

    fwd = jax.jit(functools.partial(lstm_corrector_forward, params=params))
    logits = fwd(src)
    jax.block_until_ready(logits)

    assert logits.shape == (B, T, VOCAB), logits.shape
    ref = _ref_forward(src, params)
    assert jnp.allclose(logits, ref, rtol=2e-3, atol=2e-3), "mismatch vs JAX reference"

    print("KERNEL_OK")
</pallas_src>

<mosaic_0001>
module attributes {stable_mosaic.version = 11 : i64} {
  func.func @_norm_fc_kernel(%arg0: i32, %arg1: i32, %arg2: memref<16x32xf32, #tpu.memory_space<vmem>>, %arg3: memref<16x32xf32, #tpu.memory_space<vmem>>, %arg4: memref<1x32xf32, #tpu.memory_space<vmem>>, %arg5: memref<1x32xf32, #tpu.memory_space<vmem>>, %arg6: memref<1x32xf32, #tpu.memory_space<vmem>>, %arg7: memref<1x32xf32, #tpu.memory_space<vmem>>, %arg8: memref<32x64xf32, #tpu.memory_space<vmem>>, %arg9: memref<32x64xf32, #tpu.memory_space<vmem>>, %arg10: memref<1x64xf32, #tpu.memory_space<vmem>>, %arg11: memref<16x64xf32, #tpu.memory_space<vmem>>) attributes {dimension_semantics = [#tpu.dimension_semantics<parallel>, #tpu.dimension_semantics<parallel>], iteration_bounds = array<i64: 1, 1>, scalar_prefetch = 0 : i64, scratch_operands = 0 : i64, tpu.core_type = #tpu.core_type<tc>, window_params = [{transform_indices = @transform_0, window_bounds = array<i64: 16, 32>}, {transform_indices = @transform_1, window_bounds = array<i64: 16, 32>}, {pipeline_mode = #tpu.pipeline_mode<synchronous>, transform_indices = @transform_2, window_bounds = array<i64: 1, 32>}, {pipeline_mode = #tpu.pipeline_mode<synchronous>, transform_indices = @transform_3, window_bounds = array<i64: 1, 32>}, {pipeline_mode = #tpu.pipeline_mode<synchronous>, transform_indices = @transform_4, window_bounds = array<i64: 1, 32>}, {pipeline_mode = #tpu.pipeline_mode<synchronous>, transform_indices = @transform_5, window_bounds = array<i64: 1, 32>}, {transform_indices = @transform_6, window_bounds = array<i64: 32, 64>}, {transform_indices = @transform_7, window_bounds = array<i64: 32, 64>}, {transform_indices = @transform_8, window_bounds = array<i64: 1, 64>}, {transform_indices = @transform_9, window_bounds = array<i64: 16, 64>}]} {
    %c0 = arith.constant 0 : index
    %c0_0 = arith.constant 0 : index
    %0 = vector.load %arg2[%c0, %c0_0] : memref<16x32xf32, #tpu.memory_space<vmem>>, vector<16x32xf32>
    %c0_1 = arith.constant 0 : index
    %c0_2 = arith.constant 0 : index
    %1 = vector.load %arg3[%c0_1, %c0_2] : memref<16x32xf32, #tpu.memory_space<vmem>>, vector<16x32xf32>
    %cst = arith.constant dense<0.000000e+00> : vector<16xf32>
    %2 = vector.multi_reduction <add>, %0, %cst [1] : vector<16x32xf32> to vector<16xf32>
    %3 = vector.shape_cast %2 : vector<16xf32> to vector<16x1xf32>
    %cst_3 = arith.constant dense<0.000000e+00> : vector<16xf32>
    %4 = vector.multi_reduction <add>, %1, %cst_3 [1] : vector<16x32xf32> to vector<16xf32>
    %5 = vector.shape_cast %4 : vector<16xf32> to vector<16x1xf32>
    %6 = arith.addf %3, %5 : vector<16x1xf32>
    %7 = arith.mulf %0, %0 : vector<16x32xf32>
    %cst_4 = arith.constant dense<0.000000e+00> : vector<16xf32>
    %8 = vector.multi_reduction <add>, %7, %cst_4 [1] : vector<16x32xf32> to vector<16xf32>
    %9 = vector.shape_cast %8 : vector<16xf32> to vector<16x1xf32>
    %10 = arith.mulf %1, %1 : vector<16x32xf32>
    %cst_5 = arith.constant dense<0.000000e+00> : vector<16xf32>
    %11 = vector.multi_reduction <add>, %10, %cst_5 [1] : vector<16x32xf32> to vector<16xf32>
    %12 = vector.shape_cast %11 : vector<16xf32> to vector<16x1xf32>
    %13 = arith.addf %9, %12 : vector<16x1xf32>
    %cst_6 = arith.constant 6.400000e+01 : f32
    %14 = vector.broadcast %cst_6 : f32 to vector<16x1xf32>
    %15 = arith.divf %6, %14 : vector<16x1xf32>
    %cst_7 = arith.constant 6.400000e+01 : f32
    %16 = vector.broadcast %cst_7 : f32 to vector<16x1xf32>
    %17 = arith.divf %13, %16 : vector<16x1xf32>
    %18 = arith.mulf %15, %15 : vector<16x1xf32>
    %19 = arith.subf %17, %18 : vector<16x1xf32>
    %cst_8 = arith.constant 9.99999974E-6 : f32
    %20 = vector.broadcast %cst_8 : f32 to vector<16x1xf32>
    %21 = arith.addf %19, %20 : vector<16x1xf32>
    %22 = math.rsqrt %21 : vector<16x1xf32>
    %23 = vector.broadcast %15 : vector<16x1xf32> to vector<16x32xf32>
    %24 = arith.subf %0, %23 : vector<16x32xf32>
    %25 = vector.broadcast %22 : vector<16x1xf32> to vector<16x32xf32>
    %26 = arith.mulf %24, %25 : vector<16x32xf32>
    %c0_9 = arith.constant 0 : index
    %c0_10 = arith.constant 0 : index
    %27 = vector.load %arg4[%c0_9, %c0_10] : memref<1x32xf32, #tpu.memory_space<vmem>>, vector<1x32xf32>
    %28 = vector.broadcast %27 : vector<1x32xf32> to vector<16x32xf32>
    %29 = arith.mulf %26, %28 : vector<16x32xf32>
    %c0_11 = arith.constant 0 : index
    %c0_12 = arith.constant 0 : index
    %30 = vector.load %arg6[%c0_11, %c0_12] : memref<1x32xf32, #tpu.memory_space<vmem>>, vector<1x32xf32>
    %31 = vector.broadcast %30 : vector<1x32xf32> to vector<16x32xf32>
    %32 = arith.addf %29, %31 : vector<16x32xf32>
    %33 = vector.broadcast %15 : vector<16x1xf32> to vector<16x32xf32>
    %34 = arith.subf %1, %33 : vector<16x32xf32>
    %35 = vector.broadcast %22 : vector<16x1xf32> to vector<16x32xf32>
    %36 = arith.mulf %34, %35 : vector<16x32xf32>
    %c0_13 = arith.constant 0 : index
    %c0_14 = arith.constant 0 : index
    %37 = vector.load %arg5[%c0_13, %c0_14] : memref<1x32xf32, #tpu.memory_space<vmem>>, vector<1x32xf32>
    %38 = vector.broadcast %37 : vector<1x32xf32> to vector<16x32xf32>
    %39 = arith.mulf %36, %38 : vector<16x32xf32>
    %c0_15 = arith.constant 0 : index
    %c0_16 = arith.constant 0 : index
    %40 = vector.load %arg7[%c0_15, %c0_16] : memref<1x32xf32, #tpu.memory_space<vmem>>, vector<1x32xf32>
    %41 = vector.broadcast %40 : vector<1x32xf32> to vector<16x32xf32>
    %42 = arith.addf %39, %41 : vector<16x32xf32>
    %c0_17 = arith.constant 0 : index
    %c0_18 = arith.constant 0 : index
    %43 = vector.load %arg8[%c0_17, %c0_18] : memref<32x64xf32, #tpu.memory_space<vmem>>, vector<32x64xf32>
    %cst_19 = arith.constant dense<0.000000e+00> : vector<16x64xf32>
    %44 = tpu.matmul %32, %43, %cst_19 {dimension_numbers = #tpu.dot_dimension_numbers<[1], [0], [0], [1], [0, 0, 1, 1], [], []>} : vector<16x32xf32>, vector<32x64xf32>, vector<16x64xf32> -> vector<16x64xf32>
    %c0_20 = arith.constant 0 : index
    %c0_21 = arith.constant 0 : index
    %45 = vector.load %arg9[%c0_20, %c0_21] : memref<32x64xf32, #tpu.memory_space<vmem>>, vector<32x64xf32>
    %cst_22 = arith.constant dense<0.000000e+00> : vector<16x64xf32>
    %46 = tpu.matmul %42, %45, %cst_22 {dimension_numbers = #tpu.dot_dimension_numbers<[1], [0], [0], [1], [0, 0, 1, 1], [], []>} : vector<16x32xf32>, vector<32x64xf32>, vector<16x64xf32> -> vector<16x64xf32>
    %47 = arith.addf %44, %46 : vector<16x64xf32>
    %c0_23 = arith.constant 0 : index
    %c0_24 = arith.constant 0 : index
    %48 = vector.load %arg10[%c0_23, %c0_24] : memref<1x64xf32, #tpu.memory_space<vmem>>, vector<1x64xf32>
    %49 = vector.broadcast %48 : vector<1x64xf32> to vector<16x64xf32>
    %50 = arith.addf %47, %49 : vector<16x64xf32>
    %c0_25 = arith.constant 0 : index
    %c0_26 = arith.constant 0 : index
    %51 = vector.load %arg11[%c0_25, %c0_26] : memref<16x64xf32, #tpu.memory_space<vmem>>, vector<16x64xf32>
    tpu.vector_store %arg11[%c0_25, %c0_26], %50 {strides = array<i32>} : memref<16x64xf32, #tpu.memory_space<vmem>>, vector<16x64xf32>,
    return
  }
  func.func @transform_0(%arg0: i32, %arg1: i32) -> (i32, i32) {
    %c0_i32 = arith.constant 0 : i32
    %c0_i32_0 = arith.constant 0 : i32
    return %arg0, %c0_i32 : i32, i32
  }
  func.func @transform_1(%arg0: i32, %arg1: i32) -> (i32, i32) {
    %c0_i32 = arith.constant 0 : i32
    %c0_i32_0 = arith.constant 0 : i32
    return %arg0, %c0_i32 : i32, i32
  }
  func.func @transform_2(%arg0: i32, %arg1: i32) -> (i32, i32) {
    %c0_i32 = arith.constant 0 : i32
    %c0_i32_0 = arith.constant 0 : i32
    %c0_i32_1 = arith.constant 0 : i32
    return %c0_i32, %c0_i32_0 : i32, i32
  }
  func.func @transform_3(%arg0: i32, %arg1: i32) -> (i32, i32) {
    %c0_i32 = arith.constant 0 : i32
    %c0_i32_0 = arith.constant 0 : i32
    %c0_i32_1 = arith.constant 0 : i32
    return %c0_i32, %c0_i32_0 : i32, i32
  }
  func.func @transform_4(%arg0: i32, %arg1: i32) -> (i32, i32) {
    %c0_i32 = arith.constant 0 : i32
    %c0_i32_0 = arith.constant 0 : i32
    %c0_i32_1 = arith.constant 0 : i32
    return %c0_i32, %c0_i32_0 : i32, i32
  }
  func.func @transform_5(%arg0: i32, %arg1: i32) -> (i32, i32) {
    %c0_i32 = arith.constant 0 : i32
    %c0_i32_0 = arith.constant 0 : i32
    %c0_i32_1 = arith.constant 0 : i32
    return %c0_i32, %c0_i32_0 : i32, i32
  }
  func.func @transform_6(%arg0: i32, %arg1: i32) -> (i32, i32) {
    %c0_i32 = arith.constant 0 : i32
    %c0_i32_0 = arith.constant 0 : i32
    return %c0_i32, %arg1 : i32, i32
  }
  func.func @transform_7(%arg0: i32, %arg1: i32) -> (i32, i32) {
    %c0_i32 = arith.constant 0 : i32
    %c0_i32_0 = arith.constant 0 : i32
    return %c0_i32, %arg1 : i32, i32
  }
  func.func @transform_8(%arg0: i32, %arg1: i32) -> (i32, i32) {
    %c0_i32 = arith.constant 0 : i32
    %c0_i32_0 = arith.constant 0 : i32
    return %c0_i32, %arg1 : i32, i32
  }
  func.func @transform_9(%arg0: i32, %arg1: i32) -> (i32, i32) {
    %c0_i32 = arith.constant 0 : i32
    return %arg0, %arg1 : i32, i32
  }
}

module attributes {stable_mosaic.version = 11 : i64} {
  func.func @_bidir_lstm_kernel(%arg0: i32, %arg1: memref<8x2x128xf32, #tpu.memory_space<vmem>>, %arg2: memref<8x2x128xf32, #tpu.memory_space<vmem>>, %arg3: memref<32x128xf32, #tpu.memory_space<vmem>>, %arg4: memref<32x128xf32, #tpu.memory_space<vmem>>, %arg5: memref<8x2x32xf32, #tpu.memory_space<vmem>>, %arg6: memref<8x2x32xf32, #tpu.memory_space<vmem>>, %arg7: memref<2x32xf32, #tpu.memory_space<vmem>>, %arg8: memref<2x32xf32, #tpu.memory_space<vmem>>, %arg9: memref<2x32xf32, #tpu.memory_space<vmem>>, %arg10: memref<2x32xf32, #tpu.memory_space<vmem>>) attributes {dimension_semantics = [#tpu.dimension_semantics<arbitrary>], iteration_bounds = array<i64: 1>, scalar_prefetch = 0 : i64, scratch_operands = 4 : i64, tpu.core_type = #tpu.core_type<tc>, window_params = [{transform_indices = @transform_0, window_bounds = array<i64: 8, 2, 128>}, {transform_indices = @transform_1, window_bounds = array<i64: 8, 2, 128>}, {pipeline_mode = #tpu.pipeline_mode<synchronous>, transform_indices = @transform_2, window_bounds = array<i64: 32, 128>}, {pipeline_mode = #tpu.pipeline_mode<synchronous>, transform_indices = @transform_3, window_bounds = array<i64: 32, 128>}, {transform_indices = @transform_4, window_bounds = array<i64: 8, 2, 32>}, {transform_indices = @transform_5, window_bounds = array<i64: 8, 2, 32>}]} {
    %c0_i32 = arith.constant 0 : i32
    %0 = arith.cmpi eq, %arg0, %c0_i32 : i32
    %1 = arith.extui %0 : i1 to i32
    %c0_i32_0 = arith.constant 0 : i32
    %2 = arith.cmpi ne, %1, %c0_i32_0 : i32
    scf.if %2 {
      %cst_268 = arith.constant 0.000000e+00 : f32
      %621 = vector.broadcast %cst_268 : f32 to vector<2x32xf32>
      %c0_269 = arith.constant 0 : index
      %c0_270 = arith.constant 0 : index
      %622 = vector.load %arg7[%c0_269, %c0_270] : memref<2x32xf32, #tpu.memory_space<vmem>>, vector<2x32xf32>
      tpu.vector_store %arg7[%c0_269, %c0_270], %621 {strides = array<i32>} : memref<2x32xf32, #tpu.memory_space<vmem>>, vector<2x32xf32>,
      %cst_271 = arith.constant 0.000000e+00 : f32
      %623 = vector.broadcast %cst_271 : f32 to vector<2x32xf32>
      %c0_272 = arith.constant 0 : index
      %c0_273 = arith.constant 0 : index
      %624 = vector.load %arg8[%c0_272, %c0_273] : memref<2x32xf32, #tpu.memory_space<vmem>>, vector<2x32xf32>
      tpu.vector_store %arg8[%c0_272, %c0_273], %623 {strides = array<i32>} : memref<2x32xf32, #tpu.memory_space<vmem>>, vector<2x32xf32>,
      %cst_274 = arith.constant 0.000000e+00 : f32
      %625 = vector.broadcast %cst_274 : f32 to vector<2x32xf32>
      %c0_275 = arith.constant 0 : index
      %c0_276 = arith.constant 0 : index
      %626 = vector.load %arg9[%c0_275, %c0_276] : memref<2x32xf32, #tpu.memory_space<vmem>>, vector<2x32xf32>
      tpu.vector_store %arg9[%c0_275, %c0_276], %625 {strides = array<i32>} : memref<2x32xf32, #tpu.memory_space<vmem>>, vector<2x32xf32>,
      %cst_277 = arith.constant 0.000000e+00 : f32
      %627 = vector.broadcast %cst_277 : f32 to vector<2x32xf32>
      %c0_278 = arith.constant 0 : index
      %c0_279 = arith.constant 0 : index
      %628 = vector.load %arg10[%c0_278, %c0_279] : memref<2x32xf32, #tpu.memory_space<vmem>>, vector<2x32xf32>
      tpu.vector_store %arg10[%c0_278, %c0_279], %627 {strides = array<i32>} : memref<2x32xf32, #tpu.memory_space<vmem>>, vector<2x32xf32>,
    } else {
    }
    %c0 = arith.constant 0 : index
    %c0_1 = arith.constant 0 : index
    %3 = vector.load %arg3[%c0, %c0_1] : memref<32x128xf32, #tpu.memory_space<vmem>>, vector<32x128xf32>
    %c0_2 = arith.constant 0 : index
    %c0_3 = arith.constant 0 : index
    %4 = vector.load %arg4[%c0_2, %c0_3] : memref<32x128xf32, #tpu.memory_space<vmem>>, vector<32x128xf32>
    %c0_i32_4 = arith.constant 0 : i32
    %5 = arith.index_cast %c0_i32_4 : i32 to index
    %c0_5 = arith.constant 0 : index
    %c0_6 = arith.constant 0 : index
    %6 = vector.load %arg1[%5, %c0_5, %c0_6] : memref<8x2x128xf32, #tpu.memory_space<vmem>>, vector<1x2x128xf32>
    %7 = vector.shape_cast %6 : vector<1x2x128xf32> to vector<2x128xf32>
    %c0_7 = arith.constant 0 : index
    %c0_8 = arith.constant 0 : index
    %8 = vector.load %arg7[%c0_7, %c0_8] : memref<2x32xf32, #tpu.memory_space<vmem>>, vector<2x32xf32>
    %c0_9 = arith.constant 0 : index
    %c0_10 = arith.constant 0 : index
    %9 = vector.load %arg8[%c0_9, %c0_10] : memref<2x32xf32, #tpu.memory_space<vmem>>, vector<2x32xf32>
    %cst = arith.constant dense<0.000000e+00> : vector<2x128xf32>
    %10 = tpu.matmul %8, %3, %cst {dimension_numbers = #tpu.dot_dimension_numbers<[1], [0], [0], [1], [0, 0, 1, 1], [], []>} : vector<2x32xf32>, vector<32x128xf32>, vector<2x128xf32> -> vector<2x128xf32>
    %11 = arith.addf %7, %10 : vector<2x128xf32>
    %12 = vector.extract_strided_slice %11 {offsets = [0, 0], sizes = [2, 32], strides = [1, 1]} : vector<2x128xf32> to vector<2x32xf32>
    %13 = arith.negf %12 : vector<2x32xf32>
    %14 = math.exp %13 : vector<2x32xf32>
    %cst_11 = arith.constant 1.000000e+00 : f32
    %15 = vector.broadcast %cst_11 : f32 to vector<2x32xf32>
    %16 = arith.addf %15, %14 : vector<2x32xf32>
    %17 = arith.divf %15, %16 : vector<2x32xf32>
    %18 = vector.extract_strided_slice %11 {offsets = [0, 32], sizes = [2, 32], strides = [1, 1]} : vector<2x128xf32> to vector<2x32xf32>
    %19 = arith.negf %18 : vector<2x32xf32>
    %20 = math.exp %19 : vector<2x32xf32>
    %cst_12 = arith.constant 1.000000e+00 : f32
    %21 = vector.broadcast %cst_12 : f32 to vector<2x32xf32>
    %22 = arith.addf %21, %20 : vector<2x32xf32>
    %23 = arith.divf %21, %22 : vector<2x32xf32>
    %24 = vector.extract_strided_slice %11 {offsets = [0, 64], sizes = [2, 32], strides = [1, 1]} : vector<2x128xf32> to vector<2x32xf32>
    %25 = math.tanh %24 : vector<2x32xf32>
    %26 = vector.extract_strided_slice %11 {offsets = [0, 96], sizes = [2, 32], strides = [1, 1]} : vector<2x128xf32> to vector<2x32xf32>
    %27 = arith.negf %26 : vector<2x32xf32>
    %28 = math.exp %27 : vector<2x32xf32>
    %cst_13 = arith.constant 1.000000e+00 : f32
    %29 = vector.broadcast %cst_13 : f32 to vector<2x32xf32>
    %30 = arith.addf %29, %28 : vector<2x32xf32>
    %31 = arith.divf %29, %30 : vector<2x32xf32>
    %32 = arith.mulf %23, %9 : vector<2x32xf32>
    %33 = arith.mulf %17, %25 : vector<2x32xf32>
    %34 = arith.addf %32, %33 : vector<2x32xf32>
    %35 = math.tanh %34 : vector<2x32xf32>
    %36 = arith.mulf %31, %35 : vector<2x32xf32>
    %c0_14 = arith.constant 0 : index
    %c0_15 = arith.constant 0 : index
    %37 = vector.load %arg7[%c0_14, %c0_15] : memref<2x32xf32, #tpu.memory_space<vmem>>, vector<2x32xf32>
    tpu.vector_store %arg7[%c0_14, %c0_15], %36 {strides = array<i32>} : memref<2x32xf32, #tpu.memory_space<vmem>>, vector<2x32xf32>,
    %c0_16 = arith.constant 0 : index
    %c0_17 = arith.constant 0 : index
    %38 = vector.load %arg8[%c0_16, %c0_17] : memref<2x32xf32, #tpu.memory_space<vmem>>, vector<2x32xf32>
    tpu.vector_store %arg8[%c0_16, %c0_17], %34 {strides = array<i32>} : memref<2x32xf32, #tpu.memory_space<vmem>>, vector<2x32xf32>,
    %39 = arith.index_cast %c0_i32_4 : i32 to index
    %c0_18 = arith.constant 0 : index
    %c0_19 = arith.constant 0 : index
    %40 = vector.load %arg5[%39, %c0_18, %c0_19] : memref<8x2x32xf32, #tpu.memory_space<vmem>>, vector<1x2x32xf32>
    %41 = vector.shape_cast %40 : vector<1x2x32xf32> to vector<2x32xf32>
    %42 = vector.shape_cast %36 : vector<2x32xf32> to vector<1x2x32xf32>
    tpu.vector_store %arg5[%39, %c0_18, %c0_19], %42 {strides = array<i32>} : memref<8x2x32xf32, #tpu.memory_space<vmem>>, vector<1x2x32xf32>,
    %c7_i32 = arith.constant 7 : i32
    %43 = arith.subi %c7_i32, %c0_i32_4 : i32
    %44 = arith.index_cast %43 : i32 to index
    %c0_20 = arith.constant 0 : index
    %c0_21 = arith.constant 0 : index
    %45 = vector.load %arg2[%44, %c0_20, %c0_21] : memref<8x2x128xf32, #tpu.memory_space<vmem>>, vector<1x2x128xf32>
    %46 = vector.shape_cast %45 : vector<1x2x128xf32> to vector<2x128xf32>
    %c0_22 = arith.constant 0 : index
    %c0_23 = arith.constant 0 : index
    %47 = vector.load %arg9[%c0_22, %c0_23] : memref<2x32xf32, #tpu.memory_space<vmem>>, vector<2x32xf32>
    %c0_24 = arith.constant 0 : index
    %c0_25 = arith.constant 0 : index
    %48 = vector.load %arg10[%c0_24, %c0_25] : memref<2x32xf32, #tpu.memory_space<vmem>>, vector<2x32xf32>
    %cst_26 = arith.constant dense<0.000000e+00> : vector<2x128xf32>
    %49 = tpu.matmul %47, %4, %cst_26 {dimension_numbers = #tpu.dot_dimension_numbers<[1], [0], [0], [1], [0, 0, 1, 1], [], []>} : vector<2x32xf32>, vector<32x128xf32>, vector<2x128xf32> -> vector<2x128xf32>
    %50 = arith.addf %46, %49 : vector<2x128xf32>
    %51 = vector.extract_strided_slice %50 {offsets = [0, 0], sizes = [2, 32], strides = [1, 1]} : vector<2x128xf32> to vector<2x32xf32>
    %52 = arith.negf %51 : vector<2x32xf32>
    %53 = math.exp %52 : vector<2x32xf32>
    %cst_27 = arith.constant 1.000000e+00 : f32
    %54 = vector.broadcast %cst_27 : f32 to vector<2x32xf32>
    %55 = arith.addf %54, %53 : vector<2x32xf32>
    %56 = arith.divf %54, %55 : vector<2x32xf32>
    %57 = vector.extract_strided_slice %50 {offsets = [0, 32], sizes = [2, 32], strides = [1, 1]} : vector<2x128xf32> to vector<2x32xf32>
    %58 = arith.negf %57 : vector<2x32xf32>
    %59 = math.exp %58 : vector<2x32xf32>
    %cst_28 = arith.constant 1.000000e+00 : f32
    %60 = vector.broadcast %cst_28 : f32 to vector<2x32xf32>
    %61 = arith.addf %60, %59 : vector<2x32xf32>
    %62 = arith.divf %60, %61 : vector<2x32xf32>
    %63 = vector.extract_strided_slice %50 {offsets = [0, 64], sizes = [2, 32], strides = [1, 1]} : vector<2x128xf32> to vector<2x32xf32>
    %64 = math.tanh %63 : vector<2x32xf32>
    %65 = vector.extract_strided_slice %50 {offsets = [0, 96], sizes = [2, 32], strides = [1, 1]} : vector<2x128xf32> to vector<2x32xf32>
    %66 = arith.negf %65 : vector<2x32xf32>
    %67 = math.exp %66 : vector<2x32xf32>
    %cst_29 = arith.constant 1.000000e+00 : f32
    %68 = vector.broadcast %cst_29 : f32 to vector<2x32xf32>
    %69 = arith.addf %68, %67 : vector<2x32xf32>
    %70 = arith.divf %68, %69 : vector<2x32xf32>
    %71 = arith.mulf %62, %48 : vector<2x32xf32>
    %72 = arith.mulf %56, %64 : vector<2x32xf32>
    %73 = arith.addf %71, %72 : vector<2x32xf32>
    %74 = math.tanh %73 : vector<2x32xf32>
    %75 = arith.mulf %70, %74 : vector<2x32xf32>
    %c0_30 = arith.constant 0 : index
    %c0_31 = arith.constant 0 : index
    %76 = vector.load %arg9[%c0_30, %c0_31] : memref<2x32xf32, #tpu.memory_space<vmem>>, vector<2x32xf32>
    tpu.vector_store %arg9[%c0_30, %c0_31], %75 {strides = array<i32>} : memref<2x32xf32, #tpu.memory_space<vmem>>, vector<2x32xf32>,
    %c0_32 = arith.constant 0 : index
    %c0_33 = arith.constant 0 : index
    %77 = vector.load %arg10[%c0_32, %c0_33] : memref<2x32xf32, #tpu.memory_space<vmem>>, vector<2x32xf32>
    tpu.vector_store %arg10[%c0_32, %c0_33], %73 {strides = array<i32>} : memref<2x32xf32, #tpu.memory_space<vmem>>, vector<2x32xf32>,
    %78 = arith.index_cast %43 : i32 to index
    %c0_34 = arith.constant 0 : index
    %c0_35 = arith.constant 0 : index
    %79 = vector.load %arg6[%78, %c0_34, %c0_35] : memref<8x2x32xf32, #tpu.memory_space<vmem>>, vector<1x2x32xf32>
    %80 = vector.shape_cast %79 : vector<1x2x32xf32> to vector<2x32xf32>
    %81 = vector.shape_cast %75 : vector<2x32xf32> to vector<1x2x32xf32>
    tpu.vector_store %arg6[%78, %c0_34, %c0_35], %81 {strides = array<i32>} : memref<8x2x32xf32, #tpu.memory_space<vmem>>, vector<1x2x32xf32>,
    %c1_i32 = arith.constant 1 : i32
    %82 = arith.index_cast %c1_i32 : i32 to index
    %c0_36 = arith.constant 0 : index
    %c0_37 = arith.constant 0 : index
    %83 = vector.load %arg1[%82, %c0_36, %c0_37] : memref<8x2x128xf32, #tpu.memory_space<vmem>>, vector<1x2x128xf32>
    %84 = vector.shape_cast %83 : vector<1x2x128xf32> to vector<2x128xf32>
    %c0_38 = arith.constant 0 : index
    %c0_39 = arith.constant 0 : index
    %85 = vector.load %arg7[%c0_38, %c0_39] : memref<2x32xf32, #tpu.memory_space<vmem>>, vector<2x32xf32>
    %c0_40 = arith.constant 0 : index
    %c0_41 = arith.constant 0 : index
    %86 = vector.load %arg8[%c0_40, %c0_41] : memref<2x32xf32, #tpu.memory_space<vmem>>, vector<2x32xf32>
    %cst_42 = arith.constant dense<0.000000e+00> : vector<2x128xf32>
    %87 = tpu.matmul %85, %3, %cst_42 {dimension_numbers = #tpu.dot_dimension_numbers<[1], [0], [0], [1], [0, 0, 1, 1], [], []>} : vector<2x32xf32>, vector<32x128xf32>, vector<2x128xf32> -> vector<2x128xf32>
    %88 = arith.addf %84, %87 : vector<2x128xf32>
    %89 = vector.extract_strided_slice %88 {offsets = [0, 0], sizes = [2, 32], strides = [1, 1]} : vector<2x128xf32> to vector<2x32xf32>
    %90 = arith.negf %89 : vector<2x32xf32>
    %91 = math.exp %90 : vector<2x32xf32>
    %cst_43 = arith.constant 1.000000e+00 : f32
    %92 = vector.broadcast %cst_43 : f32 to vector<2x32xf32>
    %93 = arith.addf %92, %91 : vector<2x32xf32>
    %94 = arith.divf %92, %93 : vector<2x32xf32>
    %95 = vector.extract_strided_slice %88 {offsets = [0, 32], sizes = [2, 32], strides = [1, 1]} : vector<2x128xf32> to vector<2x32xf32>
    %96 = arith.negf %95 : vector<2x32xf32>
    %97 = math.exp %96 : vector<2x32xf32>
    %cst_44 = arith.constant 1.000000e+00 : f32
    %98 = vector.broadcast %cst_44 : f32 to vector<2x32xf32>
    %99 = arith.addf %98, %97 : vector<2x32xf32>
    %100 = arith.divf %98, %99 : vector<2x32xf32>
    %101 = vector.extract_strided_slice %88 {offsets = [0, 64], sizes = [2, 32], strides = [1, 1]} : vector<2x128xf32> to vector<2x32xf32>
    %102 = math.tanh %101 : vector<2x32xf32>
    %103 = vector.extract_strided_slice %88 {offsets = [0, 96], sizes = [2, 32], strides = [1, 1]} : vector<2x128xf32> to vector<2x32xf32>
    %104 = arith.negf %103 : vector<2x32xf32>
    %105 = math.exp %104 : vector<2x32xf32>
    %cst_45 = arith.constant 1.000000e+00 : f32
    %106 = vector.broadcast %cst_45 : f32 to vector<2x32xf32>
    %107 = arith.addf %106, %105 : vector<2x32xf32>
    %108 = arith.divf %106, %107 : vector<2x32xf32>
    %109 = arith.mulf %100, %86 : vector<2x32xf32>
    %110 = arith.mulf %94, %102 : vector<2x32xf32>
    %111 = arith.addf %109, %110 : vector<2x32xf32>
    %112 = math.tanh %111 : vector<2x32xf32>
    %113 = arith.mulf %108, %112 : vector<2x32xf32>
    %c0_46 = arith.constant 0 : index
    %c0_47 = arith.constant 0 : index
    %114 = vector.load %arg7[%c0_46, %c0_47] : memref<2x32xf32, #tpu.memory_space<vmem>>, vector<2x32xf32>
    tpu.vector_store %arg7[%c0_46, %c0_47], %113 {strides = array<i32>} : memref<2x32xf32, #tpu.memory_space<vmem>>, vector<2x32xf32>,
    %c0_48 = arith.constant 0 : index
    %c0_49 = arith.constant 0 : index
    %115 = vector.load %arg8[%c0_48, %c0_49] : memref<2x32xf32, #tpu.memory_space<vmem>>, vector<2x32xf32>
    tpu.vector_store %arg8[%c0_48, %c0_49], %111 {strides = array<i32>} : memref<2x32xf32, #tpu.memory_space<vmem>>, vector<2x32xf32>,
    %116 = arith.index_cast %c1_i32 : i32 to index
    %c0_50 = arith.constant 0 : index
    %c0_51 = arith.constant 0 : index
    %117 = vector.load %arg5[%116, %c0_50, %c0_51] : memref<8x2x32xf32, #tpu.memory_space<vmem>>, vector<1x2x32xf32>
    %118 = vector.shape_cast %117 : vector<1x2x32xf32> to vector<2x32xf32>
    %119 = vector.shape_cast %113 : vector<2x32xf32> to vector<1x2x32xf32>
    tpu.vector_store %arg5[%116, %c0_50, %c0_51], %119 {strides = array<i32>} : memref<8x2x32xf32, #tpu.memory_space<vmem>>, vector<1x2x32xf32>,
    %c7_i32_52 = arith.constant 7 : i32
    %120 = arith.subi %c7_i32_52, %c1_i32 : i32
    %121 = arith.index_cast %120 : i32 to index
    %c0_53 = arith.constant 0 : index
    %c0_54 = arith.constant 0 : index
    %122 = vector.load %arg2[%121, %c0_53, %c0_54] : memref<8x2x128xf32, #tpu.memory_space<vmem>>, vector<1x2x128xf32>
    %123 = vector.shape_cast %122 : vector<1x2x128xf32> to vector<2x128xf32>
    %c0_55 = arith.constant 0 : index
    %c0_56 = arith.constant 0 : index
    %124 = vector.load %arg9[%c0_55, %c0_56] : memref<2x32xf32, #tpu.memory_space<vmem>>, vector<2x32xf32>
    %c0_57 = arith.constant 0 : index
    %c0_58 = arith.constant 0 : index
    %125 = vector.load %arg10[%c0_57, %c0_58] : memref<2x32xf32, #tpu.memory_space<vmem>>, vector<2x32xf32>
    %cst_59 = arith.constant dense<0.000000e+00> : vector<2x128xf32>
    %126 = tpu.matmul %124, %4, %cst_59 {dimension_numbers = #tpu.dot_dimension_numbers<[1], [0], [0], [1], [0, 0, 1, 1], [], []>} : vector<2x32xf32>, vector<32x128xf32>, vector<2x128xf32> -> vector<2x128xf32>
    %127 = arith.addf %123, %126 : vector<2x128xf32>
    %128 = vector.extract_strided_slice %127 {offsets = [0, 0], sizes = [2, 32], strides = [1, 1]} : vector<2x128xf32> to vector<2x32xf32>
    %129 = arith.negf %128 : vector<2x32xf32>
    %130 = math.exp %129 : vector<2x32xf32>
    %cst_60 = arith.constant 1.000000e+00 : f32
    %131 = vector.broadcast %cst_60 : f32 to vector<2x32xf32>
    %132 = arith.addf %131, %130 : vector<2x32xf32>
    %133 = arith.divf %131, %132 : vector<2x32xf32>
    %134 = vector.extract_strided_slice %127 {offsets = [0, 32], sizes = [2, 32], strides = [1, 1]} : vector<2x128xf32> to vector<2x32xf32>
    %135 = arith.negf %134 : vector<2x32xf32>
    %136 = math.exp %135 : vector<2x32xf32>
    %cst_61 = arith.constant 1.000000e+00 : f32
    %137 = vector.broadcast %cst_61 : f32 to vector<2x32xf32>
    %138 = arith.addf %137, %136 : vector<2x32xf32>
    %139 = arith.divf %137, %138 : vector<2x32xf32>
    %140 = vector.extract_strided_slice %127 {offsets = [0, 64], sizes = [2, 32], strides = [1, 1]} : vector<2x128xf32> to vector<2x32xf32>
    %141 = math.tanh %140 : vector<2x32xf32>
    %142 = vector.extract_strided_slice %127 {offsets = [0, 96], sizes = [2, 32], strides = [1, 1]} : vector<2x128xf32> to vector<2x32xf32>
    %143 = arith.negf %142 : vector<2x32xf32>
    %144 = math.exp %143 : vector<2x32xf32>
    %cst_62 = arith.constant 1.000000e+00 : f32
    %145 = vector.broadcast %cst_62 : f32 to vector<2x32xf32>
    %146 = arith.addf %145, %144 : vector<2x32xf32>
    %147 = arith.divf %145, %146 : vector<2x32xf32>
    %148 = arith.mulf %139, %125 : vector<2x32xf32>
    %149 = arith.mulf %133, %141 : vector<2x32xf32>
    %150 = arith.addf %148, %149 : vector<2x32xf32>
    %151 = math.tanh %150 : vector<2x32xf32>
    %152 = arith.mulf %147, %151 : vector<2x32xf32>
    %c0_63 = arith.constant 0 : index
    %c0_64 = arith.constant 0 : index
    %153 = vector.load %arg9[%c0_63, %c0_64] : memref<2x32xf32, #tpu.memory_space<vmem>>, vector<2x32xf32>
    tpu.vector_store %arg9[%c0_63, %c0_64], %152 {strides = array<i32>} : memref<2x32xf32, #tpu.memory_space<vmem>>, vector<2x32xf32>,
    %c0_65 = arith.constant 0 : index
    %c0_66 = arith.constant 0 : index
    %154 = vector.load %arg10[%c0_65, %c0_66] : memref<2x32xf32, #tpu.memory_space<vmem>>, vector<2x32xf32>
    tpu.vector_store %arg10[%c0_65, %c0_66], %150 {strides = array<i32>} : memref<2x32xf32, #tpu.memory_space<vmem>>, vector<2x32xf32>,
    %155 = arith.index_cast %120 : i32 to index
    %c0_67 = arith.constant 0 : index
    %c0_68 = arith.constant 0 : index
    %156 = vector.load %arg6[%155, %c0_67, %c0_68] : memref<8x2x32xf32, #tpu.memory_space<vmem>>, vector<1x2x32xf32>
    %157 = vector.shape_cast %156 : vector<1x2x32xf32> to vector<2x32xf32>
    %158 = vector.shape_cast %152 : vector<2x32xf32> to vector<1x2x32xf32>
    tpu.vector_store %arg6[%155, %c0_67, %c0_68], %158 {strides = array<i32>} : memref<8x2x32xf32, #tpu.memory_space<vmem>>, vector<1x2x32xf32>,
    %c2_i32 = arith.constant 2 : i32
    %159 = arith.index_cast %c2_i32 : i32 to index
    %c0_69 = arith.constant 0 : index
    %c0_70 = arith.constant 0 : index
    %160 = vector.load %arg1[%159, %c0_69, %c0_70] : memref<8x2x128xf32, #tpu.memory_space<vmem>>, vector<1x2x128xf32>
    %161 = vector.shape_cast %160 : vector<1x2x128xf32> to vector<2x128xf32>
    %c0_71 = arith.constant 0 : index
    %c0_72 = arith.constant 0 : index
    %162 = vector.load %arg7[%c0_71, %c0_72] : memref<2x32xf32, #tpu.memory_space<vmem>>, vector<2x32xf32>
    %c0_73 = arith.constant 0 : index
    %c0_74 = arith.constant 0 : index
    %163 = vector.load %arg8[%c0_73, %c0_74] : memref<2x32xf32, #tpu.memory_space<vmem>>, vector<2x32xf32>
    %cst_75 = arith.constant dense<0.000000e+00> : vector<2x128xf32>
    %164 = tpu.matmul %162, %3, %cst_75 {dimension_numbers = #tpu.dot_dimension_numbers<[1], [0], [0], [1], [0, 0, 1, 1], [], []>} : vector<2x32xf32>, vector<32x128xf32>, vector<2x128xf32> -> vector<2x128xf32>
    %165 = arith.addf %161, %164 : vector<2x128xf32>
    %166 = vector.extract_strided_slice %165 {offsets = [0, 0], sizes = [2, 32], strides = [1, 1]} : vector<2x128xf32> to vector<2x32xf32>
    %167 = arith.negf %166 : vector<2x32xf32>
    %168 = math.exp %167 : vector<2x32xf32>
    %cst_76 = arith.constant 1.000000e+00 : f32
    %169 = vector.broadcast %cst_76 : f32 to vector<2x32xf32>
    %170 = arith.addf %169, %168 : vector<2x32xf32>
    %171 = arith.divf %169, %170 : vector<2x32xf32>
    %172 = vector.extract_strided_slice %165 {offsets = [0, 32], sizes = [2, 32], strides = [1, 1]} : vector<2x128xf32> to vector<2x32xf32>
    %173 = arith.negf %172 : vector<2x32xf32>
    %174 = math.exp %173 : vector<2x32xf32>
    %cst_77 = arith.constant 1.000000e+00 : f32
    %175 = vector.broadcast %cst_77 : f32 to vector<2x32xf32>
    %176 = arith.addf %175, %174 : vector<2x32xf32>
    %177 = arith.divf %175, %176 : vector<2x32xf32>
    %178 = vector.extract_strided_slice %165 {offsets = [0, 64], sizes = [2, 32], strides = [1, 1]} : vector<2x128xf32> to vector<2x32xf32>
    %179 = math.tanh %178 : vector<2x32xf32>
    %180 = vector.extract_strided_slice %165 {offsets = [0, 96], sizes = [2, 32], strides = [1, 1]} : vector<2x128xf32> to vector<2x32xf32>
    %181 = arith.negf %180 : vector<2x32xf32>
    %182 = math.exp %181 : vector<2x32xf32>
    %cst_78 = arith.constant 1.000000e+00 : f32
    %183 = vector.broadcast %cst_78 : f32 to vector<2x32xf32>
    %184 = arith.addf %183, %182 : vector<2x32xf32>
    %185 = arith.divf %183, %184 : vector<2x32xf32>
    %186 = arith.mulf %177, %163 : vector<2x32xf32>
    %187 = arith.mulf %171, %179 : vector<2x32xf32>
    %188 = arith.addf %186, %187 : vector<2x32xf32>
    %189 = math.tanh %188 : vector<2x32xf32>
    %190 = arith.mulf %185, %189 : vector<2x32xf32>
    %c0_79 = arith.constant 0 : index
    %c0_80 = arith.constant 0 : index
    %191 = vector.load %arg7[%c0_79, %c0_80] : memref<2x32xf32, #tpu.memory_space<vmem>>, vector<2x32xf32>
    tpu.vector_store %arg7[%c0_79, %c0_80], %190 {strides = array<i32>} : memref<2x32xf32, #tpu.memory_space<vmem>>, vector<2x32xf32>,
    %c0_81 = arith.constant 0 : index
    %c0_82 = arith.constant 0 : index
    %192 = vector.load %arg8[%c0_81, %c0_82] : memref<2x32xf32, #tpu.memory_space<vmem>>, vector<2x32xf32>
    tpu.vector_store %arg8[%c0_81, %c0_82], %188 {strides = array<i32>} : memref<2x32xf32, #tpu.memory_space<vmem>>, vector<2x32xf32>,
    %193 = arith.index_cast %c2_i32 : i32 to index
    %c0_83 = arith.constant 0 : index
    %c0_84 = arith.constant 0 : index
    %194 = vector.load %arg5[%193, %c0_83, %c0_84] : memref<8x2x32xf32, #tpu.memory_space<vmem>>, vector<1x2x32xf32>
    %195 = vector.shape_cast %194 : vector<1x2x32xf32> to vector<2x32xf32>
    %196 = vector.shape_cast %190 : vector<2x32xf32> to vector<1x2x32xf32>
    tpu.vector_store %arg5[%193, %c0_83, %c0_84], %196 {strides = array<i32>} : memref<8x2x32xf32, #tpu.memory_space<vmem>>, vector<1x2x32xf32>,
    %c7_i32_85 = arith.constant 7 : i32
    %197 = arith.subi %c7_i32_85, %c2_i32 : i32
    %198 = arith.index_cast %197 : i32 to index
    %c0_86 = arith.constant 0 : index
    %c0_87 = arith.constant 0 : index
    %199 = vector.load %arg2[%198, %c0_86, %c0_87] : memref<8x2x128xf32, #tpu.memory_space<vmem>>, vector<1x2x128xf32>
    %200 = vector.shape_cast %199 : vector<1x2x128xf32> to vector<2x128xf32>
    %c0_88 = arith.constant 0 : index
    %c0_89 = arith.constant 0 : index
    %201 = vector.load %arg9[%c0_88, %c0_89] : memref<2x32xf32, #tpu.memory_space<vmem>>, vector<2x32xf32>
    %c0_90 = arith.constant 0 : index
    %c0_91 = arith.constant 0 : index
    %202 = vector.load %arg10[%c0_90, %c0_91] : memref<2x32xf32, #tpu.memory_space<vmem>>, vector<2x32xf32>
    %cst_92 = arith.constant dense<0.000000e+00> : vector<2x128xf32>
    %203 = tpu.matmul %201, %4, %cst_92 {dimension_numbers = #tpu.dot_dimension_numbers<[1], [0], [0], [1], [0, 0, 1, 1], [], []>} : vector<2x32xf32>, vector<32x128xf32>, vector<2x128xf32> -> vector<2x128xf32>
    %204 = arith.addf %200, %203 : vector<2x128xf32>
    %205 = vector.extract_strided_slice %204 {offsets = [0, 0], sizes = [2, 32], strides = [1, 1]} : vector<2x128xf32> to vector<2x32xf32>
    %206 = arith.negf %205 : vector<2x32xf32>
    %207 = math.exp %206 : vector<2x32xf32>
    %cst_93 = arith.constant 1.000000e+00 : f32
    %208 = vector.broadcast %cst_93 : f32 to vector<2x32xf32>
    %209 = arith.addf %208, %207 : vector<2x32xf32>
    %210 = arith.divf %208, %209 : vector<2x32xf32>
    %211 = vector.extract_strided_slice %204 {offsets = [0, 32], sizes = [2, 32], strides = [1, 1]} : vector<2x128xf32> to vector<2x32xf32>
    %212 = arith.negf %211 : vector<2x32xf32>
    %213 = math.exp %212 : vector<2x32xf32>
    %cst_94 = arith.constant 1.000000e+00 : f32
    %214 = vector.broadcast %cst_94 : f32 to vector<2x32xf32>
    %215 = arith.addf %214, %213 : vector<2x32xf32>
    %216 = arith.divf %214, %215 : vector<2x32xf32>
    %217 = vector.extract_strided_slice %204 {offsets = [0, 64], sizes = [2, 32], strides = [1, 1]} : vector<2x128xf32> to vector<2x32xf32>
    %218 = math.tanh %217 : vector<2x32xf32>
    %219 = vector.extract_strided_slice %204 {offsets = [0, 96], sizes = [2, 32], strides = [1, 1]} : vector<2x128xf32> to vector<2x32xf32>
    %220 = arith.negf %219 : vector<2x32xf32>
    %221 = math.exp %220 : vector<2x32xf32>
    %cst_95 = arith.constant 1.000000e+00 : f32
    %222 = vector.broadcast %cst_95 : f32 to vector<2x32xf32>
    %223 = arith.addf %222, %221 : vector<2x32xf32>
    %224 = arith.divf %222, %223 : vector<2x32xf32>
    %225 = arith.mulf %216, %202 : vector<2x32xf32>
    %226 = arith.mulf %210, %218 : vector<2x32xf32>
    %227 = arith.addf %225, %226 : vector<2x32xf32>
    %228 = math.tanh %227 : vector<2x32xf32>
    %229 = arith.mulf %224, %228 : vector<2x32xf32>
    %c0_96 = arith.constant 0 : index
    %c0_97 = arith.constant 0 : index
    %230 = vector.load %arg9[%c0_96, %c0_97] : memref<2x32xf32, #tpu.memory_space<vmem>>, vector<2x32xf32>
    tpu.vector_store %arg9[%c0_96, %c0_97], %229 {strides = array<i32>} : memref<2x32xf32, #tpu.memory_space<vmem>>, vector<2x32xf32>,
    %c0_98 = arith.constant 0 : index
    %c0_99 = arith.constant 0 : index
    %231 = vector.load %arg10[%c0_98, %c0_99] : memref<2x32xf32, #tpu.memory_space<vmem>>, vector<2x32xf32>
    tpu.vector_store %arg10[%c0_98, %c0_99], %227 {strides = array<i32>} : memref<2x32xf32, #tpu.memory_space<vmem>>, vector<2x32xf32>,
    %232 = arith.index_cast %197 : i32 to index
    %c0_100 = arith.constant 0 : index
    %c0_101 = arith.constant 0 : index
    %233 = vector.load %arg6[%232, %c0_100, %c0_101] : memref<8x2x32xf32, #tpu.memory_space<vmem>>, vector<1x2x32xf32>
    %234 = vector.shape_cast %233 : vector<1x2x32xf32> to vector<2x32xf32>
    %235 = vector.shape_cast %229 : vector<2x32xf32> to vector<1x2x32xf32>
    tpu.vector_store %arg6[%232, %c0_100, %c0_101], %235 {strides = array<i32>} : memref<8x2x32xf32, #tpu.memory_space<vmem>>, vector<1x2x32xf32>,
    %c3_i32 = arith.constant 3 : i32
    %236 = arith.index_cast %c3_i32 : i32 to index
    %c0_102 = arith.constant 0 : index
    %c0_103 = arith.constant 0 : index
    %237 = vector.load %arg1[%236, %c0_102, %c0_103] : memref<8x2x128xf32, #tpu.memory_space<vmem>>, vector<1x2x128xf32>
    %238 = vector.shape_cast %237 : vector<1x2x128xf32> to vector<2x128xf32>
    %c0_104 = arith.constant 0 : index
    %c0_105 = arith.constant 0 : index
    %239 = vector.load %arg7[%c0_104, %c0_105] : memref<2x32xf32, #tpu.memory_space<vmem>>, vector<2x32xf32>
    %c0_106 = arith.constant 0 : index
    %c0_107 = arith.constant 0 : index
    %240 = vector.load %arg8[%c0_106, %c0_107] : memref<2x32xf32, #tpu.memory_space<vmem>>, vector<2x32xf32>
    %cst_108 = arith.constant dense<0.000000e+00> : vector<2x128xf32>
    %241 = tpu.matmul %239, %3, %cst_108 {dimension_numbers = #tpu.dot_dimension_numbers<[1], [0], [0], [1], [0, 0, 1, 1], [], []>} : vector<2x32xf32>, vector<32x128xf32>, vector<2x128xf32> -> vector<2x128xf32>
    %242 = arith.addf %238, %241 : vector<2x128xf32>
    %243 = vector.extract_strided_slice %242 {offsets = [0, 0], sizes = [2, 32], strides = [1, 1]} : vector<2x128xf32> to vector<2x32xf32>
    %244 = arith.negf %243 : vector<2x32xf32>
    %245 = math.exp %244 : vector<2x32xf32>
    %cst_109 = arith.constant 1.000000e+00 : f32
    %246 = vector.broadcast %cst_109 : f32 to vector<2x32xf32>
    %247 = arith.addf %246, %245 : vector<2x32xf32>
    %248 = arith.divf %246, %247 : vector<2x32xf32>
    %249 = vector.extract_strided_slice %242 {offsets = [0, 32], sizes = [2, 32], strides = [1, 1]} : vector<2x128xf32> to vector<2x32xf32>
    %250 = arith.negf %249 : vector<2x32xf32>
    %251 = math.exp %250 : vector<2x32xf32>
    %cst_110 = arith.constant 1.000000e+00 : f32
    %252 = vector.broadcast %cst_110 : f32 to vector<2x32xf32>
    %253 = arith.addf %252, %251 : vector<2x32xf32>
    %254 = arith.divf %252, %253 : vector<2x32xf32>
    %255 = vector.extract_strided_slice %242 {offsets = [0, 64], sizes = [2, 32], strides = [1, 1]} : vector<2x128xf32> to vector<2x32xf32>
    %256 = math.tanh %255 : vector<2x32xf32>
    %257 = vector.extract_strided_slice %242 {offsets = [0, 96], sizes = [2, 32], strides = [1, 1]} : vector<2x128xf32> to vector<2x32xf32>
    %258 = arith.negf %257 : vector<2x32xf32>
    %259 = math.exp %258 : vector<2x32xf32>
    %cst_111 = arith.constant 1.000000e+00 : f32
    %260 = vector.broadcast %cst_111 : f32 to vector<2x32xf32>
    %261 = arith.addf %260, %259 : vector<2x32xf32>
    %262 = arith.divf %260, %261 : vector<2x32xf32>
    %263 = arith.mulf %254, %240 : vector<2x32xf32>
    %264 = arith.mulf %248, %256 : vector<2x32xf32>
    %265 = arith.addf %263, %264 : vector<2x32xf32>
    %266 = math.tanh %265 : vector<2x32xf32>
    %267 = arith.mulf %262, %266 : vector<2x32xf32>
    %c0_112 = arith.constant 0 : index
    %c0_113 = arith.constant 0 : index
    %268 = vector.load %arg7[%c0_112, %c0_113] : memref<2x32xf32, #tpu.memory_space<vmem>>, vector<2x32xf32>
    tpu.vector_store %arg7[%c0_112, %c0_113], %267 {strides = array<i32>} : memref<2x32xf32, #tpu.memory_space<vmem>>, vector<2x32xf32>,
    %c0_114 = arith.constant 0 : index
    %c0_115 = arith.constant 0 : index
    %269 = vector.load %arg8[%c0_114, %c0_115] : memref<2x32xf32, #tpu.memory_space<vmem>>, vector<2x32xf32>
    tpu.vector_store %arg8[%c0_114, %c0_115], %265 {strides = array<i32>} : memref<2x32xf32, #tpu.memory_space<vmem>>, vector<2x32xf32>,
    %270 = arith.index_cast %c3_i32 : i32 to index
    %c0_116 = arith.constant 0 : index
    %c0_117 = arith.constant 0 : index
    %271 = vector.load %arg5[%270, %c0_116, %c0_117] : memref<8x2x32xf32, #tpu.memory_space<vmem>>, vector<1x2x32xf32>
    %272 = vector.shape_cast %271 : vector<1x2x32xf32> to vector<2x32xf32>
    %273 = vector.shape_cast %267 : vector<2x32xf32> to vector<1x2x32xf32>
    tpu.vector_store %arg5[%270, %c0_116, %c0_117], %273 {strides = array<i32>} : memref<8x2x32xf32, #tpu.memory_space<vmem>>, vector<1x2x32xf32>,
    %c7_i32_118 = arith.constant 7 : i32
    %274 = arith.subi %c7_i32_118, %c3_i32 : i32
    %275 = arith.index_cast %274 : i32 to index
    %c0_119 = arith.constant 0 : index
    %c0_120 = arith.constant 0 : index
    %276 = vector.load %arg2[%275, %c0_119, %c0_120] : memref<8x2x128xf32, #tpu.memory_space<vmem>>, vector<1x2x128xf32>
    %277 = vector.shape_cast %276 : vector<1x2x128xf32> to vector<2x128xf32>
    %c0_121 = arith.constant 0 : index
    %c0_122 = arith.constant 0 : index
    %278 = vector.load %arg9[%c0_121, %c0_122] : memref<2x32xf32, #tpu.memory_space<vmem>>, vector<2x32xf32>
    %c0_123 = arith.constant 0 : index
    %c0_124 = arith.constant 0 : index
    %279 = vector.load %arg10[%c0_123, %c0_124] : memref<2x32xf32, #tpu.memory_space<vmem>>, vector<2x32xf32>
    %cst_125 = arith.constant dense<0.000000e+00> : vector<2x128xf32>
    %280 = tpu.matmul %278, %4, %cst_125 {dimension_numbers = #tpu.dot_dimension_numbers<[1], [0], [0], [1], [0, 0, 1, 1], [], []>} : vector<2x32xf32>, vector<32x128xf32>, vector<2x128xf32> -> vector<2x128xf32>
    %281 = arith.addf %277, %280 : vector<2x128xf32>
    %282 = vector.extract_strided_slice %281 {offsets = [0, 0], sizes = [2, 32], strides = [1, 1]} : vector<2x128xf32> to vector<2x32xf32>
    %283 = arith.negf %282 : vector<2x32xf32>
    %284 = math.exp %283 : vector<2x32xf32>
    %cst_126 = arith.constant 1.000000e+00 : f32
    %285 = vector.broadcast %cst_126 : f32 to vector<2x32xf32>
    %286 = arith.addf %285, %284 : vector<2x32xf32>
    %287 = arith.divf %285, %286 : vector<2x32xf32>
    %288 = vector.extract_strided_slice %281 {offsets = [0, 32], sizes = [2, 32], strides = [1, 1]} : vector<2x128xf32> to vector<2x32xf32>
    %289 = arith.negf %288 : vector<2x32xf32>
    %290 = math.exp %289 : vector<2x32xf32>
    %cst_127 = arith.constant 1.000000e+00 : f32
    %291 = vector.broadcast %cst_127 : f32 to vector<2x32xf32>
    %292 = arith.addf %291, %290 : vector<2x32xf32>
    %293 = arith.divf %291, %292 : vector<2x32xf32>
    %294 = vector.extract_strided_slice %281 {offsets = [0, 64], sizes = [2, 32], strides = [1, 1]} : vector<2x128xf32> to vector<2x32xf32>
    %295 = math.tanh %294 : vector<2x32xf32>
    %296 = vector.extract_strided_slice %281 {offsets = [0, 96], sizes = [2, 32], strides = [1, 1]} : vector<2x128xf32> to vector<2x32xf32>
    %297 = arith.negf %296 : vector<2x32xf32>
    %298 = math.exp %297 : vector<2x32xf32>
    %cst_128 = arith.constant 1.000000e+00 : f32
    %299 = vector.broadcast %cst_128 : f32 to vector<2x32xf32>
    %300 = arith.addf %299, %298 : vector<2x32xf32>
    %301 = arith.divf %299, %300 : vector<2x32xf32>
    %302 = arith.mulf %293, %279 : vector<2x32xf32>
    %303 = arith.mulf %287, %295 : vector<2x32xf32>
    %304 = arith.addf %302, %303 : vector<2x32xf32>
    %305 = math.tanh %304 : vector<2x32xf32>
    %306 = arith.mulf %301, %305 : vector<2x32xf32>
    %c0_129 = arith.constant 0 : index
    %c0_130 = arith.constant 0 : index
    %307 = vector.load %arg9[%c0_129, %c0_130] : memref<2x32xf32, #tpu.memory_space<vmem>>, vector<2x32xf32>
    tpu.vector_store %arg9[%c0_129, %c0_130], %306 {strides = array<i32>} : memref<2x32xf32, #tpu.memory_space<vmem>>, vector<2x32xf32>,
    %c0_131 = arith.constant 0 : index
    %c0_132 = arith.constant 0 : index
    %308 = vector.load %arg10[%c0_131, %c0_132] : memref<2x32xf32, #tpu.memory_space<vmem>>, vector<2x32xf32>
    tpu.vector_store %arg10[%c0_131, %c0_132], %304 {strides = array<i32>} : memref<2x32xf32, #tpu.memory_space<vmem>>, vector<2x32xf32>,
    %309 = arith.index_cast %274 : i32 to index
    %c0_133 = arith.constant 0 : index
    %c0_134 = arith.constant 0 : index
    %310 = vector.load %arg6[%309, %c0_133, %c0_134] : memref<8x2x32xf32, #tpu.memory_space<vmem>>, vector<1x2x32xf32>
    %311 = vector.shape_cast %310 : vector<1x2x32xf32> to vector<2x32xf32>
    %312 = vector.shape_cast %306 : vector<2x32xf32> to vector<1x2x32xf32>
    tpu.vector_store %arg6[%309, %c0_133, %c0_134], %312 {strides = array<i32>} : memref<8x2x32xf32, #tpu.memory_space<vmem>>, vector<1x2x32xf32>,
    %c4_i32 = arith.constant 4 : i32
    %313 = arith.index_cast %c4_i32 : i32 to index
    %c0_135 = arith.constant 0 : index
    %c0_136 = arith.constant 0 : index
    %314 = vector.load %arg1[%313, %c0_135, %c0_136] : memref<8x2x128xf32, #tpu.memory_space<vmem>>, vector<1x2x128xf32>
    %315 = vector.shape_cast %314 : vector<1x2x128xf32> to vector<2x128xf32>
    %c0_137 = arith.constant 0 : index
    %c0_138 = arith.constant 0 : index
    %316 = vector.load %arg7[%c0_137, %c0_138] : memref<2x32xf32, #tpu.memory_space<vmem>>, vector<2x32xf32>
    %c0_139 = arith.constant 0 : index
    %c0_140 = arith.constant 0 : index
    %317 = vector.load %arg8[%c0_139, %c0_140] : memref<2x32xf32, #tpu.memory_space<vmem>>, vector<2x32xf32>
    %cst_141 = arith.constant dense<0.000000e+00> : vector<2x128xf32>
    %318 = tpu.matmul %316, %3, %cst_141 {dimension_numbers = #tpu.dot_dimension_numbers<[1], [0], [0], [1], [0, 0, 1, 1], [], []>} : vector<2x32xf32>, vector<32x128xf32>, vector<2x128xf32> -> vector<2x128xf32>
    %319 = arith.addf %315, %318 : vector<2x128xf32>
    %320 = vector.extract_strided_slice %319 {offsets = [0, 0], sizes = [2, 32], strides = [1, 1]} : vector<2x128xf32> to vector<2x32xf32>
    %321 = arith.negf %320 : vector<2x32xf32>
    %322 = math.exp %321 : vector<2x32xf32>
    %cst_142 = arith.constant 1.000000e+00 : f32
    %323 = vector.broadcast %cst_142 : f32 to vector<2x32xf32>
    %324 = arith.addf %323, %322 : vector<2x32xf32>
    %325 = arith.divf %323, %324 : vector<2x32xf32>
    %326 = vector.extract_strided_slice %319 {offsets = [0, 32], sizes = [2, 32], strides = [1, 1]} : vector<2x128xf32> to vector<2x32xf32>
    %327 = arith.negf %326 : vector<2x32xf32>
    %328 = math.exp %327 : vector<2x32xf32>
    %cst_143 = arith.constant 1.000000e+00 : f32
    %329 = vector.broadcast %cst_143 : f32 to vector<2x32xf32>
    %330 = arith.addf %329, %328 : vector<2x32xf32>
    %331 = arith.divf %329, %330 : vector<2x32xf32>
    %332 = vector.extract_strided_slice %319 {offsets = [0, 64], sizes = [2, 32], strides = [1, 1]} : vector<2x128xf32> to vector<2x32xf32>
    %333 = math.tanh %332 : vector<2x32xf32>
    %334 = vector.extract_strided_slice %319 {offsets = [0, 96], sizes = [2, 32], strides = [1, 1]} : vector<2x128xf32> to vector<2x32xf32>
    %335 = arith.negf %334 : vector<2x32xf32>
    %336 = math.exp %335 : vector<2x32xf32>
    %cst_144 = arith.constant 1.000000e+00 : f32
    %337 = vector.broadcast %cst_144 : f32 to vector<2x32xf32>
    %338 = arith.addf %337, %336 : vector<2x32xf32>
    %339 = arith.divf %337, %338 : vector<2x32xf32>
    %340 = arith.mulf %331, %317 : vector<2x32xf32>
    %341 = arith.mulf %325, %333 : vector<2x32xf32>
    %342 = arith.addf %340, %341 : vector<2x32xf32>
    %343 = math.tanh %342 : vector<2x32xf32>
    %344 = arith.mulf %339, %343 : vector<2x32xf32>
    %c0_145 = arith.constant 0 : index
    %c0_146 = arith.constant 0 : index
    %345 = vector.load %arg7[%c0_145, %c0_146] : memref<2x32xf32, #tpu.memory_space<vmem>>, vector<2x32xf32>
    tpu.vector_store %arg7[%c0_145, %c0_146], %344 {strides = array<i32>} : memref<2x32xf32, #tpu.memory_space<vmem>>, vector<2x32xf32>,
    %c0_147 = arith.constant 0 : index
    %c0_148 = arith.constant 0 : index
    %346 = vector.load %arg8[%c0_147, %c0_148] : memref<2x32xf32, #tpu.memory_space<vmem>>, vector<2x32xf32>
    tpu.vector_store %arg8[%c0_147, %c0_148], %342 {strides = array<i32>} : memref<2x32xf32, #tpu.memory_space<vmem>>, vector<2x32xf32>,
    %347 = arith.index_cast %c4_i32 : i32 to index
    %c0_149 = arith.constant 0 : index
    %c0_150 = arith.constant 0 : index
    %348 = vector.load %arg5[%347, %c0_149, %c0_150] : memref<8x2x32xf32, #tpu.memory_space<vmem>>, vector<1x2x32xf32>
    %349 = vector.shape_cast %348 : vector<1x2x32xf32> to vector<2x32xf32>
    %350 = vector.shape_cast %344 : vector<2x32xf32> to vector<1x2x32xf32>
    tpu.vector_store %arg5[%347, %c0_149, %c0_150], %350 {strides = array<i32>} : memref<8x2x32xf32, #tpu.memory_space<vmem>>, vector<1x2x32xf32>,
    %c7_i32_151 = arith.constant 7 : i32
    %351 = arith.subi %c7_i32_151, %c4_i32 : i32
    %352 = arith.index_cast %351 : i32 to index
    %c0_152 = arith.constant 0 : index
    %c0_153 = arith.constant 0 : index
    %353 = vector.load %arg2[%352, %c0_152, %c0_153] : memref<8x2x128xf32, #tpu.memory_space<vmem>>, vector<1x2x128xf32>
    %354 = vector.shape_cast %353 : vector<1x2x128xf32> to vector<2x128xf32>
    %c0_154 = arith.constant 0 : index
    %c0_155 = arith.constant 0 : index
    %355 = vector.load %arg9[%c0_154, %c0_155] : memref<2x32xf32, #tpu.memory_space<vmem>>, vector<2x32xf32>
    %c0_156 = arith.constant 0 : index
    %c0_157 = arith.constant 0 : index
    %356 = vector.load %arg10[%c0_156, %c0_157] : memref<2x32xf32, #tpu.memory_space<vmem>>, vector<2x32xf32>
    %cst_158 = arith.constant dense<0.000000e+00> : vector<2x128xf32>
    %357 = tpu.matmul %355, %4, %cst_158 {dimension_numbers = #tpu.dot_dimension_numbers<[1], [0], [0], [1], [0, 0, 1, 1], [], []>} : vector<2x32xf32>, vector<32x128xf32>, vector<2x128xf32> -> vector<2x128xf32>
    %358 = arith.addf %354, %357 : vector<2x128xf32>
    %359 = vector.extract_strided_slice %358 {offsets = [0, 0], sizes = [2, 32], strides = [1, 1]} : vector<2x128xf32> to vector<2x32xf32>
    %360 = arith.negf %359 : vector<2x32xf32>
    %361 = math.exp %360 : vector<2x32xf32>
    %cst_159 = arith.constant 1.000000e+00 : f32
    %362 = vector.broadcast %cst_159 : f32 to vector<2x32xf32>
    %363 = arith.addf %362, %361 : vector<2x32xf32>
    %364 = arith.divf %362, %363 : vector<2x32xf32>
    %365 = vector.extract_strided_slice %358 {offsets = [0, 32], sizes = [2, 32], strides = [1, 1]} : vector<2x128xf32> to vector<2x32xf32>
    %366 = arith.negf %365 : vector<2x32xf32>
    %367 = math.exp %366 : vector<2x32xf32>
    %cst_160 = arith.constant 1.000000e+00 : f32
    %368 = vector.broadcast %cst_160 : f32 to vector<2x32xf32>
    %369 = arith.addf %368, %367 : vector<2x32xf32>
    %370 = arith.divf %368, %369 : vector<2x32xf32>
    %371 = vector.extract_strided_slice %358 {offsets = [0, 64], sizes = [2, 32], strides = [1, 1]} : vector<2x128xf32> to vector<2x32xf32>
    %372 = math.tanh %371 : vector<2x32xf32>
    %373 = vector.extract_strided_slice %358 {offsets = [0, 96], sizes = [2, 32], strides = [1, 1]} : vector<2x128xf32> to vector<2x32xf32>
    %374 = arith.negf %373 : vector<2x32xf32>
    %375 = math.exp %374 : vector<2x32xf32>
    %cst_161 = arith.constant 1.000000e+00 : f32
    %376 = vector.broadcast %cst_161 : f32 to vector<2x32xf32>
    %377 = arith.addf %376, %375 : vector<2x32xf32>
    %378 = arith.divf %376, %377 : vector<2x32xf32>
    %379 = arith.mulf %370, %356 : vector<2x32xf32>
    %380 = arith.mulf %364, %372 : vector<2x32xf32>
    %381 = arith.addf %379, %380 : vector<2x32xf32>
    %382 = math.tanh %381 : vector<2x32xf32>
    %383 = arith.mulf %378, %382 : vector<2x32xf32>
    %c0_162 = arith.constant 0 : index
    %c0_163 = arith.constant 0 : index
    %384 = vector.load %arg9[%c0_162, %c0_163] : memref<2x32xf32, #tpu.memory_space<vmem>>, vector<2x32xf32>
    tpu.vector_store %arg9[%c0_162, %c0_163], %383 {strides = array<i32>} : memref<2x32xf32, #tpu.memory_space<vmem>>, vector<2x32xf32>,
    %c0_164 = arith.constant 0 : index
    %c0_165 = arith.constant 0 : index
    %385 = vector.load %arg10[%c0_164, %c0_165] : memref<2x32xf32, #tpu.memory_space<vmem>>, vector<2x32xf32>
    tpu.vector_store %arg10[%c0_164, %c0_165], %381 {strides = array<i32>} : memref<2x32xf32, #tpu.memory_space<vmem>>, vector<2x32xf32>,
    %386 = arith.index_cast %351 : i32 to index
    %c0_166 = arith.constant 0 : index
    %c0_167 = arith.constant 0 : index
    %387 = vector.load %arg6[%386, %c0_166, %c0_167] : memref<8x2x32xf32, #tpu.memory_space<vmem>>, vector<1x2x32xf32>
    %388 = vector.shape_cast %387 : vector<1x2x32xf32> to vector<2x32xf32>
    %389 = vector.shape_cast %383 : vector<2x32xf32> to vector<1x2x32xf32>
    tpu.vector_store %arg6[%386, %c0_166, %c0_167], %389 {strides = array<i32>} : memref<8x2x32xf32, #tpu.memory_space<vmem>>, vector<1x2x32xf32>,
    %c5_i32 = arith.constant 5 : i32
    %390 = arith.index_cast %c5_i32 : i32 to index
    %c0_168 = arith.constant 0 : index
    %c0_169 = arith.constant 0 : index
    %391 = vector.load %arg1[%390, %c0_168, %c0_169] : memref<8x2x128xf32, #tpu.memory_space<vmem>>, vector<1x2x128xf32>
    %392 = vector.shape_cast %391 : vector<1x2x128xf32> to vector<2x128xf32>
    %c0_170 = arith.constant 0 : index
    %c0_171 = arith.constant 0 : index
    %393 = vector.load %arg7[%c0_170, %c0_171] : memref<2x32xf32, #tpu.memory_space<vmem>>, vector<2x32xf32>
    %c0_172 = arith.constant 0 : index
    %c0_173 = arith.constant 0 : index
    %394 = vector.load %arg8[%c0_172, %c0_173] : memref<2x32xf32, #tpu.memory_space<vmem>>, vector<2x32xf32>
    %cst_174 = arith.constant dense<0.000000e+00> : vector<2x128xf32>
    %395 = tpu.matmul %393, %3, %cst_174 {dimension_numbers = #tpu.dot_dimension_numbers<[1], [0], [0], [1], [0, 0, 1, 1], [], []>} : vector<2x32xf32>, vector<32x128xf32>, vector<2x128xf32> -> vector<2x128xf32>
    %396 = arith.addf %392, %395 : vector<2x128xf32>
    %397 = vector.extract_strided_slice %396 {offsets = [0, 0], sizes = [2, 32], strides = [1, 1]} : vector<2x128xf32> to vector<2x32xf32>
    %398 = arith.negf %397 : vector<2x32xf32>
    %399 = math.exp %398 : vector<2x32xf32>
    %cst_175 = arith.constant 1.000000e+00 : f32
    %400 = vector.broadcast %cst_175 : f32 to vector<2x32xf32>
    %401 = arith.addf %400, %399 : vector<2x32xf32>
    %402 = arith.divf %400, %401 : vector<2x32xf32>
    %403 = vector.extract_strided_slice %396 {offsets = [0, 32], sizes = [2, 32], strides = [1, 1]} : vector<2x128xf32> to vector<2x32xf32>
    %404 = arith.negf %403 : vector<2x32xf32>
    %405 = math.exp %404 : vector<2x32xf32>
    %cst_176 = arith.constant 1.000000e+00 : f32
    %406 = vector.broadcast %cst_176 : f32 to vector<2x32xf32>
    %407 = arith.addf %406, %405 : vector<2x32xf32>
    %408 = arith.divf %406, %407 : vector<2x32xf32>
    %409 = vector.extract_strided_slice %396 {offsets = [0, 64], sizes = [2, 32], strides = [1, 1]} : vector<2x128xf32> to vector<2x32xf32>
    %410 = math.tanh %409 : vector<2x32xf32>
    %411 = vector.extract_strided_slice %396 {offsets = [0, 96], sizes = [2, 32], strides = [1, 1]} : vector<2x128xf32> to vector<2x32xf32>
    %412 = arith.negf %411 : vector<2x32xf32>
    %413 = math.exp %412 : vector<2x32xf32>
    %cst_177 = arith.constant 1.000000e+00 : f32
    %414 = vector.broadcast %cst_177 : f32 to vector<2x32xf32>
    %415 = arith.addf %414, %413 : vector<2x32xf32>
    %416 = arith.divf %414, %415 : vector<2x32xf32>
    %417 = arith.mulf %408, %394 : vector<2x32xf32>
    %418 = arith.mulf %402, %410 : vector<2x32xf32>
    %419 = arith.addf %417, %418 : vector<2x32xf32>
    %420 = math.tanh %419 : vector<2x32xf32>
    %421 = arith.mulf %416, %420 : vector<2x32xf32>
    %c0_178 = arith.constant 0 : index
    %c0_179 = arith.constant 0 : index
    %422 = vector.load %arg7[%c0_178, %c0_179] : memref<2x32xf32, #tpu.memory_space<vmem>>, vector<2x32xf32>
    tpu.vector_store %arg7[%c0_178, %c0_179], %421 {strides = array<i32>} : memref<2x32xf32, #tpu.memory_space<vmem>>, vector<2x32xf32>,
    %c0_180 = arith.constant 0 : index
    %c0_181 = arith.constant 0 : index
    %423 = vector.load %arg8[%c0_180, %c0_181] : memref<2x32xf32, #tpu.memory_space<vmem>>, vector<2x32xf32>
    tpu.vector_store %arg8[%c0_180, %c0_181], %419 {strides = array<i32>} : memref<2x32xf32, #tpu.memory_space<vmem>>, vector<2x32xf32>,
    %424 = arith.index_cast %c5_i32 : i32 to index
    %c0_182 = arith.constant 0 : index
    %c0_183 = arith.constant 0 : index
    %425 = vector.load %arg5[%424, %c0_182, %c0_183] : memref<8x2x32xf32, #tpu.memory_space<vmem>>, vector<1x2x32xf32>
    %426 = vector.shape_cast %425 : vector<1x2x32xf32> to vector<2x32xf32>
    %427 = vector.shape_cast %421 : vector<2x32xf32> to vector<1x2x32xf32>
    tpu.vector_store %arg5[%424, %c0_182, %c0_183], %427 {strides = array<i32>} : memref<8x2x32xf32, #tpu.memory_space<vmem>>, vector<1x2x32xf32>,
    %c7_i32_184 = arith.constant 7 : i32
    %428 = arith.subi %c7_i32_184, %c5_i32 : i32
    %429 = arith.index_cast %428 : i32 to index
    %c0_185 = arith.constant 0 : index
    %c0_186 = arith.constant 0 : index
    %430 = vector.load %arg2[%429, %c0_185, %c0_186] : memref<8x2x128xf32, #tpu.memory_space<vmem>>, vector<1x2x128xf32>
    %431 = vector.shape_cast %430 : vector<1x2x128xf32> to vector<2x128xf32>
    %c0_187 = arith.constant 0 : index
    %c0_188 = arith.constant 0 : index
    %432 = vector.load %arg9[%c0_187, %c0_188] : memref<2x32xf32, #tpu.memory_space<vmem>>, vector<2x32xf32>
    %c0_189 = arith.constant 0 : index
    %c0_190 = arith.constant 0 : index
    %433 = vector.load %arg10[%c0_189, %c0_190] : memref<2x32xf32, #tpu.memory_space<vmem>>, vector<2x32xf32>
    %cst_191 = arith.constant dense<0.000000e+00> : vector<2x128xf32>
    %434 = tpu.matmul %432, %4, %cst_191 {dimension_numbers = #tpu.dot_dimension_numbers<[1], [0], [0], [1], [0, 0, 1, 1], [], []>} : vector<2x32xf32>, vector<32x128xf32>, vector<2x128xf32> -> vector<2x128xf32>
    %435 = arith.addf %431, %434 : vector<2x128xf32>
    %436 = vector.extract_strided_slice %435 {offsets = [0, 0], sizes = [2, 32], strides = [1, 1]} : vector<2x128xf32> to vector<2x32xf32>
    %437 = arith.negf %436 : vector<2x32xf32>
    %438 = math.exp %437 : vector<2x32xf32>
    %cst_192 = arith.constant 1.000000e+00 : f32
    %439 = vector.broadcast %cst_192 : f32 to vector<2x32xf32>
    %440 = arith.addf %439, %438 : vector<2x32xf32>
    %441 = arith.divf %439, %440 : vector<2x32xf32>
    %442 = vector.extract_strided_slice %435 {offsets = [0, 32], sizes = [2, 32], strides = [1, 1]} : vector<2x128xf32> to vector<2x32xf32>
    %443 = arith.negf %442 : vector<2x32xf32>
    %444 = math.exp %443 : vector<2x32xf32>
    %cst_193 = arith.constant 1.000000e+00 : f32
    %445 = vector.broadcast %cst_193 : f32 to vector<2x32xf32>
    %446 = arith.addf %445, %444 : vector<2x32xf32>
    %447 = arith.divf %445, %446 : vector<2x32xf32>
    %448 = vector.extract_strided_slice %435 {offsets = [0, 64], sizes = [2, 32], strides = [1, 1]} : vector<2x128xf32> to vector<2x32xf32>
    %449 = math.tanh %448 : vector<2x32xf32>
    %450 = vector.extract_strided_slice %435 {offsets = [0, 96], sizes = [2, 32], strides = [1, 1]} : vector<2x128xf32> to vector<2x32xf32>
    %451 = arith.negf %450 : vector<2x32xf32>
    %452 = math.exp %451 : vector<2x32xf32>
    %cst_194 = arith.constant 1.000000e+00 : f32
    %453 = vector.broadcast %cst_194 : f32 to vector<2x32xf32>
    %454 = arith.addf %453, %452 : vector<2x32xf32>
    %455 = arith.divf %453, %454 : vector<2x32xf32>
    %456 = arith.mulf %447, %433 : vector<2x32xf32>
    %457 = arith.mulf %441, %449 : vector<2x32xf32>
    %458 = arith.addf %456, %457 : vector<2x32xf32>
    %459 = math.tanh %458 : vector<2x32xf32>
    %460 = arith.mulf %455, %459 : vector<2x32xf32>
    %c0_195 = arith.constant 0 : index
    %c0_196 = arith.constant 0 : index
    %461 = vector.load %arg9[%c0_195, %c0_196] : memref<2x32xf32, #tpu.memory_space<vmem>>, vector<2x32xf32>
    tpu.vector_store %arg9[%c0_195, %c0_196], %460 {strides = array<i32>} : memref<2x32xf32, #tpu.memory_space<vmem>>, vector<2x32xf32>,
    %c0_197 = arith.constant 0 : index
    %c0_198 = arith.constant 0 : index
    %462 = vector.load %arg10[%c0_197, %c0_198] : memref<2x32xf32, #tpu.memory_space<vmem>>, vector<2x32xf32>
    tpu.vector_store %arg10[%c0_197, %c0_198], %458 {strides = array<i32>} : memref<2x32xf32, #tpu.memory_space<vmem>>, vector<2x32xf32>,
    %463 = arith.index_cast %428 : i32 to index
    %c0_199 = arith.constant 0 : index
    %c0_200 = arith.constant 0 : index
    %464 = vector.load %arg6[%463, %c0_199, %c0_200] : memref<8x2x32xf32, #tpu.memory_space<vmem>>, vector<1x2x32xf32>
    %465 = vector.shape_cast %464 : vector<1x2x32xf32> to vector<2x32xf32>
    %466 = vector.shape_cast %460 : vector<2x32xf32> to vector<1x2x32xf32>
    tpu.vector_store %arg6[%463, %c0_199, %c0_200], %466 {strides = array<i32>} : memref<8x2x32xf32, #tpu.memory_space<vmem>>, vector<1x2x32xf32>,
    %c6_i32 = arith.constant 6 : i32
    %467 = arith.index_cast %c6_i32 : i32 to index
    %c0_201 = arith.constant 0 : index
    %c0_202 = arith.constant 0 : index
    %468 = vector.load %arg1[%467, %c0_201, %c0_202] : memref<8x2x128xf32, #tpu.memory_space<vmem>>, vector<1x2x128xf32>
    %469 = vector.shape_cast %468 : vector<1x2x128xf32> to vector<2x128xf32>
    %c0_203 = arith.constant 0 : index
    %c0_204 = arith.constant 0 : index
    %470 = vector.load %arg7[%c0_203, %c0_204] : memref<2x32xf32, #tpu.memory_space<vmem>>, vector<2x32xf32>
    %c0_205 = arith.constant 0 : index
    %c0_206 = arith.constant 0 : index
    %471 = vector.load %arg8[%c0_205, %c0_206] : memref<2x32xf32, #tpu.memory_space<vmem>>, vector<2x32xf32>
    %cst_207 = arith.constant dense<0.000000e+00> : vector<2x128xf32>
    %472 = tpu.matmul %470, %3, %cst_207 {dimension_numbers = #tpu.dot_dimension_numbers<[1], [0], [0], [1], [0, 0, 1, 1], [], []>} : vector<2x32xf32>, vector<32x128xf32>, vector<2x128xf32> -> vector<2x128xf32>
    %473 = arith.addf %469, %472 : vector<2x128xf32>
    %474 = vector.extract_strided_slice %473 {offsets = [0, 0], sizes = [2, 32], strides = [1, 1]} : vector<2x128xf32> to vector<2x32xf32>
    %475 = arith.negf %474 : vector<2x32xf32>
    %476 = math.exp %475 : vector<2x32xf32>
    %cst_208 = arith.constant 1.000000e+00 : f32
    %477 = vector.broadcast %cst_208 : f32 to vector<2x32xf32>
    %478 = arith.addf %477, %476 : vector<2x32xf32>
    %479 = arith.divf %477, %478 : vector<2x32xf32>
    %480 = vector.extract_strided_slice %473 {offsets = [0, 32], sizes = [2, 32], strides = [1, 1]} : vector<2x128xf32> to vector<2x32xf32>
    %481 = arith.negf %480 : vector<2x32xf32>
    %482 = math.exp %481 : vector<2x32xf32>
    %cst_209 = arith.constant 1.000000e+00 : f32
    %483 = vector.broadcast %cst_209 : f32 to vector<2x32xf32>
    %484 = arith.addf %483, %482 : vector<2x32xf32>
    %485 = arith.divf %483, %484 : vector<2x32xf32>
    %486 = vector.extract_strided_slice %473 {offsets = [0, 64], sizes = [2, 32], strides = [1, 1]} : vector<2x128xf32> to vector<2x32xf32>
    %487 = math.tanh %486 : vector<2x32xf32>
    %488 = vector.extract_strided_slice %473 {offsets = [0, 96], sizes = [2, 32], strides = [1, 1]} : vector<2x128xf32> to vector<2x32xf32>
    %489 = arith.negf %488 : vector<2x32xf32>
    %490 = math.exp %489 : vector<2x32xf32>
    %cst_210 = arith.constant 1.000000e+00 : f32
    %491 = vector.broadcast %cst_210 : f32 to vector<2x32xf32>
    %492 = arith.addf %491, %490 : vector<2x32xf32>
    %493 = arith.divf %491, %492 : vector<2x32xf32>
    %494 = arith.mulf %485, %471 : vector<2x32xf32>
    %495 = arith.mulf %479, %487 : vector<2x32xf32>
    %496 = arith.addf %494, %495 : vector<2x32xf32>
    %497 = math.tanh %496 : vector<2x32xf32>
    %498 = arith.mulf %493, %497 : vector<2x32xf32>
    %c0_211 = arith.constant 0 : index
    %c0_212 = arith.constant 0 : index
    %499 = vector.load %arg7[%c0_211, %c0_212] : memref<2x32xf32, #tpu.memory_space<vmem>>, vector<2x32xf32>
    tpu.vector_store %arg7[%c0_211, %c0_212], %498 {strides = array<i32>} : memref<2x32xf32, #tpu.memory_space<vmem>>, vector<2x32xf32>,
    %c0_213 = arith.constant 0 : index
    %c0_214 = arith.constant 0 : index
    %500 = vector.load %arg8[%c0_213, %c0_214] : memref<2x32xf32, #tpu.memory_space<vmem>>, vector<2x32xf32>
    tpu.vector_store %arg8[%c0_213, %c0_214], %496 {strides = array<i32>} : memref<2x32xf32, #tpu.memory_space<vmem>>, vector<2x32xf32>,
    %501 = arith.index_cast %c6_i32 : i32 to index
    %c0_215 = arith.constant 0 : index
    %c0_216 = arith.constant 0 : index
    %502 = vector.load %arg5[%501, %c0_215, %c0_216] : memref<8x2x32xf32, #tpu.memory_space<vmem>>, vector<1x2x32xf32>
    %503 = vector.shape_cast %502 : vector<1x2x32xf32> to vector<2x32xf32>
    %504 = vector.shape_cast %498 : vector<2x32xf32> to vector<1x2x32xf32>
    tpu.vector_store %arg5[%501, %c0_215, %c0_216], %504 {strides = array<i32>} : memref<8x2x32xf32, #tpu.memory_space<vmem>>, vector<1x2x32xf32>,
    %c7_i32_217 = arith.constant 7 : i32
    %505 = arith.subi %c7_i32_217, %c6_i32 : i32
    %506 = arith.index_cast %505 : i32 to index
    %c0_218 = arith.constant 0 : index
    %c0_219 = arith.constant 0 : index
    %507 = vector.load %arg2[%506, %c0_218, %c0_219] : memref<8x2x128xf32, #tpu.memory_space<vmem>>, vector<1x2x128xf32>
    %508 = vector.shape_cast %507 : vector<1x2x128xf32> to vector<2x128xf32>
    %c0_220 = arith.constant 0 : index
    %c0_221 = arith.constant 0 : index
    %509 = vector.load %arg9[%c0_220, %c0_221] : memref<2x32xf32, #tpu.memory_space<vmem>>, vector<2x32xf32>
    %c0_222 = arith.constant 0 : index
    %c0_223 = arith.constant 0 : index
    %510 = vector.load %arg10[%c0_222, %c0_223] : memref<2x32xf32, #tpu.memory_space<vmem>>, vector<2x32xf32>
    %cst_224 = arith.constant dense<0.000000e+00> : vector<2x128xf32>
    %511 = tpu.matmul %509, %4, %cst_224 {dimension_numbers = #tpu.dot_dimension_numbers<[1], [0], [0], [1], [0, 0, 1, 1], [], []>} : vector<2x32xf32>, vector<32x128xf32>, vector<2x128xf32> -> vector<2x128xf32>
    %512 = arith.addf %508, %511 : vector<2x128xf32>
    %513 = vector.extract_strided_slice %512 {offsets = [0, 0], sizes = [2, 32], strides = [1, 1]} : vector<2x128xf32> to vector<2x32xf32>
    %514 = arith.negf %513 : vector<2x32xf32>
    %515 = math.exp %514 : vector<2x32xf32>
    %cst_225 = arith.constant 1.000000e+00 : f32
    %516 = vector.broadcast %cst_225 : f32 to vector<2x32xf32>
    %517 = arith.addf %516, %515 : vector<2x32xf32>
    %518 = arith.divf %516, %517 : vector<2x32xf32>
    %519 = vector.extract_strided_slice %512 {offsets = [0, 32], sizes = [2, 32], strides = [1, 1]} : vector<2x128xf32> to vector<2x32xf32>
    %520 = arith.negf %519 : vector<2x32xf32>
    %521 = math.exp %520 : vector<2x32xf32>
    %cst_226 = arith.constant 1.000000e+00 : f32
    %522 = vector.broadcast %cst_226 : f32 to vector<2x32xf32>
    %523 = arith.addf %522, %521 : vector<2x32xf32>
    %524 = arith.divf %522, %523 : vector<2x32xf32>
    %525 = vector.extract_strided_slice %512 {offsets = [0, 64], sizes = [2, 32], strides = [1, 1]} : vector<2x128xf32> to vector<2x32xf32>
    %526 = math.tanh %525 : vector<2x32xf32>
    %527 = vector.extract_strided_slice %512 {offsets = [0, 96], sizes = [2, 32], strides = [1, 1]} : vector<2x128xf32> to vector<2x32xf32>
    %528 = arith.negf %527 : vector<2x32xf32>
    %529 = math.exp %528 : vector<2x32xf32>
    %cst_227 = arith.constant 1.000000e+00 : f32
    %530 = vector.broadcast %cst_227 : f32 to vector<2x32xf32>
    %531 = arith.addf %530, %529 : vector<2x32xf32>
    %532 = arith.divf %530, %531 : vector<2x32xf32>
    %533 = arith.mulf %524, %510 : vector<2x32xf32>
    %534 = arith.mulf %518, %526 : vector<2x32xf32>
    %535 = arith.addf %533, %534 : vector<2x32xf32>
    %536 = math.tanh %535 : vector<2x32xf32>
    %537 = arith.mulf %532, %536 : vector<2x32xf32>
    %c0_228 = arith.constant 0 : index
    %c0_229 = arith.constant 0 : index
    %538 = vector.load %arg9[%c0_228, %c0_229] : memref<2x32xf32, #tpu.memory_space<vmem>>, vector<2x32xf32>
    tpu.vector_store %arg9[%c0_228, %c0_229], %537 {strides = array<i32>} : memref<2x32xf32, #tpu.memory_space<vmem>>, vector<2x32xf32>,
    %c0_230 = arith.constant 0 : index
    %c0_231 = arith.constant 0 : index
    %539 = vector.load %arg10[%c0_230, %c0_231] : memref<2x32xf32, #tpu.memory_space<vmem>>, vector<2x32xf32>
    tpu.vector_store %arg10[%c0_230, %c0_231], %535 {strides = array<i32>} : memref<2x32xf32, #tpu.memory_space<vmem>>, vector<2x32xf32>,
    %540 = arith.index_cast %505 : i32 to index
    %c0_232 = arith.constant 0 : index
    %c0_233 = arith.constant 0 : index
    %541 = vector.load %arg6[%540, %c0_232, %c0_233] : memref<8x2x32xf32, #tpu.memory_space<vmem>>, vector<1x2x32xf32>
    %542 = vector.shape_cast %541 : vector<1x2x32xf32> to vector<2x32xf32>
    %543 = vector.shape_cast %537 : vector<2x32xf32> to vector<1x2x32xf32>
    tpu.vector_store %arg6[%540, %c0_232, %c0_233], %543 {strides = array<i32>} : memref<8x2x32xf32, #tpu.memory_space<vmem>>, vector<1x2x32xf32>,
    %c7_i32_234 = arith.constant 7 : i32
    %544 = arith.index_cast %c7_i32_234 : i32 to index
    %c0_235 = arith.constant 0 : index
    %c0_236 = arith.constant 0 : index
    %545 = vector.load %arg1[%544, %c0_235, %c0_236] : memref<8x2x128xf32, #tpu.memory_space<vmem>>, vector<1x2x128xf32>
    %546 = vector.shape_cast %545 : vector<1x2x128xf32> to vector<2x128xf32>
    %c0_237 = arith.constant 0 : index
    %c0_238 = arith.constant 0 : index
    %547 = vector.load %arg7[%c0_237, %c0_238] : memref<2x32xf32, #tpu.memory_space<vmem>>, vector<2x32xf32>
    %c0_239 = arith.constant 0 : index
    %c0_240 = arith.constant 0 : index
    %548 = vector.load %arg8[%c0_239, %c0_240] : memref<2x32xf32, #tpu.memory_space<vmem>>, vector<2x32xf32>
    %cst_241 = arith.constant dense<0.000000e+00> : vector<2x128xf32>
    %549 = tpu.matmul %547, %3, %cst_241 {dimension_numbers = #tpu.dot_dimension_numbers<[1], [0], [0], [1], [0, 0, 1, 1], [], []>} : vector<2x32xf32>, vector<32x128xf32>, vector<2x128xf32> -> vector<2x128xf32>
    %550 = arith.addf %546, %549 : vector<2x128xf32>
    %551 = vector.extract_strided_slice %550 {offsets = [0, 0], sizes = [2, 32], strides = [1, 1]} : vector<2x128xf32> to vector<2x32xf32>
    %552 = arith.negf %551 : vector<2x32xf32>
    %553 = math.exp %552 : vector<2x32xf32>
    %cst_242 = arith.constant 1.000000e+00 : f32
    %554 = vector.broadcast %cst_242 : f32 to vector<2x32xf32>
    %555 = arith.addf %554, %553 : vector<2x32xf32>
    %556 = arith.divf %554, %555 : vector<2x32xf32>
    %557 = vector.extract_strided_slice %550 {offsets = [0, 32], sizes = [2, 32], strides = [1, 1]} : vector<2x128xf32> to vector<2x32xf32>
    %558 = arith.negf %557 : vector<2x32xf32>
    %559 = math.exp %558 : vector<2x32xf32>
    %cst_243 = arith.constant 1.000000e+00 : f32
    %560 = vector.broadcast %cst_243 : f32 to vector<2x32xf32>
    %561 = arith.addf %560, %559 : vector<2x32xf32>
    %562 = arith.divf %560, %561 : vector<2x32xf32>
    %563 = vector.extract_strided_slice %550 {offsets = [0, 64], sizes = [2, 32], strides = [1, 1]} : vector<2x128xf32> to vector<2x32xf32>
    %564 = math.tanh %563 : vector<2x32xf32>
    %565 = vector.extract_strided_slice %550 {offsets = [0, 96], sizes = [2, 32], strides = [1, 1]} : vector<2x128xf32> to vector<2x32xf32>
    %566 = arith.negf %565 : vector<2x32xf32>
    %567 = math.exp %566 : vector<2x32xf32>
    %cst_244 = arith.constant 1.000000e+00 : f32
    %568 = vector.broadcast %cst_244 : f32 to vector<2x32xf32>
    %569 = arith.addf %568, %567 : vector<2x32xf32>
    %570 = arith.divf %568, %569 : vector<2x32xf32>
    %571 = arith.mulf %562, %548 : vector<2x32xf32>
    %572 = arith.mulf %556, %564 : vector<2x32xf32>
    %573 = arith.addf %571, %572 : vector<2x32xf32>
    %574 = math.tanh %573 : vector<2x32xf32>
    %575 = arith.mulf %570, %574 : vector<2x32xf32>
    %c0_245 = arith.constant 0 : index
    %c0_246 = arith.constant 0 : index
    %576 = vector.load %arg7[%c0_245, %c0_246] : memref<2x32xf32, #tpu.memory_space<vmem>>, vector<2x32xf32>
    tpu.vector_store %arg7[%c0_245, %c0_246], %575 {strides = array<i32>} : memref<2x32xf32, #tpu.memory_space<vmem>>, vector<2x32xf32>,
    %c0_247 = arith.constant 0 : index
    %c0_248 = arith.constant 0 : index
    %577 = vector.load %arg8[%c0_247, %c0_248] : memref<2x32xf32, #tpu.memory_space<vmem>>, vector<2x32xf32>
    tpu.vector_store %arg8[%c0_247, %c0_248], %573 {strides = array<i32>} : memref<2x32xf32, #tpu.memory_space<vmem>>, vector<2x32xf32>,
    %578 = arith.index_cast %c7_i32_234 : i32 to index
    %c0_249 = arith.constant 0 : index
    %c0_250 = arith.constant 0 : index
    %579 = vector.load %arg5[%578, %c0_249, %c0_250] : memref<8x2x32xf32, #tpu.memory_space<vmem>>, vector<1x2x32xf32>
    %580 = vector.shape_cast %579 : vector<1x2x32xf32> to vector<2x32xf32>
    %581 = vector.shape_cast %575 : vector<2x32xf32> to vector<1x2x32xf32>
    tpu.vector_store %arg5[%578, %c0_249, %c0_250], %581 {strides = array<i32>} : memref<8x2x32xf32, #tpu.memory_space<vmem>>, vector<1x2x32xf32>,
    %c7_i32_251 = arith.constant 7 : i32
    %582 = arith.subi %c7_i32_251, %c7_i32_234 : i32
    %583 = arith.index_cast %582 : i32 to index
    %c0_252 = arith.constant 0 : index
    %c0_253 = arith.constant 0 : index
    %584 = vector.load %arg2[%583, %c0_252, %c0_253] : memref<8x2x128xf32, #tpu.memory_space<vmem>>, vector<1x2x128xf32>
    %585 = vector.shape_cast %584 : vector<1x2x128xf32> to vector<2x128xf32>
    %c0_254 = arith.constant 0 : index
    %c0_255 = arith.constant 0 : index
    %586 = vector.load %arg9[%c0_254, %c0_255] : memref<2x32xf32, #tpu.memory_space<vmem>>, vector<2x32xf32>
    %c0_256 = arith.constant 0 : index
    %c0_257 = arith.constant 0 : index
    %587 = vector.load %arg10[%c0_256, %c0_257] : memref<2x32xf32, #tpu.memory_space<vmem>>, vector<2x32xf32>
    %cst_258 = arith.constant dense<0.000000e+00> : vector<2x128xf32>
    %588 = tpu.matmul %586, %4, %cst_258 {dimension_numbers = #tpu.dot_dimension_numbers<[1], [0], [0], [1], [0, 0, 1, 1], [], []>} : vector<2x32xf32>, vector<32x128xf32>, vector<2x128xf32> -> vector<2x128xf32>
    %589 = arith.addf %585, %588 : vector<2x128xf32>
    %590 = vector.extract_strided_slice %589 {offsets = [0, 0], sizes = [2, 32], strides = [1, 1]} : vector<2x128xf32> to vector<2x32xf32>
    %591 = arith.negf %590 : vector<2x32xf32>
    %592 = math.exp %591 : vector<2x32xf32>
    %cst_259 = arith.constant 1.000000e+00 : f32
    %593 = vector.broadcast %cst_259 : f32 to vector<2x32xf32>
    %594 = arith.addf %593, %592 : vector<2x32xf32>
    %595 = arith.divf %593, %594 : vector<2x32xf32>
    %596 = vector.extract_strided_slice %589 {offsets = [0, 32], sizes = [2, 32], strides = [1, 1]} : vector<2x128xf32> to vector<2x32xf32>
    %597 = arith.negf %596 : vector<2x32xf32>
    %598 = math.exp %597 : vector<2x32xf32>
    %cst_260 = arith.constant 1.000000e+00 : f32
    %599 = vector.broadcast %cst_260 : f32 to vector<2x32xf32>
    %600 = arith.addf %599, %598 : vector<2x32xf32>
    %601 = arith.divf %599, %600 : vector<2x32xf32>
    %602 = vector.extract_strided_slice %589 {offsets = [0, 64], sizes = [2, 32], strides = [1, 1]} : vector<2x128xf32> to vector<2x32xf32>
    %603 = math.tanh %602 : vector<2x32xf32>
    %604 = vector.extract_strided_slice %589 {offsets = [0, 96], sizes = [2, 32], strides = [1, 1]} : vector<2x128xf32> to vector<2x32xf32>
    %605 = arith.negf %604 : vector<2x32xf32>
    %606 = math.exp %605 : vector<2x32xf32>
    %cst_261 = arith.constant 1.000000e+00 : f32
    %607 = vector.broadcast %cst_261 : f32 to vector<2x32xf32>
    %608 = arith.addf %607, %606 : vector<2x32xf32>
    %609 = arith.divf %607, %608 : vector<2x32xf32>
    %610 = arith.mulf %601, %587 : vector<2x32xf32>
    %611 = arith.mulf %595, %603 : vector<2x32xf32>
    %612 = arith.addf %610, %611 : vector<2x32xf32>
    %613 = math.tanh %612 : vector<2x32xf32>
    %614 = arith.mulf %609, %613 : vector<2x32xf32>
    %c0_262 = arith.constant 0 : index
    %c0_263 = arith.constant 0 : index
    %615 = vector.load %arg9[%c0_262, %c0_263] : memref<2x32xf32, #tpu.memory_space<vmem>>, vector<2x32xf32>
    tpu.vector_store %arg9[%c0_262, %c0_263], %614 {strides = array<i32>} : memref<2x32xf32, #tpu.memory_space<vmem>>, vector<2x32xf32>,
    %c0_264 = arith.constant 0 : index
    %c0_265 = arith.constant 0 : index
    %616 = vector.load %arg10[%c0_264, %c0_265] : memref<2x32xf32, #tpu.memory_space<vmem>>, vector<2x32xf32>
    tpu.vector_store %arg10[%c0_264, %c0_265], %612 {strides = array<i32>} : memref<2x32xf32, #tpu.memory_space<vmem>>, vector<2x32xf32>,
    %617 = arith.index_cast %582 : i32 to index
    %c0_266 = arith.constant 0 : index
    %c0_267 = arith.constant 0 : index
    %618 = vector.load %arg6[%617, %c0_266, %c0_267] : memref<8x2x32xf32, #tpu.memory_space<vmem>>, vector<1x2x32xf32>
    %619 = vector.shape_cast %618 : vector<1x2x32xf32> to vector<2x32xf32>
    %620 = vector.shape_cast %614 : vector<2x32xf32> to vector<1x2x32xf32>
    tpu.vector_store %arg6[%617, %c0_266, %c0_267], %620 {strides = array<i32>} : memref<8x2x32xf32, #tpu.memory_space<vmem>>, vector<1x2x32xf32>,
    %c8_i32 = arith.constant 8 : i32
    return
  }
  func.func @transform_0(%arg0: i32) -> (i32, i32, i32) {
    %c0_i32 = arith.constant 0 : i32
    %c0_i32_0 = arith.constant 0 : i32
    %c0_i32_1 = arith.constant 0 : i32
    return %arg0, %c0_i32, %c0_i32_0 : i32, i32, i32
  }
  func.func @transform_1(%arg0: i32) -> (i32, i32, i32) {
    %c0_i32 = arith.constant 0 : i32
    %0 = arith.subi %c0_i32, %arg0 : i32
    %c0_i32_0 = arith.constant 0 : i32
    %c0_i32_1 = arith.constant 0 : i32
    %c0_i32_2 = arith.constant 0 : i32
    return %0, %c0_i32_0, %c0_i32_1 : i32, i32, i32
  }
  func.func @transform_2(%arg0: i32) -> (i32, i32) {
    %c0_i32 = arith.constant 0 : i32
    %c0_i32_0 = arith.constant 0 : i32
    %c0_i32_1 = arith.constant 0 : i32
    return %c0_i32, %c0_i32_0 : i32, i32
  }
  func.func @transform_3(%arg0: i32) -> (i32, i32) {
    %c0_i32 = arith.constant 0 : i32
    %c0_i32_0 = arith.constant 0 : i32
    %c0_i32_1 = arith.constant 0 : i32
    return %c0_i32, %c0_i32_0 : i32, i32
  }
  func.func @transform_4(%arg0: i32) -> (i32, i32, i32) {
    %c0_i32 = arith.constant 0 : i32
    %c0_i32_0 = arith.constant 0 : i32
    %c0_i32_1 = arith.constant 0 : i32
    return %arg0, %c0_i32, %c0_i32_0 : i32, i32, i32
  }
  func.func @transform_5(%arg0: i32) -> (i32, i32, i32) {
    %c0_i32 = arith.constant 0 : i32
    %0 = arith.subi %c0_i32, %arg0 : i32
    %c0_i32_0 = arith.constant 0 : i32
    %c0_i32_1 = arith.constant 0 : i32
    %c0_i32_2 = arith.constant 0 : i32
    return %0, %c0_i32_0, %c0_i32_1 : i32, i32, i32
  }
}

</mosaic_0001>

<llo_original>
// kernel: lstm_corrector_forward.5
$region0: #{lstm_corrector_forward.5}
  #allocation0 [shape = 'u32[]', space=smem, size = 0x4, offset = 0x4, fixed_abs, tag = 'smem constant byte address 0x4 - core index']
  #allocation1 [shape = 'u32[144,128]{1,0:T(1,128)}', space=vmem, size = 0x12000, scoped, tag = 'internal scratch']
  %s0 = inlined_call_operand.vmem [shape: f32[16,32], index: 0, kind: input, shape index: {}]
  %s1 = inlined_call_operand.vmem [shape: f32[16,32], index: 1, kind: input, shape index: {}]
  %s2 = inlined_call_operand.vmem [shape: f32[1,32], index: 2, kind: input, shape index: {}, may-alias: {2,3}]
  %s3 = inlined_call_operand.vmem [shape: f32[1,32], index: 3, kind: input, shape index: {}, may-alias: {2,3}]
  %s4 = inlined_call_operand.vmem [shape: f32[1,32], index: 4, kind: input, shape index: {}, may-alias: {4,5}]
  %s5 = inlined_call_operand.vmem [shape: f32[1,32], index: 5, kind: input, shape index: {}, may-alias: {4,5}]
  %s6 = inlined_call_operand.vmem [shape: f32[32,64], index: 6, kind: input, shape index: {}]
  %s7 = inlined_call_operand.vmem [shape: f32[32,64], index: 7, kind: input, shape index: {}]
  %s8 = inlined_call_operand.vmem [shape: f32[1,64], index: 8, kind: input, shape index: {}]
  %s9 = inlined_call_operand.hbm [shape: f32[16,64], index: 9, kind: output, shape index: {}]
  %s10 = sld [smem:[#allocation0]]
  $region46: #{lstm_corrector_forward.5} parent=0
    _
  %s12 = ssub.s32 1, %s10
  %s13 = scalar_select 0, %s12, %s10
  $region1: #{lstm_corrector_forward.5} parent=0
    #allocation2 [shape = 'u8[8192]{0}', space=vmem, size = 0x2000, scoped, tag = 'output window, operand 0, single buffered']
    #allocation3 [shape = 's32[1]{0}', space=sflag, size = 0x4, scoped, tag = 'scoped memory for lstm_corrector_forward.5']
    %14 = vsyncpa [#allocation3], 0
    // Predicated region
    $region2: #{lstm_corrector_forward.5} parent=1 // pred_check
      _
    $region3: #{lstm_corrector_forward.5} parent=1 // pred_check_branch
      %16 = sbr.rel (0) target = $region5
    $region4: #{lstm_corrector_forward.5} parent=1 // pred_region
      _
    $region5: #{lstm_corrector_forward.5} parent=1 // pred_fallthru
      _
    // Predicated region
    $region6: #{lstm_corrector_forward.5} parent=1 // pred_check
      _
    $region7: #{lstm_corrector_forward.5} parent=1 // pred_check_branch
      %18 = sbr.rel (0) target = $region9
    $region8: #{lstm_corrector_forward.5} parent=1 // pred_region
      _
    $region9: #{lstm_corrector_forward.5} parent=1 // pred_fallthru
      _
    // Predicated region
    $region10: #{lstm_corrector_forward.5} parent=1 // pred_check
      _
    $region11: #{lstm_corrector_forward.5} parent=1 // pred_check_branch
      %20 = sbr.rel (0) target = $region13
    $region12: #{lstm_corrector_forward.5} parent=1 // pred_region
      _
    $region13: #{lstm_corrector_forward.5} parent=1 // pred_fallthru
      _
    // Predicated region
    $region14: #{lstm_corrector_forward.5} parent=1 // pred_check
      _
    $region15: #{lstm_corrector_forward.5} parent=1 // pred_check_branch
      %22 = sbr.rel (0) target = $region17
    $region16: #{lstm_corrector_forward.5} parent=1 // pred_region
      _
    $region17: #{lstm_corrector_forward.5} parent=1 // pred_fallthru
      _
    // Predicated region
    $region18: #{lstm_corrector_forward.5} parent=1 // pred_check
      _
    $region19: #{lstm_corrector_forward.5} parent=1 // pred_check_branch
      %24 = sbr.rel (0) target = $region21
    $region20: #{lstm_corrector_forward.5} parent=1 // pred_region
      _
    $region21: #{lstm_corrector_forward.5} parent=1 // pred_fallthru
      _
    // Predicated region
    $region22: #{lstm_corrector_forward.5} parent=1 // pred_check
      _
    $region23: #{lstm_corrector_forward.5} parent=1 // pred_check_branch
      %26 = sbr.rel (0) target = $region25
    $region24: #{lstm_corrector_forward.5} parent=1 // pred_region
      _
    $region25: #{lstm_corrector_forward.5} parent=1 // pred_fallthru
      _
    // Predicated region
    $region26: #{lstm_corrector_forward.5} parent=1 // pred_check
      _
    $region27: #{lstm_corrector_forward.5} parent=1 // pred_check_branch
      %28 = sbr.rel (0) target = $region29
    $region28: #{lstm_corrector_forward.5} parent=1 // pred_region
      _
    $region29: #{lstm_corrector_forward.5} parent=1 // pred_fallthru
      _
    // Predicated region
    $region30: #{lstm_corrector_forward.5} parent=1 // pred_check
      _
    $region31: #{lstm_corrector_forward.5} parent=1 // pred_check_branch
      %30 = sbr.rel (0) target = $region33
    $region32: #{lstm_corrector_forward.5} parent=1 // pred_region
      _
    $region33: #{lstm_corrector_forward.5} parent=1 // pred_fallthru
      _
    // Predicated region
    $region34: #{lstm_corrector_forward.5} parent=1 // pred_check
      _
    $region35: #{lstm_corrector_forward.5} parent=1 // pred_check_branch
      %32 = sbr.rel (0) target = $region37
    $region36: #{lstm_corrector_forward.5} parent=1 // pred_region
      _
    $region37: #{lstm_corrector_forward.5} parent=1 // pred_fallthru
      _
    %v33 = vld [vmem:[%s0] sm:$0xff]
    %v34 = vld [vmem:[%s0 + $0x8] sm:$0xff]
    %v35 = vld [vmem:[%s1] sm:$0xff]
    %v36 = vld [vmem:[%s1 + $0x8] sm:$0xff]
    %vm37 = vcmask 261120
    %v38 = vsel %vm37, %v33, 0.0
    %39 = vadd.xlane.f32.xlu0 %v38
    %v40 = vpop.xlane.xlu0 %39
    %v41 = vsel %vm37, %v34, 0.0
    %42 = vadd.xlane.f32.xlu0 %v41
    %v43 = vpop.xlane.xlu0 %42
    %v44 = vsel %vm37, %v35, 0.0
    %45 = vadd.xlane.f32.xlu0 %v44
    %v46 = vpop.xlane.xlu0 %45
    %v47 = vsel %vm37, %v36, 0.0
    %48 = vadd.xlane.f32.xlu0 %v47
    %v49 = vpop.xlane.xlu0 %48
    %v50 = vadd.f32 %v40, %v46
    %v51 = vadd.f32 %v43, %v49
    %v52 = vmul.f32 %v33, %v33
    %v53 = vmul.f32 %v34, %v34
    %v54 = vsel %vm37, %v52, 0.0
    %55 = vadd.xlane.f32.xlu0 %v54
    %v56 = vpop.xlane.xlu0 %55
    %v57 = vsel %vm37, %v53, 0.0
    %58 = vadd.xlane.f32.xlu0 %v57
    %v59 = vpop.xlane.xlu0 %58
    %v60 = vmul.f32 %v35, %v35
    %v61 = vmul.f32 %v36, %v36
    %v62 = vsel %vm37, %v60, 0.0
    %63 = vadd.xlane.f32.xlu0 %v62
    %v64 = vpop.xlane.xlu0 %63
    %v65 = vsel %vm37, %v61, 0.0
    %66 = vadd.xlane.f32.xlu0 %v65
    %v67 = vpop.xlane.xlu0 %66
    %v68 = vadd.f32 %v56, %v64
    %v69 = vadd.f32 %v59, %v67
    %v70 = vrcp.pop 64.0
    %v71 = vmul.f32 %v50, %v70
    %v72 = vmul.f32 %v51, %v70
    %v73 = vmul.f32 %v68, %v70
    %v74 = vmul.f32 %v69, %v70
    %v75 = vmul.f32 %v71, %v71
    %v76 = vmul.f32 %v72, %v72
    %v77 = vsub.f32 %v73, %v75
    %v78 = vsub.f32 %v74, %v76
    %v79 = vadd.f32 %v77, 1e-05
    %v80 = vadd.f32 %v78, 1e-05
    %v81 = vrsqrt.pop %v79
    %v82 = vrsqrt.pop %v80
    %v83 = vsub.f32 %v33, %v71
    %v84 = vsub.f32 %v34, %v72
    %v85 = vmul.f32 %v83, %v81
    %v86 = vmul.f32 %v84, %v82
    %v87 = vld [vmem:[%s2] sm:$0x1]
    %v89 = vlaneseq
    %v90 = vshrl.u32 %v89, 7
    %v91 = vsub.s32 0, %v90
    %v92 = vrot.slane %v87, %v91
    %v94 = vmul.f32 %v85, %v92
    %v95 = vmul.f32 %v86, %v92
    %v96 = vld [vmem:[%s4] sm:$0x1]
    %v98 = vlaneseq
    %v99 = vshrl.u32 %v98, 7
    %v100 = vsub.s32 0, %v99
    %v101 = vrot.slane %v96, %v100
    %v103 = vadd.f32 %v94, %v101
    %v104 = vadd.f32 %v95, %v101
    %v105 = vsub.f32 %v35, %v71
    %v106 = vsub.f32 %v36, %v72
    %v107 = vmul.f32 %v105, %v81
    %v108 = vmul.f32 %v106, %v82
    %v109 = vld [vmem:[%s3] sm:$0x1]
    %v111 = vlaneseq
    %v112 = vshrl.u32 %v111, 7
    %v113 = vsub.s32 0, %v112
    %v114 = vrot.slane %v109, %v113
    %v116 = vmul.f32 %v107, %v114
    %v117 = vmul.f32 %v108, %v114
    %v118 = vld [vmem:[%s5] sm:$0x1]
    %v120 = vlaneseq
    %v121 = vshrl.u32 %v120, 7
    %v122 = vsub.s32 0, %v121
    %v123 = vrot.slane %v118, %v122
    %v125 = vadd.f32 %v116, %v123
    %v126 = vadd.f32 %v117, %v123
    %v127 = vld [vmem:[%s6] sm:$0xff]
    %v128 = vld [vmem:[%s6 + $0x8] sm:$0xff]
    %v129 = vld [vmem:[%s6 + $0x10] sm:$0xff]
    %v130 = vld [vmem:[%s6 + $0x18] sm:$0xff]
    %v131 = vld [vmem:[%s7] sm:$0xff]
    %v132 = vld [vmem:[%s7 + $0x8] sm:$0xff]
    %v133 = vld [vmem:[%s7 + $0x10] sm:$0xff]
    %v134 = vld [vmem:[%s7 + $0x18] sm:$0xff]
    %v136 = vsel %vm37, %v125, 0
    %v139 = vsel %vm37, %v126, 0
    %141 = vmatprep.subr.mxu0 0.0
    %142 = vmatpush1.msra.mxu0 %v131
    %143 = vmatprep.subr.mxu0 0.0
    %144 = vmatpush1.msra.mxu0 %v132
    %145 = vmatprep.subr.mxu0 0.0
    %146 = vmatpush1.msra.mxu0 %v133
    %147 = vmatprep.subr.mxu0 0.0
    %148 = vmatpush1.msra.mxu0 %v134
    %149 = vmatprep.subr.mxu0 0.0
    %150 = vmatpush1.msra.mxu0 0.0
    %151 = vmatprep.subr.mxu0 0.0
    %152 = vmatpush1.msra.mxu0 0.0
    %153 = vmatprep.subr.mxu0 0.0
    %154 = vmatpush1.msra.mxu0 0.0
    %155 = vmatprep.subr.mxu0 0.0
    %156 = vmatpush1.msra.mxu0 0.0
    %157 = vmatprep.subr.mxu0 0.0
    %158 = vmatpush1.msra.mxu0 0.0
    %159 = vmatprep.subr.mxu0 0.0
    %160 = vmatpush1.msra.mxu0 0.0
    %161 = vmatprep.subr.mxu0 0.0
    %162 = vmatpush1.msra.mxu0 0.0
    %163 = vmatprep.subr.mxu0 0.0
    %164 = vmatpush1.msra.mxu0 0.0
    %165 = vmatprep.subr.mxu0 0.0
    %166 = vmatpush1.msra.mxu0 0.0
    %167 = vmatprep.subr.mxu0 0.0
    %168 = vmatpush1.msra.mxu0 0.0
    %169 = vmatprep.subr.mxu0 0.0
    %170 = vmatpush1.msra.mxu0 0.0
    %171 = vmatprep.subr.mxu0 0.0
    %172 = vmatpush1.msra.mxu0 0.0
    %173 = vmatprep.subr.mxu0 0.0
    %174 = vmatpush1.msra.mxu0 0.0
    %175 = vmatprep.subr.mxu0 0.0
    %176 = vmatpush1.msra.mxu0 0.0
    %177 = vmatprep.subr.mxu0 0.0
    %178 = vmatpush1.msra.mxu0 0.0
    %179 = vmatprep.subr.mxu0 0.0
    %180 = vmatpush1.msra.mxu0 0.0
    %181 = vmatprep.subr.mxu0 0.0
    %182 = vmatpush1.msra.mxu0 0.0
    %183 = vmatprep.subr.mxu0 0.0
    %184 = vmatpush1.msra.mxu0 0.0
    %185 = vmatprep.subr.mxu0 0.0
    %186 = vmatpush1.msra.mxu0 0.0
    %187 = vmatprep.subr.mxu0 0.0
    %188 = vmatpush1.msra.mxu0 0.0
    %189 = vmatprep.subr.mxu0 0.0
    %190 = vmatpush1.msra.mxu0 0.0
    %191 = vmatprep.subr.mxu0 0.0
    %192 = vmatpush1.msra.mxu0 0.0
    %193 = vmatprep.subr.mxu0 0.0
    %194 = vmatpush1.msra.mxu0 0.0
    %195 = vmatprep.subr.mxu0 0.0
    %196 = vmatpush1.msra.mxu0 0.0
    %197 = vmatprep.subr.mxu0 0.0
    %198 = vmatpush1.msra.mxu0 0.0
    %199 = vmatprep.subr.mxu0 0.0
    %200 = vmatpush1.msra.mxu0 0.0
    %201 = vmatprep.subr.mxu0 0.0
    %202 = vmatpush1.msra.mxu0 0.0
    %203 = vmatprep.subr.mxu0 0.0
    %204 = vmatpush1.msra.mxu0 0.0
    %205 = vmatprep.mubr.f32.mxu0 0.0
    %206 = vmatmul.mubr.f32.gmra.mrb[0].mxu0 %v136
    %v207 = vpop.f32.mrb[0].mxu0
    %v208 = vadd.f32 0.0, %v207
    %v209 = vpop.f32.mrb[0].mxu0
    %210 = vmatprep.mubr.f32.mxu0 0.0
    %211 = vmatmul.mubr.f32.gmra.mrb[0].mxu0 %v139
    %v212 = vpop.f32.mrb[0].mxu0
    %v213 = vadd.f32 0.0, %v212
    %v214 = vpop.f32.mrb[0].mxu0
    %215 = vdwg.mxu0
    %v217 = vsel %vm37, %v103, 0
    %v220 = vsel %vm37, %v104, 0
    %222 = vmatprep.subr.mxu0 0.0
    %223 = vmatpush1.msra.mxu0 %v127
    %224 = vmatprep.subr.mxu0 0.0
    %225 = vmatpush1.msra.mxu0 %v128
    %226 = vmatprep.subr.mxu0 0.0
    %227 = vmatpush1.msra.mxu0 %v129
    %228 = vmatprep.subr.mxu0 0.0
    %229 = vmatpush1.msra.mxu0 %v130
    %230 = vmatprep.subr.mxu0 0.0
    %231 = vmatpush1.msra.mxu0 0.0
    %232 = vmatprep.subr.mxu0 0.0
    %233 = vmatpush1.msra.mxu0 0.0
    %234 = vmatprep.subr.mxu0 0.0
    %235 = vmatpush1.msra.mxu0 0.0
    %236 = vmatprep.subr.mxu0 0.0
    %237 = vmatpush1.msra.mxu0 0.0
    %238 = vmatprep.subr.mxu0 0.0
    %239 = vmatpush1.msra.mxu0 0.0
    %240 = vmatprep.subr.mxu0 0.0
    %241 = vmatpush1.msra.mxu0 0.0
    %242 = vmatprep.subr.mxu0 0.0
    %243 = vmatpush1.msra.mxu0 0.0
    %244 = vmatprep.subr.mxu0 0.0
    %245 = vmatpush1.msra.mxu0 0.0
    %246 = vmatprep.subr.mxu0 0.0
    %247 = vmatpush1.msra.mxu0 0.0
    %248 = vmatprep.subr.mxu0 0.0
    %249 = vmatpush1.msra.mxu0 0.0
    %250 = vmatprep.subr.mxu0 0.0
    %251 = vmatpush1.msra.mxu0 0.0
    %252 = vmatprep.subr.mxu0 0.0
    %253 = vmatpush1.msra.mxu0 0.0
    %254 = vmatprep.subr.mxu0 0.0
    %255 = vmatpush1.msra.mxu0 0.0
    %256 = vmatprep.subr.mxu0 0.0
    %257 = vmatpush1.msra.mxu0 0.0
    %258 = vmatprep.subr.mxu0 0.0
    %259 = vmatpush1.msra.mxu0 0.0
    %260 = vmatprep.subr.mxu0 0.0
    %261 = vmatpush1.msra.mxu0 0.0
    %262 = vmatprep.subr.mxu0 0.0
    %263 = vmatpush1.msra.mxu0 0.0
    %264 = vmatprep.subr.mxu0 0.0
    %265 = vmatpush1.msra.mxu0 0.0
    %266 = vmatprep.subr.mxu0 0.0
    %267 = vmatpush1.msra.mxu0 0.0
    %268 = vmatprep.subr.mxu0 0.0
    %269 = vmatpush1.msra.mxu0 0.0
    %270 = vmatprep.subr.mxu0 0.0
    %271 = vmatpush1.msra.mxu0 0.0
    %272 = vmatprep.subr.mxu0 0.0
    %273 = vmatpush1.msra.mxu0 0.0
    %274 = vmatprep.subr.mxu0 0.0
    %275 = vmatpush1.msra.mxu0 0.0
    %276 = vmatprep.subr.mxu0 0.0
    %277 = vmatpush1.msra.mxu0 0.0
    %278 = vmatprep.subr.mxu0 0.0
    %279 = vmatpush1.msra.mxu0 0.0
    %280 = vmatprep.subr.mxu0 0.0
    %281 = vmatpush1.msra.mxu0 0.0
    %282 = vmatprep.subr.mxu0 0.0
    %283 = vmatpush1.msra.mxu0 0.0
    %284 = vmatprep.subr.mxu0 0.0
    %285 = vmatpush1.msra.mxu0 0.0
    %286 = vmatprep.mubr.f32.mxu0 0.0
    %287 = vmatmul.mubr.f32.gmra.mrb[0].mxu0 %v217
    %v288 = vpop.f32.mrb[0].mxu0
    %v289 = vadd.f32 %v208, %v288
    %v290 = vpop.f32.mrb[0].mxu0
    %291 = vmatprep.mubr.f32.mxu0 0.0
    %292 = vmatmul.mubr.f32.gmra.mrb[0].mxu0 %v220
    %v293 = vpop.f32.mrb[0].mxu0
    %v294 = vadd.f32 %v213, %v293
    %v295 = vpop.f32.mrb[0].mxu0
    %296 = vdwg.mxu0
    %v297 = vld [vmem:[%s8] sm:$0x1]
    %v299 = vlaneseq
    %v300 = vshrl.u32 %v299, 7
    %v301 = vsub.s32 0, %v300
    %v302 = vrot.slane %v297, %v301
    %v304 = vadd.f32 %v289, %v302
    %v305 = vadd.f32 %v294, %v302
    %vm306 = vcmask 523264
    %307 = vst.msk [vmem:[#allocation2] sm:$0xff] %vm306, %v304
    %308 = vst.msk [vmem:[#allocation2 + $0x8] sm:$0xff] %vm306, %v305
    // Predicated region
    $region38: #{lstm_corrector_forward.5} parent=1 // pred_check
      _
    $region39: #{lstm_corrector_forward.5} parent=1 // pred_check_branch
      %310 = sbr.rel (0) target = $region41
    $region40: #{lstm_corrector_forward.5} parent=1 // pred_region
      %s312 = ssub.s32 256, 256
      %313 = vsyncadd [#allocation3], %s312
      %s314 = sshll.u32 [#allocation2], 4
      %s315 = int_to_ptr.vmem [resolvable:$true] %s314
      %320 = dma.vmem_to_hbm [thread:$0]  %s315, 256, %s9, [#allocation3], 128, 128, 8
    $region41: #{lstm_corrector_forward.5} parent=1 // pred_fallthru
      _
    // Predicated region
    $region42: #{lstm_corrector_forward.5} parent=1 // pred_check
      _
    $region43: #{lstm_corrector_forward.5} parent=1 // pred_check_branch
      %322 = sbr.rel (0) target = $region45
    $region44: #{lstm_corrector_forward.5} parent=1 // pred_region
      %323 = dma.done [#allocation3], 256
    $region45: #{lstm_corrector_forward.5} parent=1 // pred_fallthru
      _
    %324 = vsyncpa [#allocation3], 1

// kernel: lstm_corrector_forward.3
$region0: #{lstm_corrector_forward.3}
  #allocation0 [shape = 'u32[]', space=smem, size = 0x4, offset = 0x4, fixed_abs, tag = 'smem constant byte address 0x4 - core index']
  #allocation1 [shape = 'u32[144,128]{1,0:T(1,128)}', space=vmem, size = 0x12000, scoped, tag = 'internal scratch']
  #allocation2 [shape = 'f32[2,32]{1,0:T(2,128)}', space=vmem, size = 0x400, scoped, tag = 'scratch operand']
  #allocation3 [shape = 'f32[2,32]{1,0:T(2,128)}', space=vmem, size = 0x400, scoped, tag = 'scratch operand']
  #allocation4 [shape = 'f32[2,32]{1,0:T(2,128)}', space=vmem, size = 0x400, scoped, tag = 'scratch operand']
  #allocation5 [shape = 'f32[2,32]{1,0:T(2,128)}', space=vmem, size = 0x400, scoped, tag = 'scratch operand']
  %s0 = inlined_call_operand.vmem [shape: f32[8,2,128], index: 0, kind: input, shape index: {}]
  %s1 = inlined_call_operand.vmem [shape: f32[8,2,128], index: 1, kind: input, shape index: {}]
  %s2 = inlined_call_operand.vmem [shape: f32[32,128], index: 2, kind: input, shape index: {}]
  %s3 = inlined_call_operand.vmem [shape: f32[32,128], index: 3, kind: input, shape index: {}]
  %s4 = inlined_call_operand.vmem [shape: f32[8,2,32], index: 4, kind: output, shape index: {0}]
  %s5 = inlined_call_operand.vmem [shape: f32[8,2,32], index: 5, kind: output, shape index: {1}]
  %6 = xla_tuple %s4, %s5
  %s7 = sld [smem:[#allocation0]]
  $region38: #{lstm_corrector_forward.3} parent=0
    _
  %s9 = ssub.s32 1, %s7
  %s10 = scalar_select 0, %s9, %s7
  // Predicated region
  $region2: #{lstm_corrector_forward.3} parent=0 // pred_check
    _
  $region3: #{lstm_corrector_forward.3} parent=0 // pred_check_branch
    %12 = sbr.rel (0) target = $region5
  $region4: #{lstm_corrector_forward.3} parent=0 // pred_region
    _
  $region5: #{lstm_corrector_forward.3} parent=0 // pred_fallthru
    _
  // Predicated region
  $region6: #{lstm_corrector_forward.3} parent=0 // pred_check
    _
  $region7: #{lstm_corrector_forward.3} parent=0 // pred_check_branch
    %14 = sbr.rel (0) target = $region9
  $region8: #{lstm_corrector_forward.3} parent=0 // pred_region
    %s15 = ssub.s32 0, 0
    %s16 = smul.u32 8, %s15
    %p17 = scmp.lt.s32.totalorder %s16, 7
    %s18 = scalar_select %p17, %s16, 7
    %s19 = smul.addr %s18, 2
    %s20 = scalar_lea.vmem %s1, %s19
    %s21 = ssub.s32 0, 0
    %s22 = smul.u32 8, %s21
  $region9: #{lstm_corrector_forward.3} parent=0 // pred_fallthru
    _
  // Predicated region
  $region10: #{lstm_corrector_forward.3} parent=0 // pred_check
    _
  $region11: #{lstm_corrector_forward.3} parent=0 // pred_check_branch
    %24 = sbr.rel (0) target = $region13
  $region12: #{lstm_corrector_forward.3} parent=0 // pred_region
    _
  $region13: #{lstm_corrector_forward.3} parent=0 // pred_fallthru
    _
  // Predicated region
  $region14: #{lstm_corrector_forward.3} parent=0 // pred_check
    _
  $region15: #{lstm_corrector_forward.3} parent=0 // pred_check_branch
    %26 = sbr.rel (0) target = $region17
  $region16: #{lstm_corrector_forward.3} parent=0 // pred_region
    _
  $region17: #{lstm_corrector_forward.3} parent=0 // pred_fallthru
    _
  %s27 = ssub.s32 0, 0
  %s28 = smul.u32 8, %s27
  %p29 = scmp.lt.s32.totalorder %s28, 7
  %s30 = scalar_select %p29, %s28, 7
  %s31 = smul.addr %s30, 2
  %s32 = scalar_lea.vmem %s1, %s31
  %s33 = ssub.s32 0, 0
  %s34 = smul.u32 8, %s33
  %p35 = scmp.lt.s32.totalorder %s34, 7
  %s36 = scalar_select %p35, %s34, 7
  %s37 = smul.addr %s36, 2
  %s38 = scalar_lea.vmem %s5, %s37
  %s39 = ssub.s32 0, 0
  %s40 = smul.u32 8, %s39
  %p41 = scmp.lt.s32.totalorder %s40, 7
  %s42 = scalar_select %p41, %s40, 7
  %s43 = smul.addr %s42, 2
  %s44 = scalar_lea.vmem %s1, %s43
  %s45 = ssub.s32 0, 0
  %s46 = smul.u32 8, %s45
  %s47 = ssub.s32 0, 0
  %s48 = smul.u32 8, %s47
  %p49 = scmp.lt.s32.totalorder %s48, 7
  %s50 = scalar_select %p49, %s48, 7
  %s51 = smul.addr %s50, 2
  %s52 = scalar_lea.vmem %s5, %s51
  %s53 = ssub.s32 0, 0
  %s54 = smul.u32 8, %s53
  %p55 = scmp.eq.s32.totalorder 0, 0
  // Predicated region
  $region18: #{lstm_corrector_forward.3} parent=0 // pred_check
    %p56 = pneg %p55
  $region19: #{lstm_corrector_forward.3} parent=0 // pred_check_branch
    %58 = sbr.rel (%p56) target = $region21
  $region20: #{lstm_corrector_forward.3} parent=0 // pred_region
    %vm59 = vcmask 254976
    %60 = vst.msk [vmem:[#allocation2] sm:$0x3] %vm59, 0.0
    %61 = vst.msk [vmem:[#allocation3] sm:$0x3] %vm59, 0.0
    %62 = vst.msk [vmem:[#allocation4] sm:$0x3] %vm59, 0.0
    %63 = vst.msk [vmem:[#allocation5] sm:$0x3] %vm59, 0.0
  $region21: #{lstm_corrector_forward.3} parent=0 // pred_fallthru
    _
  %v64 = vld [vmem:[%s2] sm:$0xff]
  %v65 = vld [vmem:[%s2 + $0x8] sm:$0xff]
  %v66 = vld [vmem:[%s2 + $0x10] sm:$0xff]
  %v67 = vld [vmem:[%s2 + $0x18] sm:$0xff]
  %v68 = vld [vmem:[%s3] sm:$0xff]
  %v69 = vld [vmem:[%s3 + $0x8] sm:$0xff]
  %v70 = vld [vmem:[%s3 + $0x10] sm:$0xff]
  %v71 = vld [vmem:[%s3 + $0x18] sm:$0xff]
  %v72 = vld [vmem:[%s0] sm:$0x3]
  %v73 = vld [vmem:[#allocation2] sm:$0x3]
  %v74 = vld [vmem:[#allocation3] sm:$0x3]
  %vm75 = vcmask 261120
  %v77 = vsel %vm75, %v73, 0
  %79 = vmatprep.subr.mxu0 0.0
  %80 = vmatpush1.msra.mxu0 %v64
  %81 = vmatprep.subr.mxu0 0.0
  %82 = vmatpush1.msra.mxu0 %v65
  %83 = vmatprep.subr.mxu0 0.0
  %84 = vmatpush1.msra.mxu0 %v66
  %85 = vmatprep.subr.mxu0 0.0
  %86 = vmatpush1.msra.mxu0 %v67
  %87 = vmatprep.subr.mxu0 0.0
  %88 = vmatpush1.msra.mxu0 0.0
  %89 = vmatprep.subr.mxu0 0.0
  %90 = vmatpush1.msra.mxu0 0.0
  %91 = vmatprep.subr.mxu0 0.0
  %92 = vmatpush1.msra.mxu0 0.0
  %93 = vmatprep.subr.mxu0 0.0
  %94 = vmatpush1.msra.mxu0 0.0
  %95 = vmatprep.subr.mxu0 0.0
  %96 = vmatpush1.msra.mxu0 0.0
  %97 = vmatprep.subr.mxu0 0.0
  %98 = vmatpush1.msra.mxu0 0.0
  %99 = vmatprep.subr.mxu0 0.0
  %100 = vmatpush1.msra.mxu0 0.0
  %101 = vmatprep.subr.mxu0 0.0
  %102 = vmatpush1.msra.mxu0 0.0
  %103 = vmatprep.subr.mxu0 0.0
  %104 = vmatpush1.msra.mxu0 0.0
  %105 = vmatprep.subr.mxu0 0.0
  %106 = vmatpush1.msra.mxu0 0.0
  %107 = vmatprep.subr.mxu0 0.0
  %108 = vmatpush1.msra.mxu0 0.0
  %109 = vmatprep.subr.mxu0 0.0
  %110 = vmatpush1.msra.mxu0 0.0
  %111 = vmatprep.subr.mxu0 0.0
  %112 = vmatpush1.msra.mxu0 0.0
  %113 = vmatprep.subr.mxu0 0.0
  %114 = vmatpush1.msra.mxu0 0.0
  %115 = vmatprep.subr.mxu0 0.0
  %116 = vmatpush1.msra.mxu0 0.0
  %117 = vmatprep.subr.mxu0 0.0
  %118 = vmatpush1.msra.mxu0 0.0
  %119 = vmatprep.subr.mxu0 0.0
  %120 = vmatpush1.msra.mxu0 0.0
  %121 = vmatprep.subr.mxu0 0.0
  %122 = vmatpush1.msra.mxu0 0.0
  %123 = vmatprep.subr.mxu0 0.0
  %124 = vmatpush1.msra.mxu0 0.0
  %125 = vmatprep.subr.mxu0 0.0
  %126 = vmatpush1.msra.mxu0 0.0
  %127 = vmatprep.subr.mxu0 0.0
  %128 = vmatpush1.msra.mxu0 0.0
  %129 = vmatprep.subr.mxu0 0.0
  %130 = vmatpush1.msra.mxu0 0.0
  %131 = vmatprep.subr.mxu0 0.0
  %132 = vmatpush1.msra.mxu0 0.0
  %133 = vmatprep.subr.mxu0 0.0
  %134 = vmatpush1.msra.mxu0 0.0
  %135 = vmatprep.subr.mxu0 0.0
  %136 = vmatpush1.msra.mxu0 0.0
  %137 = vmatprep.subr.mxu0 0.0
  %138 = vmatpush1.msra.mxu0 0.0
  %139 = vmatprep.subr.mxu0 0.0
  %140 = vmatpush1.msra.mxu0 0.0
  %141 = vmatprep.subr.mxu0 0.0
  %142 = vmatpush1.msra.mxu0 0.0
  %143 = vmatprep.mubr.f32.mxu0 0.0
  %144 = vmatmul.mubr.f32.gmra.mrb[0].mxu0 %v77
  %v145 = vpop.f32.mrb[0].mxu0
  %v146 = vadd.f32 0.0, %v145
  %v147 = vpop.f32.mrb[0].mxu0
  %148 = vdwg.mxu0
  %v149 = vadd.f32 %v72, %v146
  %v150 = vxor.u32 %v149, 2147483648
  %v151 = vmul.f32 %v150, 1.442695
  %v152 = vpow.pop %v151
  %v153 = vadd.f32 %v152, 1.0
  %v154 = vrcp.pop %v153
  %v155 = vmul.f32 1.0, %v154
  %v156 = vtanh.pop %v149
  %158 = vrot.lane.b32.xlu0 %v74, 32
  %v159 = vpop.permute.xlu0 %158
  %v161 = vmul.f32 %v155, %v159
  %163 = vrot.lane.b32.xlu0 %v156, 64
  %v164 = vpop.permute.xlu0 %163
  %v166 = vmul.f32 %v155, %v164
  %168 = vrot.lane.b32.xlu0 %v166, 32
  %v169 = vpop.permute.xlu0 %168
  %v171 = vadd.f32 %v161, %v169
  %v172 = vtanh.pop %v171
  %174 = vrot.lane.b32.xlu0 %v172, 64
  %v175 = vpop.permute.xlu0 %174
  %v177 = vmul.f32 %v155, %v175
  %179 = vrot.lane.b32.xlu0 %v177, 32
  %v180 = vpop.permute.xlu0 %179
  %vm182 = vcmask 254976
  %183 = vst.msk [vmem:[#allocation2] sm:$0x3] %vm182, %v180
  %185 = vrot.lane.b32.xlu0 %v171, 96
  %v186 = vpop.permute.xlu0 %185
  %188 = vst.msk [vmem:[#allocation3] sm:$0x3] %vm182, %v186
  %189 = vst.msk [vmem:[%s4] sm:$0x3] %vm182, %v180
  %s190 = scalar_lea.vmem %s44, 14
  %v191 = vld [vmem:[%s190] sm:$0x3]
  %v192 = vld [vmem:[#allocation4] sm:$0x3]
  %v193 = vld [vmem:[#allocation5] sm:$0x3]
  %v195 = vsel %vm75, %v192, 0
  %197 = vmatprep.subr.mxu0 0.0
  %198 = vmatpush1.msra.mxu0 %v68
  %199 = vmatprep.subr.mxu0 0.0
  %200 = vmatpush1.msra.mxu0 %v69
  %201 = vmatprep.subr.mxu0 0.0
  %202 = vmatpush1.msra.mxu0 %v70
  %203 = vmatprep.subr.mxu0 0.0
  %204 = vmatpush1.msra.mxu0 %v71
  %205 = vmatprep.subr.mxu0 0.0
  %206 = vmatpush1.msra.mxu0 0.0
  %207 = vmatprep.subr.mxu0 0.0
  %208 = vmatpush1.msra.mxu0 0.0
  %209 = vmatprep.subr.mxu0 0.0
  %210 = vmatpush1.msra.mxu0 0.0
  %211 = vmatprep.subr.mxu0 0.0
  %212 = vmatpush1.msra.mxu0 0.0
  %213 = vmatprep.subr.mxu0 0.0
  %214 = vmatpush1.msra.mxu0 0.0
  %215 = vmatprep.subr.mxu0 0.0
  %216 = vmatpush1.msra.mxu0 0.0
  %217 = vmatprep.subr.mxu0 0.0
  %218 = vmatpush1.msra.mxu0 0.0
  %219 = vmatprep.subr.mxu0 0.0
  %220 = vmatpush1.msra.mxu0 0.0
  %221 = vmatprep.subr.mxu0 0.0
  %222 = vmatpush1.msra.mxu0 0.0
  %223 = vmatprep.subr.mxu0 0.0
  %224 = vmatpush1.msra.mxu0 0.0
  %225 = vmatprep.subr.mxu0 0.0
  %226 = vmatpush1.msra.mxu0 0.0
  %227 = vmatprep.subr.mxu0 0.0
  %228 = vmatpush1.msra.mxu0 0.0
  %229 = vmatprep.subr.mxu0 0.0
  %230 = vmatpush1.msra.mxu0 0.0
  %231 = vmatprep.subr.mxu0 0.0
  %232 = vmatpush1.msra.mxu0 0.0
  %233 = vmatprep.subr.mxu0 0.0
  %234 = vmatpush1.msra.mxu0 0.0
  %235 = vmatprep.subr.mxu0 0.0
  %236 = vmatpush1.msra.mxu0 0.0
  %237 = vmatprep.subr.mxu0 0.0
  %238 = vmatpush1.msra.mxu0 0.0
  %239 = vmatprep.subr.mxu0 0.0
  %240 = vmatpush1.msra.mxu0 0.0
  %241 = vmatprep.subr.mxu0 0.0
  %242 = vmatpush1.msra.mxu0 0.0
  %243 = vmatprep.subr.mxu0 0.0
  %244 = vmatpush1.msra.mxu0 0.0
  %245 = vmatprep.subr.mxu0 0.0
  %246 = vmatpush1.msra.mxu0 0.0
  %247 = vmatprep.subr.mxu0 0.0
  %248 = vmatpush1.msra.mxu0 0.0
  %249 = vmatprep.subr.mxu0 0.0
  %250 = vmatpush1.msra.mxu0 0.0
  %251 = vmatprep.subr.mxu0 0.0
  %252 = vmatpush1.msra.mxu0 0.0
  %253 = vmatprep.subr.mxu0 0.0
  %254 = vmatpush1.msra.mxu0 0.0
  %255 = vmatprep.subr.mxu0 0.0
  %256 = vmatpush1.msra.mxu0 0.0
  %257 = vmatprep.subr.mxu0 0.0
  %258 = vmatpush1.msra.mxu0 0.0
  %259 = vmatprep.subr.mxu0 0.0
  %260 = vmatpush1.msra.mxu0 0.0
  %261 = vmatprep.mubr.f32.mxu0 0.0
  %262 = vmatmul.mubr.f32.gmra.mrb[0].mxu0 %v195
  %v263 = vpop.f32.mrb[0].mxu0
  %v264 = vadd.f32 0.0, %v263
  %v265 = vpop.f32.mrb[0].mxu0
  %266 = vdwg.mxu0
  %v267 = vadd.f32 %v191, %v264
  %v268 = vxor.u32 %v267, 2147483648
  %v269 = vmul.f32 %v268, 1.442695
  %v270 = vpow.pop %v269
  %v271 = vadd.f32 %v270, 1.0
  %v272 = vrcp.pop %v271
  %v273 = vmul.f32 1.0, %v272
  %v274 = vtanh.pop %v267
  %276 = vrot.lane.b32.xlu0 %v193, 32
  %v277 = vpop.permute.xlu0 %276
  %v279 = vmul.f32 %v273, %v277
  %281 = vrot.lane.b32.xlu0 %v274, 64
  %v282 = vpop.permute.xlu0 %281
  %v284 = vmul.f32 %v273, %v282
  %286 = vrot.lane.b32.xlu0 %v284, 32
  %v287 = vpop.permute.xlu0 %286
  %v289 = vadd.f32 %v279, %v287
  %v290 = vtanh.pop %v289
  %292 = vrot.lane.b32.xlu0 %v290, 64
  %v293 = vpop.permute.xlu0 %292
  %v295 = vmul.f32 %v273, %v293
  %297 = vrot.lane.b32.xlu0 %v295, 32
  %v298 = vpop.permute.xlu0 %297
  %300 = vst.msk [vmem:[#allocation4] sm:$0x3] %vm182, %v298
  %302 = vrot.lane.b32.xlu0 %v289, 96
  %v303 = vpop.permute.xlu0 %302
  %305 = vst.msk [vmem:[#allocation5] sm:$0x3] %vm182, %v303
  %s306 = scalar_lea.vmem %s52, 14
  %307 = vst.msk [vmem:[%s306] sm:$0x3] %vm182, %v298
  %s308 = scalar_lea.vmem %s0, 2
  %v309 = vld [vmem:[%s308] sm:$0x3]
  %v310 = vld [vmem:[#allocation2] sm:$0x3]
  %v311 = vld [vmem:[#allocation3] sm:$0x3]
  %v313 = vsel %vm75, %v310, 0
  %315 = vmatprep.subr.mxu0 0.0
  %316 = vmatpush1.msra.mxu0 %v64
  %317 = vmatprep.subr.mxu0 0.0
  %318 = vmatpush1.msra.mxu0 %v65
  %319 = vmatprep.subr.mxu0 0.0
  %320 = vmatpush1.msra.mxu0 %v66
  %321 = vmatprep.subr.mxu0 0.0
  %322 = vmatpush1.msra.mxu0 %v67
  %323 = vmatprep.subr.mxu0 0.0
  %324 = vmatpush1.msra.mxu0 0.0
  %325 = vmatprep.subr.mxu0 0.0
  %326 = vmatpush1.msra.mxu0 0.0
  %327 = vmatprep.subr.mxu0 0.0
  %328 = vmatpush1.msra.mxu0 0.0
  %329 = vmatprep.subr.mxu0 0.0
  %330 = vmatpush1.msra.mxu0 0.0
  %331 = vmatprep.subr.mxu0 0.0
  %332 = vmatpush1.msra.mxu0 0.0
  %333 = vmatprep.subr.mxu0 0.0
  %334 = vmatpush1.msra.mxu0 0.0
  %335 = vmatprep.subr.mxu0 0.0
  %336 = vmatpush1.msra.mxu0 0.0
  %337 = vmatprep.subr.mxu0 0.0
  %338 = vmatpush1.msra.mxu0 0.0
  %339 = vmatprep.subr.mxu0 0.0
  %340 = vmatpush1.msra.mxu0 0.0
  %341 = vmatprep.subr.mxu0 0.0
  %342 = vmatpush1.msra.mxu0 0.0
  %343 = vmatprep.subr.mxu0 0.0
  %344 = vmatpush1.msra.mxu0 0.0
  %345 = vmatprep.subr.mxu0 0.0
  %346 = vmatpush1.msra.mxu0 0.0
  %347 = vmatprep.subr.mxu0 0.0
  %348 = vmatpush1.msra.mxu0 0.0
  %349 = vmatprep.subr.mxu0 0.0
  %350 = vmatpush1.msra.mxu0 0.0
  %351 = vmatprep.subr.mxu0 0.0
  %352 = vmatpush1.msra.mxu0 0.0
  %353 = vmatprep.subr.mxu0 0.0
  %354 = vmatpush1.msra.mxu0 0.0
  %355 = vmatprep.subr.mxu0 0.0
  %356 = vmatpush1.msra.mxu0 0.0
  %357 = vmatprep.subr.mxu0 0.0
  %358 = vmatpush1.msra.mxu0 0.0
  %359 = vmatprep.subr.mxu0 0.0
  %360 = vmatpush1.msra.mxu0 0.0
  %361 = vmatprep.subr.mxu0 0.0
  %362 = vmatpush1.msra.mxu0 0.0
  %363 = vmatprep.subr.mxu0 0.0
  %364 = vmatpush1.msra.mxu0 0.0
  %365 = vmatprep.subr.mxu0 0.0
  %366 = vmatpush1.msra.mxu0 0.0
  %367 = vmatprep.subr.mxu0 0.0
  %368 = vmatpush1.msra.mxu0 0.0
  %369 = vmatprep.subr.mxu0 0.0
  %370 = vmatpush1.msra.mxu0 0.0
  %371 = vmatprep.subr.mxu0 0.0
  %372 = vmatpush1.msra.mxu0 0.0
  %373 = vmatprep.subr.mxu0 0.0
  %374 = vmatpush1.msra.mxu0 0.0
  %375 = vmatprep.subr.mxu0 0.0
  %376 = vmatpush1.msra.mxu0 0.0
  %377 = vmatprep.subr.mxu0 0.0
  %378 = vmatpush1.msra.mxu0 0.0
  %379 = vmatprep.mubr.f32.mxu0 0.0
  %380 = vmatmul.mubr.f32.gmra.mrb[0].mxu0 %v313
  %v381 = vpop.f32.mrb[0].mxu0
  %v382 = vadd.f32 0.0, %v381
  %v383 = vpop.f32.mrb[0].mxu0
  %384 = vdwg.mxu0
  %v385 = vadd.f32 %v309, %v382
  %v386 = vxor.u32 %v385, 2147483648
  %v387 = vmul.f32 %v386, 1.442695
  %v388 = vpow.pop %v387
  %v389 = vadd.f32 %v388, 1.0
  %v390 = vrcp.pop %v389
  %v391 = vmul.f32 1.0, %v390
  %v392 = vtanh.pop %v385
  %394 = vrot.lane.b32.xlu0 %v311, 32
  %v395 = vpop.permute.xlu0 %394
  %v397 = vmul.f32 %v391, %v395
  %399 = vrot.lane.b32.xlu0 %v392, 64
  %v400 = vpop.permute.xlu0 %399
  %v402 = vmul.f32 %v391, %v400
  %404 = vrot.lane.b32.xlu0 %v402, 32
  %v405 = vpop.permute.xlu0 %404
  %v407 = vadd.f32 %v397, %v405
  %v408 = vtanh.pop %v407
  %410 = vrot.lane.b32.xlu0 %v408, 64
  %v411 = vpop.permute.xlu0 %410
  %v413 = vmul.f32 %v391, %v411
  %415 = vrot.lane.b32.xlu0 %v413, 32
  %v416 = vpop.permute.xlu0 %415
  %418 = vst.msk [vmem:[#allocation2] sm:$0x3] %vm182, %v416
  %420 = vrot.lane.b32.xlu0 %v407, 96
  %v421 = vpop.permute.xlu0 %420
  %423 = vst.msk [vmem:[#allocation3] sm:$0x3] %vm182, %v421
  %s424 = scalar_lea.vmem %s4, 2
  %425 = vst.msk [vmem:[%s424] sm:$0x3] %vm182, %v416
  %s426 = scalar_lea.vmem %s44, 12
  %v427 = vld [vmem:[%s426] sm:$0x3]
  %v428 = vld [vmem:[#allocation4] sm:$0x3]
  %v429 = vld [vmem:[#allocation5] sm:$0x3]
  %v431 = vsel %vm75, %v428, 0
  %433 = vmatprep.subr.mxu0 0.0
  %434 = vmatpush1.msra.mxu0 %v68
  %435 = vmatprep.subr.mxu0 0.0
  %436 = vmatpush1.msra.mxu0 %v69
  %437 = vmatprep.subr.mxu0 0.0
  %438 = vmatpush1.msra.mxu0 %v70
  %439 = vmatprep.subr.mxu0 0.0
  %440 = vmatpush1.msra.mxu0 %v71
  %441 = vmatprep.subr.mxu0 0.0
  %442 = vmatpush1.msra.mxu0 0.0
  %443 = vmatprep.subr.mxu0 0.0
  %444 = vmatpush1.msra.mxu0 0.0
  %445 = vmatprep.subr.mxu0 0.0
  %446 = vmatpush1.msra.mxu0 0.0
  %447 = vmatprep.subr.mxu0 0.0
  %448 = vmatpush1.msra.mxu0 0.0
  %449 = vmatprep.subr.mxu0 0.0
  %450 = vmatpush1.msra.mxu0 0.0
  %451 = vmatprep.subr.mxu0 0.0
  %452 = vmatpush1.msra.mxu0 0.0
  %453 = vmatprep.subr.mxu0 0.0
  %454 = vmatpush1.msra.mxu0 0.0
  %455 = vmatprep.subr.mxu0 0.0
  %456 = vmatpush1.msra.mxu0 0.0
  %457 = vmatprep.subr.mxu0 0.0
  %458 = vmatpush1.msra.mxu0 0.0
  %459 = vmatprep.subr.mxu0 0.0
  %460 = vmatpush1.msra.mxu0 0.0
  %461 = vmatprep.subr.mxu0 0.0
  %462 = vmatpush1.msra.mxu0 0.0
  %463 = vmatprep.subr.mxu0 0.0
  %464 = vmatpush1.msra.mxu0 0.0
  %465 = vmatprep.subr.mxu0 0.0
  %466 = vmatpush1.msra.mxu0 0.0
  %467 = vmatprep.subr.mxu0 0.0
  %468 = vmatpush1.msra.mxu0 0.0
  %469 = vmatprep.subr.mxu0 0.0
  %470 = vmatpush1.msra.mxu0 0.0
  %471 = vmatprep.subr.mxu0 0.0
  %472 = vmatpush1.msra.mxu0 0.0
  %473 = vmatprep.subr.mxu0 0.0
  %474 = vmatpush1.msra.mxu0 0.0
  %475 = vmatprep.subr.mxu0 0.0
  %476 = vmatpush1.msra.mxu0 0.0
  %477 = vmatprep.subr.mxu0 0.0
  %478 = vmatpush1.msra.mxu0 0.0
  %479 = vmatprep.subr.mxu0 0.0
  %480 = vmatpush1.msra.mxu0 0.0
  %481 = vmatprep.subr.mxu0 0.0
  %482 = vmatpush1.msra.mxu0 0.0
  %483 = vmatprep.subr.mxu0 0.0
  %484 = vmatpush1.msra.mxu0 0.0
  %485 = vmatprep.subr.mxu0 0.0
  %486 = vmatpush1.msra.mxu0 0.0
  %487 = vmatprep.subr.mxu0 0.0
  %488 = vmatpush1.msra.mxu0 0.0
  %489 = vmatprep.subr.mxu0 0.0
  %490 = vmatpush1.msra.mxu0 0.0
  %491 = vmatprep.subr.mxu0 0.0
  %492 = vmatpush1.msra.mxu0 0.0
  %493 = vmatprep.subr.mxu0 0.0
  %494 = vmatpush1.msra.mxu0 0.0
  %495 = vmatprep.subr.mxu0 0.0
  %496 = vmatpush1.msra.mxu0 0.0
  %497 = vmatprep.mubr.f32.mxu0 0.0
  %498 = vmatmul.mubr.f32.gmra.mrb[0].mxu0 %v431
  %v499 = vpop.f32.mrb[0].mxu0
  %v500 = vadd.f32 0.0, %v499
  %v501 = vpop.f32.mrb[0].mxu0
  %502 = vdwg.mxu0
  %v503 = vadd.f32 %v427, %v500
  %v504 = vxor.u32 %v503, 2147483648
  %v505 = vmul.f32 %v504, 1.442695
  %v506 = vpow.pop %v505
  %v507 = vadd.f32 %v506, 1.0
  %v508 = vrcp.pop %v507
  %v509 = vmul.f32 1.0, %v508
  %v510 = vtanh.pop %v503
  %512 = vrot.lane.b32.xlu0 %v429, 32
  %v513 = vpop.permute.xlu0 %512
  %v515 = vmul.f32 %v509, %v513
  %517 = vrot.lane.b32.xlu0 %v510, 64
  %v518 = vpop.permute.xlu0 %517
  %v520 = vmul.f32 %v509, %v518
  %522 = vrot.lane.b32.xlu0 %v520, 32
  %v523 = vpop.permute.xlu0 %522
  %v525 = vadd.f32 %v515, %v523
  %v526 = vtanh.pop %v525
  %528 = vrot.lane.b32.xlu0 %v526, 64
  %v529 = vpop.permute.xlu0 %528
  %v531 = vmul.f32 %v509, %v529
  %533 = vrot.lane.b32.xlu0 %v531, 32
  %v534 = vpop.permute.xlu0 %533
  %536 = vst.msk [vmem:[#allocation4] sm:$0x3] %vm182, %v534
  %538 = vrot.lane.b32.xlu0 %v525, 96
  %v539 = vpop.permute.xlu0 %538
  %541 = vst.msk [vmem:[#allocation5] sm:$0x3] %vm182, %v539
  %s542 = scalar_lea.vmem %s52, 12
  %543 = vst.msk [vmem:[%s542] sm:$0x3] %vm182, %v534
  %s544 = scalar_lea.vmem %s0, 4
  %v545 = vld [vmem:[%s544] sm:$0x3]
  %v546 = vld [vmem:[#allocation2] sm:$0x3]
  %v547 = vld [vmem:[#allocation3] sm:$0x3]
  %v549 = vsel %vm75, %v546, 0
  %551 = vmatprep.subr.mxu0 0.0
  %552 = vmatpush1.msra.mxu0 %v64
  %553 = vmatprep.subr.mxu0 0.0
  %554 = vmatpush1.msra.mxu0 %v65
  %555 = vmatprep.subr.mxu0 0.0
  %556 = vmatpush1.msra.mxu0 %v66
  %557 = vmatprep.subr.mxu0 0.0
  %558 = vmatpush1.msra.mxu0 %v67
  %559 = vmatprep.subr.mxu0 0.0
  %560 = vmatpush1.msra.mxu0 0.0
  %561 = vmatprep.subr.mxu0 0.0
  %562 = vmatpush1.msra.mxu0 0.0
  %563 = vmatprep.subr.mxu0 0.0
  %564 = vmatpush1.msra.mxu0 0.0
  %565 = vmatprep.subr.mxu0 0.0
  %566 = vmatpush1.msra.mxu0 0.0
  %567 = vmatprep.subr.mxu0 0.0
  %568 = vmatpush1.msra.mxu0 0.0
  %569 = vmatprep.subr.mxu0 0.0
  %570 = vmatpush1.msra.mxu0 0.0
  %571 = vmatprep.subr.mxu0 0.0
  %572 = vmatpush1.msra.mxu0 0.0
  %573 = vmatprep.subr.mxu0 0.0
  %574 = vmatpush1.msra.mxu0 0.0
  %575 = vmatprep.subr.mxu0 0.0
  %576 = vmatpush1.msra.mxu0 0.0
  %577 = vmatprep.subr.mxu0 0.0
  %578 = vmatpush1.msra.mxu0 0.0
  %579 = vmatprep.subr.mxu0 0.0
  %580 = vmatpush1.msra.mxu0 0.0
  %581 = vmatprep.subr.mxu0 0.0
  %582 = vmatpush1.msra.mxu0 0.0
  %583 = vmatprep.subr.mxu0 0.0
  %584 = vmatpush1.msra.mxu0 0.0
  %585 = vmatprep.subr.mxu0 0.0
  %586 = vmatpush1.msra.mxu0 0.0
  %587 = vmatprep.subr.mxu0 0.0
  %588 = vmatpush1.msra.mxu0 0.0
  %589 = vmatprep.subr.mxu0 0.0
  %590 = vmatpush1.msra.mxu0 0.0
  %591 = vmatprep.subr.mxu0 0.0
  %592 = vmatpush1.msra.mxu0 0.0
  %593 = vmatprep.subr.mxu0 0.0
  %594 = vmatpush1.msra.mxu0 0.0
  %595 = vmatprep.subr.mxu0 0.0
  %596 = vmatpush1.msra.mxu0 0.0
  %597 = vmatprep.subr.mxu0 0.0
  %598 = vmatpush1.msra.mxu0 0.0
  %599 = vmatprep.subr.mxu0 0.0
  %600 = vmatpush1.msra.mxu0 0.0
  %601 = vmatprep.subr.mxu0 0.0
  %602 = vmatpush1.msra.mxu0 0.0
  %603 = vmatprep.subr.mxu0 0.0
  %604 = vmatpush1.msra.mxu0 0.0
  %605 = vmatprep.subr.mxu0 0.0
  %606 = vmatpush1.msra.mxu0 0.0
  %607 = vmatprep.subr.mxu0 0.0
  %608 = vmatpush1.msra.mxu0 0.0
  %609 = vmatprep.subr.mxu0 0.0
  %610 = vmatpush1.msra.mxu0 0.0
  %611 = vmatprep.subr.mxu0 0.0
  %612 = vmatpush1.msra.mxu0 0.0
  %613 = vmatprep.subr.mxu0 0.0
  %614 = vmatpush1.msra.mxu0 0.0
  %615 = vmatprep.mubr.f32.mxu0 0.0
  %616 = vmatmul.mubr.f32.gmra.mrb[0].mxu0 %v549
  %v617 = vpop.f32.mrb[0].mxu0
  %v618 = vadd.f32 0.0, %v617
  %v619 = vpop.f32.mrb[0].mxu0
  %620 = vdwg.mxu0
  %v621 = vadd.f32 %v545, %v618
  %v622 = vxor.u32 %v621, 2147483648
  %v623 = vmul.f32 %v622, 1.442695
  %v624 = vpow.pop %v623
  %v625 = vadd.f32 %v624, 1.0
  %v626 = vrcp.pop %v625
  %v627 = vmul.f32 1.0, %v626
  %v628 = vtanh.pop %v621
  %630 = vrot.lane.b32.xlu0 %v547, 32
  %v631 = vpop.permute.xlu0 %630
  %v633 = vmul.f32 %v627, %v631
  %635 = vrot.lane.b32.xlu0 %v628, 64
  %v636 = vpop.permute.xlu0 %635
  %v638 = vmul.f32 %v627, %v636
  %640 = vrot.lane.b32.xlu0 %v638, 32
  %v641 = vpop.permute.xlu0 %640
  %v643 = vadd.f32 %v633, %v641
  %v644 = vtanh.pop %v643
  %646 = vrot.lane.b32.xlu0 %v644, 64
  %v647 = vpop.permute.xlu0 %646
  %v649 = vmul.f32 %v627, %v647
  %651 = vrot.lane.b32.xlu0 %v649, 32
  %v652 = vpop.permute.xlu0 %651
  %654 = vst.msk [vmem:[#allocation2] sm:$0x3] %vm182, %v652
  %656 = vrot.lane.b32.xlu0 %v643, 96
  %v657 = vpop.permute.xlu0 %656
  %659 = vst.msk [vmem:[#allocation3] sm:$0x3] %vm182, %v657
  %s660 = scalar_lea.vmem %s4, 4
  %661 = vst.msk [vmem:[%s660] sm:$0x3] %vm182, %v652
  %s662 = scalar_lea.vmem %s44, 10
  %v663 = vld [vmem:[%s662] sm:$0x3]
  %v664 = vld [vmem:[#allocation4] sm:$0x3]
  %v665 = vld [vmem:[#allocation5] sm:$0x3]
  %v667 = vsel %vm75, %v664, 0
  %669 = vmatprep.subr.mxu0 0.0
  %670 = vmatpush1.msra.mxu0 %v68
  %671 = vmatprep.subr.mxu0 0.0
  %672 = vmatpush1.msra.mxu0 %v69
  %673 = vmatprep.subr.mxu0 0.0
  %674 = vmatpush1.msra.mxu0 %v70
  %675 = vmatprep.subr.mxu0 0.0
  %676 = vmatpush1.msra.mxu0 %v71
  %677 = vmatprep.subr.mxu0 0.0
  %678 = vmatpush1.msra.mxu0 0.0
  %679 = vmatprep.subr.mxu0 0.0
  %680 = vmatpush1.msra.mxu0 0.0
  %681 = vmatprep.subr.mxu0 0.0
  %682 = vmatpush1.msra.mxu0 0.0
  %683 = vmatprep.subr.mxu0 0.0
  %684 = vmatpush1.msra.mxu0 0.0
  %685 = vmatprep.subr.mxu0 0.0
  %686 = vmatpush1.msra.mxu0 0.0
  %687 = vmatprep.subr.mxu0 0.0
  %688 = vmatpush1.msra.mxu0 0.0
  %689 = vmatprep.subr.mxu0 0.0
  %690 = vmatpush1.msra.mxu0 0.0
  %691 = vmatprep.subr.mxu0 0.0
  %692 = vmatpush1.msra.mxu0 0.0
  %693 = vmatprep.subr.mxu0 0.0
  %694 = vmatpush1.msra.mxu0 0.0
  %695 = vmatprep.subr.mxu0 0.0
  %696 = vmatpush1.msra.mxu0 0.0
  %697 = vmatprep.subr.mxu0 0.0
  %698 = vmatpush1.msra.mxu0 0.0
  %699 = vmatprep.subr.mxu0 0.0
  %700 = vmatpush1.msra.mxu0 0.0
  %701 = vmatprep.subr.mxu0 0.0
  %702 = vmatpush1.msra.mxu0 0.0
  %703 = vmatprep.subr.mxu0 0.0
  %704 = vmatpush1.msra.mxu0 0.0
  %705 = vmatprep.subr.mxu0 0.0
  %706 = vmatpush1.msra.mxu0 0.0
  %707 = vmatprep.subr.mxu0 0.0
  %708 = vmatpush1.msra.mxu0 0.0
  %709 = vmatprep.subr.mxu0 0.0
  %710 = vmatpush1.msra.mxu0 0.0
  %711 = vmatprep.subr.mxu0 0.0
  %712 = vmatpush1.msra.mxu0 0.0
  %713 = vmatprep.subr.mxu0 0.0
  %714 = vmatpush1.msra.mxu0 0.0
  %715 = vmatprep.subr.mxu0 0.0
  %716 = vmatpush1.msra.mxu0 0.0
  %717 = vmatprep.subr.mxu0 0.0
  %718 = vmatpush1.msra.mxu0 0.0
  %719 = vmatprep.subr.mxu0 0.0
  %720 = vmatpush1.msra.mxu0 0.0
  %721 = vmatprep.subr.mxu0 0.0
  %722 = vmatpush1.msra.mxu0 0.0
  %723 = vmatprep.subr.mxu0 0.0
  %724 = vmatpush1.msra.mxu0 0.0
  %725 = vmatprep.subr.mxu0 0.0
  %726 = vmatpush1.msra.mxu0 0.0
  %727 = vmatprep.subr.mxu0 0.0
  %728 = vmatpush1.msra.mxu0 0.0
  %729 = vmatprep.subr.mxu0 0.0
  %730 = vmatpush1.msra.mxu0 0.0
  %731 = vmatprep.subr.mxu0 0.0
  %732 = vmatpush1.msra.mxu0 0.0
  %733 = vmatprep.mubr.f32.mxu0 0.0
  %734 = vmatmul.mubr.f32.gmra.mrb[0].mxu0 %v667
  %v735 = vpop.f32.mrb[0].mxu0
  %v736 = vadd.f32 0.0, %v735
  %v737 = vpop.f32.mrb[0].mxu0
  %738 = vdwg.mxu0
  %v739 = vadd.f32 %v663, %v736
  %v740 = vxor.u32 %v739, 2147483648
  %v741 = vmul.f32 %v740, 1.442695
  %v742 = vpow.pop %v741
  %v743 = vadd.f32 %v742, 1.0
  %v744 = vrcp.pop %v743
  %v745 = vmul.f32 1.0, %v744
  %v746 = vtanh.pop %v739
  %748 = vrot.lane.b32.xlu0 %v665, 32
  %v749 = vpop.permute.xlu0 %748
  %v751 = vmul.f32 %v745, %v749
  %753 = vrot.lane.b32.xlu0 %v746, 64
  %v754 = vpop.permute.xlu0 %753
  %v756 = vmul.f32 %v745, %v754
  %758 = vrot.lane.b32.xlu0 %v756, 32
  %v759 = vpop.permute.xlu0 %758
  %v761 = vadd.f32 %v751, %v759
  %v762 = vtanh.pop %v761
  %764 = vrot.lane.b32.xlu0 %v762, 64
  %v765 = vpop.permute.xlu0 %764
  %v767 = vmul.f32 %v745, %v765
  %769 = vrot.lane.b32.xlu0 %v767, 32
  %v770 = vpop.permute.xlu0 %769
  %772 = vst.msk [vmem:[#allocation4] sm:$0x3] %vm182, %v770
  %774 = vrot.lane.b32.xlu0 %v761, 96
  %v775 = vpop.permute.xlu0 %774
  %777 = vst.msk [vmem:[#allocation5] sm:$0x3] %vm182, %v775
  %s778 = scalar_lea.vmem %s52, 10
  %779 = vst.msk [vmem:[%s778] sm:$0x3] %vm182, %v770
  %s780 = scalar_lea.vmem %s0, 6
  %v781 = vld [vmem:[%s780] sm:$0x3]
  %v782 = vld [vmem:[#allocation2] sm:$0x3]
  %v783 = vld [vmem:[#allocation3] sm:$0x3]
  %v785 = vsel %vm75, %v782, 0
  %787 = vmatprep.subr.mxu0 0.0
  %788 = vmatpush1.msra.mxu0 %v64
  %789 = vmatprep.subr.mxu0 0.0
  %790 = vmatpush1.msra.mxu0 %v65
  %791 = vmatprep.subr.mxu0 0.0
  %792 = vmatpush1.msra.mxu0 %v66
  %793 = vmatprep.subr.mxu0 0.0
  %794 = vmatpush1.msra.mxu0 %v67
  %795 = vmatprep.subr.mxu0 0.0
  %796 = vmatpush1.msra.mxu0 0.0
  %797 = vmatprep.subr.mxu0 0.0
  %798 = vmatpush1.msra.mxu0 0.0
  %799 = vmatprep.subr.mxu0 0.0
  %800 = vmatpush1.msra.mxu0 0.0
  %801 = vmatprep.subr.mxu0 0.0
  %802 = vmatpush1.msra.mxu0 0.0
  %803 = vmatprep.subr.mxu0 0.0
  %804 = vmatpush1.msra.mxu0 0.0
  %805 = vmatprep.subr.mxu0 0.0
  %806 = vmatpush1.msra.mxu0 0.0
  %807 = vmatprep.subr.mxu0 0.0
  %808 = vmatpush1.msra.mxu0 0.0
  %809 = vmatprep.subr.mxu0 0.0
  %810 = vmatpush1.msra.mxu0 0.0
  %811 = vmatprep.subr.mxu0 0.0
  %812 = vmatpush1.msra.mxu0 0.0
  %813 = vmatprep.subr.mxu0 0.0
  %814 = vmatpush1.msra.mxu0 0.0
  %815 = vmatprep.subr.mxu0 0.0
  %816 = vmatpush1.msra.mxu0 0.0
  %817 = vmatprep.subr.mxu0 0.0
  %818 = vmatpush1.msra.mxu0 0.0
  %819 = vmatprep.subr.mxu0 0.0
  %820 = vmatpush1.msra.mxu0 0.0
  %821 = vmatprep.subr.mxu0 0.0
  %822 = vmatpush1.msra.mxu0 0.0
  %823 = vmatprep.subr.mxu0 0.0
  %824 = vmatpush1.msra.mxu0 0.0
  %825 = vmatprep.subr.mxu0 0.0
  %826 = vmatpush1.msra.mxu0 0.0
  %827 = vmatprep.subr.mxu0 0.0
  %828 = vmatpush1.msra.mxu0 0.0
  %829 = vmatprep.subr.mxu0 0.0
  %830 = vmatpush1.msra.mxu0 0.0
  %831 = vmatprep.subr.mxu0 0.0
  %832 = vmatpush1.msra.mxu0 0.0
  %833 = vmatprep.subr.mxu0 0.0
  %834 = vmatpush1.msra.mxu0 0.0
  %835 = vmatprep.subr.mxu0 0.0
  %836 = vmatpush1.msra.mxu0 0.0
  %837 = vmatprep.subr.mxu0 0.0
  %838 = vmatpush1.msra.mxu0 0.0
  %839 = vmatprep.subr.mxu0 0.0
  %840 = vmatpush1.msra.mxu0 0.0
  %841 = vmatprep.subr.mxu0 0.0
  %842 = vmatpush1.msra.mxu0 0.0
  %843 = vmatprep.subr.mxu0 0.0
  %844 = vmatpush1.msra.mxu0 0.0
  %845 = vmatprep.subr.mxu0 0.0
  %846 = vmatpush1.msra.mxu0 0.0
  %847 = vmatprep.subr.mxu0 0.0
  %848 = vmatpush1.msra.mxu0 0.0
  %849 = vmatprep.subr.mxu0 0.0
  %850 = vmatpush1.msra.mxu0 0.0
  %851 = vmatprep.mubr.f32.mxu0 0.0
  %852 = vmatmul.mubr.f32.gmra.mrb[0].mxu0 %v785
  %v853 = vpop.f32.mrb[0].mxu0
  %v854 = vadd.f32 0.0, %v853
  %v855 = vpop.f32.mrb[0].mxu0
  %856 = vdwg.mxu0
  %v857 = vadd.f32 %v781, %v854
  %v858 = vxor.u32 %v857, 2147483648
  %v859 = vmul.f32 %v858, 1.442695
  %v860 = vpow.pop %v859
  %v861 = vadd.f32 %v860, 1.0
  %v862 = vrcp.pop %v861
  %v863 = vmul.f32 1.0, %v862
  %v864 = vtanh.pop %v857
  %866 = vrot.lane.b32.xlu0 %v783, 32
  %v867 = vpop.permute.xlu0 %866
  %v869 = vmul.f32 %v863, %v867
  %871 = vrot.lane.b32.xlu0 %v864, 64
  %v872 = vpop.permute.xlu0 %871
  %v874 = vmul.f32 %v863, %v872
  %876 = vrot.lane.b32.xlu0 %v874, 32
  %v877 = vpop.permute.xlu0 %876
  %v879 = vadd.f32 %v869, %v877
  %v880 = vtanh.pop %v879
  %882 = vrot.lane.b32.xlu0 %v880, 64
  %v883 = vpop.permute.xlu0 %882
  %v885 = vmul.f32 %v863, %v883
  %887 = vrot.lane.b32.xlu0 %v885, 32
  %v888 = vpop.permute.xlu0 %887
  %890 = vst.msk [vmem:[#allocation2] sm:$0x3] %vm182, %v888
  %892 = vrot.lane.b32.xlu0 %v879, 96
  %v893 = vpop.permute.xlu0 %892
  %895 = vst.msk [vmem:[#allocation3] sm:$0x3] %vm182, %v893
  %s896 = scalar_lea.vmem %s4, 6
  %897 = vst.msk [vmem:[%s896] sm:$0x3] %vm182, %v888
  %s898 = scalar_lea.vmem %s44, 8
  %v899 = vld [vmem:[%s898] sm:$0x3]
  %v900 = vld [vmem:[#allocation4] sm:$0x3]
  %v901 = vld [vmem:[#allocation5] sm:$0x3]
  %v903 = vsel %vm75, %v900, 0
  %905 = vmatprep.subr.mxu0 0.0
  %906 = vmatpush1.msra.mxu0 %v68
  %907 = vmatprep.subr.mxu0 0.0
  %908 = vmatpush1.msra.mxu0 %v69
  %909 = vmatprep.subr.mxu0 0.0
  %910 = vmatpush1.msra.mxu0 %v70
  %911 = vmatprep.subr.mxu0 0.0
  %912 = vmatpush1.msra.mxu0 %v71
  %913 = vmatprep.subr.mxu0 0.0
  %914 = vmatpush1.msra.mxu0 0.0
  %915 = vmatprep.subr.mxu0 0.0
  %916 = vmatpush1.msra.mxu0 0.0
  %917 = vmatprep.subr.mxu0 0.0
  %918 = vmatpush1.msra.mxu0 0.0
  %919 = vmatprep.subr.mxu0 0.0
  %920 = vmatpush1.msra.mxu0 0.0
  %921 = vmatprep.subr.mxu0 0.0
  %922 = vmatpush1.msra.mxu0 0.0
  %923 = vmatprep.subr.mxu0 0.0
  %924 = vmatpush1.msra.mxu0 0.0
  %925 = vmatprep.subr.mxu0 0.0
  %926 = vmatpush1.msra.mxu0 0.0
  %927 = vmatprep.subr.mxu0 0.0
  %928 = vmatpush1.msra.mxu0 0.0
  %929 = vmatprep.subr.mxu0 0.0
  %930 = vmatpush1.msra.mxu0 0.0
  %931 = vmatprep.subr.mxu0 0.0
  %932 = vmatpush1.msra.mxu0 0.0
  %933 = vmatprep.subr.mxu0 0.0
  %934 = vmatpush1.msra.mxu0 0.0
  %935 = vmatprep.subr.mxu0 0.0
  %936 = vmatpush1.msra.mxu0 0.0
  %937 = vmatprep.subr.mxu0 0.0
  %938 = vmatpush1.msra.mxu0 0.0
  %939 = vmatprep.subr.mxu0 0.0
  %940 = vmatpush1.msra.mxu0 0.0
  %941 = vmatprep.subr.mxu0 0.0
  %942 = vmatpush1.msra.mxu0 0.0
  %943 = vmatprep.subr.mxu0 0.0
  %944 = vmatpush1.msra.mxu0 0.0
  %945 = vmatprep.subr.mxu0 0.0
  %946 = vmatpush1.msra.mxu0 0.0
  %947 = vmatprep.subr.mxu0 0.0
  %948 = vmatpush1.msra.mxu0 0.0
  %949 = vmatprep.subr.mxu0 0.0
  %950 = vmatpush1.msra.mxu0 0.0
  %951 = vmatprep.subr.mxu0 0.0
  %952 = vmatpush1.msra.mxu0 0.0
  %953 = vmatprep.subr.mxu0 0.0
  %954 = vmatpush1.msra.mxu0 0.0
  %955 = vmatprep.subr.mxu0 0.0
  %956 = vmatpush1.msra.mxu0 0.0
  %957 = vmatprep.subr.mxu0 0.0
  %958 = vmatpush1.msra.mxu0 0.0
  %959 = vmatprep.subr.mxu0 0.0
  %960 = vmatpush1.msra.mxu0 0.0
  %961 = vmatprep.subr.mxu0 0.0
  %962 = vmatpush1.msra.mxu0 0.0
  %963 = vmatprep.subr.mxu0 0.0
  %964 = vmatpush1.msra.mxu0 0.0
  %965 = vmatprep.subr.mxu0 0.0
  %966 = vmatpush1.msra.mxu0 0.0
  %967 = vmatprep.subr.mxu0 0.0
  %968 = vmatpush1.msra.mxu0 0.0
  %969 = vmatprep.mubr.f32.mxu0 0.0
  %970 = vmatmul.mubr.f32.gmra.mrb[0].mxu0 %v903
  %v971 = vpop.f32.mrb[0].mxu0
  %v972 = vadd.f32 0.0, %v971
  %v973 = vpop.f32.mrb[0].mxu0
  %974 = vdwg.mxu0
  %v975 = vadd.f32 %v899, %v972
  %v976 = vxor.u32 %v975, 2147483648
  %v977 = vmul.f32 %v976, 1.442695
  %v978 = vpow.pop %v977
  %v979 = vadd.f32 %v978, 1.0
  %v980 = vrcp.pop %v979
  %v981 = vmul.f32 1.0, %v980
  %v982 = vtanh.pop %v975
  %984 = vrot.lane.b32.xlu0 %v901, 32
  %v985 = vpop.permute.xlu0 %984
  %v987 = vmul.f32 %v981, %v985
  %989 = vrot.lane.b32.xlu0 %v982, 64
  %v990 = vpop.permute.xlu0 %989
  %v992 = vmul.f32 %v981, %v990
  %994 = vrot.lane.b32.xlu0 %v992, 32
  %v995 = vpop.permute.xlu0 %994
  %v997 = vadd.f32 %v987, %v995
  %v998 = vtanh.pop %v997
  %1000 = vrot.lane.b32.xlu0 %v998, 64
  %v1001 = vpop.permute.xlu0 %1000
  %v1003 = vmul.f32 %v981, %v1001
  %1005 = vrot.lane.b32.xlu0 %v1003, 32
  %v1006 = vpop.permute.xlu0 %1005
  %1008 = vst.msk [vmem:[#allocation4] sm:$0x3] %vm182, %v1006
  %1010 = vrot.lane.b32.xlu0 %v997, 96
  %v1011 = vpop.permute.xlu0 %1010
  %1013 = vst.msk [vmem:[#allocation5] sm:$0x3] %vm182, %v1011
  %s1014 = scalar_lea.vmem %s52, 8
  %1015 = vst.msk [vmem:[%s1014] sm:$0x3] %vm182, %v1006
  %s1016 = scalar_lea.vmem %s0, 8
  %v1017 = vld [vmem:[%s1016] sm:$0x3]
  %v1018 = vld [vmem:[#allocation2] sm:$0x3]
  %v1019 = vld [vmem:[#allocation3] sm:$0x3]
  %v1021 = vsel %vm75, %v1018, 0
  %1023 = vmatprep.subr.mxu0 0.0
  %1024 = vmatpush1.msra.mxu0 %v64
  %1025 = vmatprep.subr.mxu0 0.0
  %1026 = vmatpush1.msra.mxu0 %v65
  %1027 = vmatprep.subr.mxu0 0.0
  %1028 = vmatpush1.msra.mxu0 %v66
  %1029 = vmatprep.subr.mxu0 0.0
  %1030 = vmatpush1.msra.mxu0 %v67
  %1031 = vmatprep.subr.mxu0 0.0
  %1032 = vmatpush1.msra.mxu0 0.0
  %1033 = vmatprep.subr.mxu0 0.0
  %1034 = vmatpush1.msra.mxu0 0.0
  %1035 = vmatprep.subr.mxu0 0.0
  %1036 = vmatpush1.msra.mxu0 0.0
  %1037 = vmatprep.subr.mxu0 0.0
  %1038 = vmatpush1.msra.mxu0 0.0
  %1039 = vmatprep.subr.mxu0 0.0
  %1040 = vmatpush1.msra.mxu0 0.0
  %1041 = vmatprep.subr.mxu0 0.0
  %1042 = vmatpush1.msra.mxu0 0.0
  %1043 = vmatprep.subr.mxu0 0.0
  %1044 = vmatpush1.msra.mxu0 0.0
  %1045 = vmatprep.subr.mxu0 0.0
  %1046 = vmatpush1.msra.mxu0 0.0
  %1047 = vmatprep.subr.mxu0 0.0
  %1048 = vmatpush1.msra.mxu0 0.0
  %1049 = vmatprep.subr.mxu0 0.0
  %1050 = vmatpush1.msra.mxu0 0.0
  %1051 = vmatprep.subr.mxu0 0.0
  %1052 = vmatpush1.msra.mxu0 0.0
  %1053 = vmatprep.subr.mxu0 0.0
  %1054 = vmatpush1.msra.mxu0 0.0
  %1055 = vmatprep.subr.mxu0 0.0
  %1056 = vmatpush1.msra.mxu0 0.0
  %1057 = vmatprep.subr.mxu0 0.0
  %1058 = vmatpush1.msra.mxu0 0.0
  %1059 = vmatprep.subr.mxu0 0.0
  %1060 = vmatpush1.msra.mxu0 0.0
  %1061 = vmatprep.subr.mxu0 0.0
  %1062 = vmatpush1.msra.mxu0 0.0
  %1063 = vmatprep.subr.mxu0 0.0
  %1064 = vmatpush1.msra.mxu0 0.0
  %1065 = vmatprep.subr.mxu0 0.0
  %1066 = vmatpush1.msra.mxu0 0.0
  %1067 = vmatprep.subr.mxu0 0.0
  %1068 = vmatpush1.msra.mxu0 0.0
  %1069 = vmatprep.subr.mxu0 0.0
  %1070 = vmatpush1.msra.mxu0 0.0
  %1071 = vmatprep.subr.mxu0 0.0
  %1072 = vmatpush1.msra.mxu0 0.0
  %1073 = vmatprep.subr.mxu0 0.0
  %1074 = vmatpush1.msra.mxu0 0.0
  %1075 = vmatprep.subr.mxu0 0.0
  %1076 = vmatpush1.msra.mxu0 0.0
  %1077 = vmatprep.subr.mxu0 0.0
  %1078 = vmatpush1.msra.mxu0 0.0
  %1079 = vmatprep.subr.mxu0 0.0
  %1080 = vmatpush1.msra.mxu0 0.0
  %1081 = vmatprep.subr.mxu0 0.0
  %1082 = vmatpush1.msra.mxu0 0.0
  %1083 = vmatprep.subr.mxu0 0.0
  %1084 = vmatpush1.msra.mxu0 0.0
  %1085 = vmatprep.subr.mxu0 0.0
  %1086 = vmatpush1.msra.mxu0 0.0
  %1087 = vmatprep.mubr.f32.mxu0 0.0
  %1088 = vmatmul.mubr.f32.gmra.mrb[0].mxu0 %v1021
  %v1089 = vpop.f32.mrb[0].mxu0
  %v1090 = vadd.f32 0.0, %v1089
  %v1091 = vpop.f32.mrb[0].mxu0
  %1092 = vdwg.mxu0
  %v1093 = vadd.f32 %v1017, %v1090
  %v1094 = vxor.u32 %v1093, 2147483648
  %v1095 = vmul.f32 %v1094, 1.442695
  %v1096 = vpow.pop %v1095
  %v1097 = vadd.f32 %v1096, 1.0
  %v1098 = vrcp.pop %v1097
  %v1099 = vmul.f32 1.0, %v1098
  %v1100 = vtanh.pop %v1093
  %1102 = vrot.lane.b32.xlu0 %v1019, 32
  %v1103 = vpop.permute.xlu0 %1102
  %v1105 = vmul.f32 %v1099, %v1103
  %1107 = vrot.lane.b32.xlu0 %v1100, 64
  %v1108 = vpop.permute.xlu0 %1107
  %v1110 = vmul.f32 %v1099, %v1108
  %1112 = vrot.lane.b32.xlu0 %v1110, 32
  %v1113 = vpop.permute.xlu0 %1112
  %v1115 = vadd.f32 %v1105, %v1113
  %v1116 = vtanh.pop %v1115
  %1118 = vrot.lane.b32.xlu0 %v1116, 64
  %v1119 = vpop.permute.xlu0 %1118
  %v1121 = vmul.f32 %v1099, %v1119
  %1123 = vrot.lane.b32.xlu0 %v1121, 32
  %v1124 = vpop.permute.xlu0 %1123
  %1126 = vst.msk [vmem:[#allocation2] sm:$0x3] %vm182, %v1124
  %1128 = vrot.lane.b32.xlu0 %v1115, 96
  %v1129 = vpop.permute.xlu0 %1128
  %1131 = vst.msk [vmem:[#allocation3] sm:$0x3] %vm182, %v1129
  %s1132 = scalar_lea.vmem %s4, 8
  %1133 = vst.msk [vmem:[%s1132] sm:$0x3] %vm182, %v1124
  %s1134 = scalar_lea.vmem %s44, 6
  %v1135 = vld [vmem:[%s1134] sm:$0x3]
  %v1136 = vld [vmem:[#allocation4] sm:$0x3]
  %v1137 = vld [vmem:[#allocation5] sm:$0x3]
  %v1139 = vsel %vm75, %v1136, 0
  %1141 = vmatprep.subr.mxu0 0.0
  %1142 = vmatpush1.msra.mxu0 %v68
  %1143 = vmatprep.subr.mxu0 0.0
  %1144 = vmatpush1.msra.mxu0 %v69
  %1145 = vmatprep.subr.mxu0 0.0
  %1146 = vmatpush1.msra.mxu0 %v70
  %1147 = vmatprep.subr.mxu0 0.0
  %1148 = vmatpush1.msra.mxu0 %v71
  %1149 = vmatprep.subr.mxu0 0.0
  %1150 = vmatpush1.msra.mxu0 0.0
  %1151 = vmatprep.subr.mxu0 0.0
  %1152 = vmatpush1.msra.mxu0 0.0
  %1153 = vmatprep.subr.mxu0 0.0
  %1154 = vmatpush1.msra.mxu0 0.0
  %1155 = vmatprep.subr.mxu0 0.0
  %1156 = vmatpush1.msra.mxu0 0.0
  %1157 = vmatprep.subr.mxu0 0.0
  %1158 = vmatpush1.msra.mxu0 0.0
  %1159 = vmatprep.subr.mxu0 0.0
  %1160 = vmatpush1.msra.mxu0 0.0
  %1161 = vmatprep.subr.mxu0 0.0
  %1162 = vmatpush1.msra.mxu0 0.0
  %1163 = vmatprep.subr.mxu0 0.0
  %1164 = vmatpush1.msra.mxu0 0.0
  %1165 = vmatprep.subr.mxu0 0.0
  %1166 = vmatpush1.msra.mxu0 0.0
  %1167 = vmatprep.subr.mxu0 0.0
  %1168 = vmatpush1.msra.mxu0 0.0
  %1169 = vmatprep.subr.mxu0 0.0
  %1170 = vmatpush1.msra.mxu0 0.0
  %1171 = vmatprep.subr.mxu0 0.0
  %1172 = vmatpush1.msra.mxu0 0.0
  %1173 = vmatprep.subr.mxu0 0.0
  %1174 = vmatpush1.msra.mxu0 0.0
  %1175 = vmatprep.subr.mxu0 0.0
  %1176 = vmatpush1.msra.mxu0 0.0
  %1177 = vmatprep.subr.mxu0 0.0
  %1178 = vmatpush1.msra.mxu0 0.0
  %1179 = vmatprep.subr.mxu0 0.0
  %1180 = vmatpush1.msra.mxu0 0.0
  %1181 = vmatprep.subr.mxu0 0.0
  %1182 = vmatpush1.msra.mxu0 0.0
  %1183 = vmatprep.subr.mxu0 0.0
  %1184 = vmatpush1.msra.mxu0 0.0
  %1185 = vmatprep.subr.mxu0 0.0
  %1186 = vmatpush1.msra.mxu0 0.0
  %1187 = vmatprep.subr.mxu0 0.0
  %1188 = vmatpush1.msra.mxu0 0.0
  %1189 = vmatprep.subr.mxu0 0.0
  %1190 = vmatpush1.msra.mxu0 0.0
  %1191 = vmatprep.subr.mxu0 0.0
  %1192 = vmatpush1.msra.mxu0 0.0
  %1193 = vmatprep.subr.mxu0 0.0
  %1194 = vmatpush1.msra.mxu0 0.0
  %1195 = vmatprep.subr.mxu0 0.0
  %1196 = vmatpush1.msra.mxu0 0.0
  %1197 = vmatprep.subr.mxu0 0.0
  %1198 = vmatpush1.msra.mxu0 0.0
  %1199 = vmatprep.subr.mxu0 0.0
  %1200 = vmatpush1.msra.mxu0 0.0
  %1201 = vmatprep.subr.mxu0 0.0
  %1202 = vmatpush1.msra.mxu0 0.0
  %1203 = vmatprep.subr.mxu0 0.0
  %1204 = vmatpush1.msra.mxu0 0.0
  %1205 = vmatprep.mubr.f32.mxu0 0.0
  %1206 = vmatmul.mubr.f32.gmra.mrb[0].mxu0 %v1139
  %v1207 = vpop.f32.mrb[0].mxu0
  %v1208 = vadd.f32 0.0, %v1207
  %v1209 = vpop.f32.mrb[0].mxu0
  %1210 = vdwg.mxu0
  %v1211 = vadd.f32 %v1135, %v1208
  %v1212 = vxor.u32 %v1211, 2147483648
  %v1213 = vmul.f32 %v1212, 1.442695
  %v1214 = vpow.pop %v1213
  %v1215 = vadd.f32 %v1214, 1.0
  %v1216 = vrcp.pop %v1215
  %v1217 = vmul.f32 1.0, %v1216
  %v1218 = vtanh.pop %v1211
  %1220 = vrot.lane.b32.xlu0 %v1137, 32
  %v1221 = vpop.permute.xlu0 %1220
  %v1223 = vmul.f32 %v1217, %v1221
  %1225 = vrot.lane.b32.xlu0 %v1218, 64
  %v1226 = vpop.permute.xlu0 %1225
  %v1228 = vmul.f32 %v1217, %v1226
  %1230 = vrot.lane.b32.xlu0 %v1228, 32
  %v1231 = vpop.permute.xlu0 %1230
  %v1233 = vadd.f32 %v1223, %v1231
  %v1234 = vtanh.pop %v1233
  %1236 = vrot.lane.b32.xlu0 %v1234, 64
  %v1237 = vpop.permute.xlu0 %1236
  %v1239 = vmul.f32 %v1217, %v1237
  %1241 = vrot.lane.b32.xlu0 %v1239, 32
  %v1242 = vpop.permute.xlu0 %1241
  %1244 = vst.msk [vmem:[#allocation4] sm:$0x3] %vm182, %v1242
  %1246 = vrot.lane.b32.xlu0 %v1233, 96
  %v1247 = vpop.permute.xlu0 %1246
  %1249 = vst.msk [vmem:[#allocation5] sm:$0x3] %vm182, %v1247
  %s1250 = scalar_lea.vmem %s52, 6
  %1251 = vst.msk [vmem:[%s1250] sm:$0x3] %vm182, %v1242
  %s1252 = scalar_lea.vmem %s0, 10
  %v1253 = vld [vmem:[%s1252] sm:$0x3]
  %v1254 = vld [vmem:[#allocation2] sm:$0x3]
  %v1255 = vld [vmem:[#allocation3] sm:$0x3]
  %v1257 = vsel %vm75, %v1254, 0
  %1259 = vmatprep.subr.mxu0 0.0
  %1260 = vmatpush1.msra.mxu0 %v64
  %1261 = vmatprep.subr.mxu0 0.0
  %1262 = vmatpush1.msra.mxu0 %v65
  %1263 = vmatprep.subr.mxu0 0.0
  %1264 = vmatpush1.msra.mxu0 %v66
  %1265 = vmatprep.subr.mxu0 0.0
  %1266 = vmatpush1.msra.mxu0 %v67
  %1267 = vmatprep.subr.mxu0 0.0
  %1268 = vmatpush1.msra.mxu0 0.0
  %1269 = vmatprep.subr.mxu0 0.0
  %1270 = vmatpush1.msra.mxu0 0.0
  %1271 = vmatprep.subr.mxu0 0.0
  %1272 = vmatpush1.msra.mxu0 0.0
  %1273 = vmatprep.subr.mxu0 0.0
  %1274 = vmatpush1.msra.mxu0 0.0
  %1275 = vmatprep.subr.mxu0 0.0
  %1276 = vmatpush1.msra.mxu0 0.0
  %1277 = vmatprep.subr.mxu0 0.0
  %1278 = vmatpush1.msra.mxu0 0.0
  %1279 = vmatprep.subr.mxu0 0.0
  %1280 = vmatpush1.msra.mxu0 0.0
  %1281 = vmatprep.subr.mxu0 0.0
  %1282 = vmatpush1.msra.mxu0 0.0
  %1283 = vmatprep.subr.mxu0 0.0
  %1284 = vmatpush1.msra.mxu0 0.0
  %1285 = vmatprep.subr.mxu0 0.0
  %1286 = vmatpush1.msra.mxu0 0.0
  %1287 = vmatprep.subr.mxu0 0.0
  %1288 = vmatpush1.msra.mxu0 0.0
  %1289 = vmatprep.subr.mxu0 0.0
  %1290 = vmatpush1.msra.mxu0 0.0
  %1291 = vmatprep.subr.mxu0 0.0
  %1292 = vmatpush1.msra.mxu0 0.0
  %1293 = vmatprep.subr.mxu0 0.0
  %1294 = vmatpush1.msra.mxu0 0.0
  %1295 = vmatprep.subr.mxu0 0.0
  %1296 = vmatpush1.msra.mxu0 0.0
  %1297 = vmatprep.subr.mxu0 0.0
  %1298 = vmatpush1.msra.mxu0 0.0
  %1299 = vmatprep.subr.mxu0 0.0
  %1300 = vmatpush1.msra.mxu0 0.0
  %1301 = vmatprep.subr.mxu0 0.0
  %1302 = vmatpush1.msra.mxu0 0.0
  %1303 = vmatprep.subr.mxu0 0.0
  %1304 = vmatpush1.msra.mxu0 0.0
  %1305 = vmatprep.subr.mxu0 0.0
  %1306 = vmatpush1.msra.mxu0 0.0
  %1307 = vmatprep.subr.mxu0 0.0
  %1308 = vmatpush1.msra.mxu0 0.0
  %1309 = vmatprep.subr.mxu0 0.0
  %1310 = vmatpush1.msra.mxu0 0.0
  %1311 = vmatprep.subr.mxu0 0.0
  %1312 = vmatpush1.msra.mxu0 0.0
  %1313 = vmatprep.subr.mxu0 0.0
  %1314 = vmatpush1.msra.mxu0 0.0
  %1315 = vmatprep.subr.mxu0 0.0
  %1316 = vmatpush1.msra.mxu0 0.0
  %1317 = vmatprep.subr.mxu0 0.0
  %1318 = vmatpush1.msra.mxu0 0.0
  %1319 = vmatprep.subr.mxu0 0.0
  %1320 = vmatpush1.msra.mxu0 0.0
  %1321 = vmatprep.subr.mxu0 0.0
  %1322 = vmatpush1.msra.mxu0 0.0
  %1323 = vmatprep.mubr.f32.mxu0 0.0
  %1324 = vmatmul.mubr.f32.gmra.mrb[0].mxu0 %v1257
  %v1325 = vpop.f32.mrb[0].mxu0
  %v1326 = vadd.f32 0.0, %v1325
  %v1327 = vpop.f32.mrb[0].mxu0
  %1328 = vdwg.mxu0
  %v1329 = vadd.f32 %v1253, %v1326
  %v1330 = vxor.u32 %v1329, 2147483648
  %v1331 = vmul.f32 %v1330, 1.442695
  %v1332 = vpow.pop %v1331
  %v1333 = vadd.f32 %v1332, 1.0
  %v1334 = vrcp.pop %v1333
  %v1335 = vmul.f32 1.0, %v1334
  %v1336 = vtanh.pop %v1329
  %1338 = vrot.lane.b32.xlu0 %v1255, 32
  %v1339 = vpop.permute.xlu0 %1338
  %v1341 = vmul.f32 %v1335, %v1339
  %1343 = vrot.lane.b32.xlu0 %v1336, 64
  %v1344 = vpop.permute.xlu0 %1343
  %v1346 = vmul.f32 %v1335, %v1344
  %1348 = vrot.lane.b32.xlu0 %v1346, 32
  %v1349 = vpop.permute.xlu0 %1348
  %v1351 = vadd.f32 %v1341, %v1349
  %v1352 = vtanh.pop %v1351
  %1354 = vrot.lane.b32.xlu0 %v1352, 64
  %v1355 = vpop.permute.xlu0 %1354
  %v1357 = vmul.f32 %v1335, %v1355
  %1359 = vrot.lane.b32.xlu0 %v1357, 32
  %v1360 = vpop.permute.xlu0 %1359
  %1362 = vst.msk [vmem:[#allocation2] sm:$0x3] %vm182, %v1360
  %1364 = vrot.lane.b32.xlu0 %v1351, 96
  %v1365 = vpop.permute.xlu0 %1364
  %1367 = vst.msk [vmem:[#allocation3] sm:$0x3] %vm182, %v1365
  %s1368 = scalar_lea.vmem %s4, 10
  %1369 = vst.msk [vmem:[%s1368] sm:$0x3] %vm182, %v1360
  %s1370 = scalar_lea.vmem %s44, 4
  %v1371 = vld [vmem:[%s1370] sm:$0x3]
  %v1372 = vld [vmem:[#allocation4] sm:$0x3]
  %v1373 = vld [vmem:[#allocation5] sm:$0x3]
  %v1375 = vsel %vm75, %v1372, 0
  %1377 = vmatprep.subr.mxu0 0.0
  %1378 = vmatpush1.msra.mxu0 %v68
  %1379 = vmatprep.subr.mxu0 0.0
  %1380 = vmatpush1.msra.mxu0 %v69
  %1381 = vmatprep.subr.mxu0 0.0
  %1382 = vmatpush1.msra.mxu0 %v70
  %1383 = vmatprep.subr.mxu0 0.0
  %1384 = vmatpush1.msra.mxu0 %v71
  %1385 = vmatprep.subr.mxu0 0.0
  %1386 = vmatpush1.msra.mxu0 0.0
  %1387 = vmatprep.subr.mxu0 0.0
  %1388 = vmatpush1.msra.mxu0 0.0
  %1389 = vmatprep.subr.mxu0 0.0
  %1390 = vmatpush1.msra.mxu0 0.0
  %1391 = vmatprep.subr.mxu0 0.0
  %1392 = vmatpush1.msra.mxu0 0.0
  %1393 = vmatprep.subr.mxu0 0.0
  %1394 = vmatpush1.msra.mxu0 0.0
  %1395 = vmatprep.subr.mxu0 0.0
  %1396 = vmatpush1.msra.mxu0 0.0
  %1397 = vmatprep.subr.mxu0 0.0
  %1398 = vmatpush1.msra.mxu0 0.0
  %1399 = vmatprep.subr.mxu0 0.0
  %1400 = vmatpush1.msra.mxu0 0.0
  %1401 = vmatprep.subr.mxu0 0.0
  %1402 = vmatpush1.msra.mxu0 0.0
  %1403 = vmatprep.subr.mxu0 0.0
  %1404 = vmatpush1.msra.mxu0 0.0
  %1405 = vmatprep.subr.mxu0 0.0
  %1406 = vmatpush1.msra.mxu0 0.0
  %1407 = vmatprep.subr.mxu0 0.0
  %1408 = vmatpush1.msra.mxu0 0.0
  %1409 = vmatprep.subr.mxu0 0.0
  %1410 = vmatpush1.msra.mxu0 0.0
  %1411 = vmatprep.subr.mxu0 0.0
  %1412 = vmatpush1.msra.mxu0 0.0
  %1413 = vmatprep.subr.mxu0 0.0
  %1414 = vmatpush1.msra.mxu0 0.0
  %1415 = vmatprep.subr.mxu0 0.0
  %1416 = vmatpush1.msra.mxu0 0.0
  %1417 = vmatprep.subr.mxu0 0.0
  %1418 = vmatpush1.msra.mxu0 0.0
  %1419 = vmatprep.subr.mxu0 0.0
  %1420 = vmatpush1.msra.mxu0 0.0
  %1421 = vmatprep.subr.mxu0 0.0
  %1422 = vmatpush1.msra.mxu0 0.0
  %1423 = vmatprep.subr.mxu0 0.0
  %1424 = vmatpush1.msra.mxu0 0.0
  %1425 = vmatprep.subr.mxu0 0.0
  %1426 = vmatpush1.msra.mxu0 0.0
  %1427 = vmatprep.subr.mxu0 0.0
  %1428 = vmatpush1.msra.mxu0 0.0
  %1429 = vmatprep.subr.mxu0 0.0
  %1430 = vmatpush1.msra.mxu0 0.0
  %1431 = vmatprep.subr.mxu0 0.0
  %1432 = vmatpush1.msra.mxu0 0.0
  %1433 = vmatprep.subr.mxu0 0.0
  %1434 = vmatpush1.msra.mxu0 0.0
  %1435 = vmatprep.subr.mxu0 0.0
  %1436 = vmatpush1.msra.mxu0 0.0
  %1437 = vmatprep.subr.mxu0 0.0
  %1438 = vmatpush1.msra.mxu0 0.0
  %1439 = vmatprep.subr.mxu0 0.0
  %1440 = vmatpush1.msra.mxu0 0.0
  %1441 = vmatprep.mubr.f32.mxu0 0.0
  %1442 = vmatmul.mubr.f32.gmra.mrb[0].mxu0 %v1375
  %v1443 = vpop.f32.mrb[0].mxu0
  %v1444 = vadd.f32 0.0, %v1443
  %v1445 = vpop.f32.mrb[0].mxu0
  %1446 = vdwg.mxu0
  %v1447 = vadd.f32 %v1371, %v1444
  %v1448 = vxor.u32 %v1447, 2147483648
  %v1449 = vmul.f32 %v1448, 1.442695
  %v1450 = vpow.pop %v1449
  %v1451 = vadd.f32 %v1450, 1.0
  %v1452 = vrcp.pop %v1451
  %v1453 = vmul.f32 1.0, %v1452
  %v1454 = vtanh.pop %v1447
  %1456 = vrot.lane.b32.xlu0 %v1373, 32
  %v1457 = vpop.permute.xlu0 %1456
  %v1459 = vmul.f32 %v1453, %v1457
  %1461 = vrot.lane.b32.xlu0 %v1454, 64
  %v1462 = vpop.permute.xlu0 %1461
  %v1464 = vmul.f32 %v1453, %v1462
  %1466 = vrot.lane.b32.xlu0 %v1464, 32
  %v1467 = vpop.permute.xlu0 %1466
  %v1469 = vadd.f32 %v1459, %v1467
  %v1470 = vtanh.pop %v1469
  %1472 = vrot.lane.b32.xlu0 %v1470, 64
  %v1473 = vpop.permute.xlu0 %1472
  %v1475 = vmul.f32 %v1453, %v1473
  %1477 = vrot.lane.b32.xlu0 %v1475, 32
  %v1478 = vpop.permute.xlu0 %1477
  %1480 = vst.msk [vmem:[#allocation4] sm:$0x3] %vm182, %v1478
  %1482 = vrot.lane.b32.xlu0 %v1469, 96
  %v1483 = vpop.permute.xlu0 %1482
  %1485 = vst.msk [vmem:[#allocation5] sm:$0x3] %vm182, %v1483
  %s1486 = scalar_lea.vmem %s52, 4
  %1487 = vst.msk [vmem:[%s1486] sm:$0x3] %vm182, %v1478
  %s1488 = scalar_lea.vmem %s0, 12
  %v1489 = vld [vmem:[%s1488] sm:$0x3]
  %v1490 = vld [vmem:[#allocation2] sm:$0x3]
  %v1491 = vld [vmem:[#allocation3] sm:$0x3]
  %v1493 = vsel %vm75, %v1490, 0
  %1495 = vmatprep.subr.mxu0 0.0
  %1496 = vmatpush1.msra.mxu0 %v64
  %1497 = vmatprep.subr.mxu0 0.0
  %1498 = vmatpush1.msra.mxu0 %v65
  %1499 = vmatprep.subr.mxu0 0.0
  %1500 = vmatpush1.msra.mxu0 %v66
  %1501 = vmatprep.subr.mxu0 0.0
  %1502 = vmatpush1.msra.mxu0 %v67
  %1503 = vmatprep.subr.mxu0 0.0
  %1504 = vmatpush1.msra.mxu0 0.0
  %1505 = vmatprep.subr.mxu0 0.0
  %1506 = vmatpush1.msra.mxu0 0.0
  %1507 = vmatprep.subr.mxu0 0.0
  %1508 = vmatpush1.msra.mxu0 0.0
  %1509 = vmatprep.subr.mxu0 0.0
  %1510 = vmatpush1.msra.mxu0 0.0
  %1511 = vmatprep.subr.mxu0 0.0
  %1512 = vmatpush1.msra.mxu0 0.0
  %1513 = vmatprep.subr.mxu0 0.0
  %1514 = vmatpush1.msra.mxu0 0.0
  %1515 = vmatprep.subr.mxu0 0.0
  %1516 = vmatpush1.msra.mxu0 0.0
  %1517 = vmatprep.subr.mxu0 0.0
  %1518 = vmatpush1.msra.mxu0 0.0
  %1519 = vmatprep.subr.mxu0 0.0
  %1520 = vmatpush1.msra.mxu0 0.0
  %1521 = vmatprep.subr.mxu0 0.0
  %1522 = vmatpush1.msra.mxu0 0.0
  %1523 = vmatprep.subr.mxu0 0.0
  %1524 = vmatpush1.msra.mxu0 0.0
  %1525 = vmatprep.subr.mxu0 0.0
  %1526 = vmatpush1.msra.mxu0 0.0
  %1527 = vmatprep.subr.mxu0 0.0
  %1528 = vmatpush1.msra.mxu0 0.0
  %1529 = vmatprep.subr.mxu0 0.0
  %1530 = vmatpush1.msra.mxu0 0.0
  %1531 = vmatprep.subr.mxu0 0.0
  %1532 = vmatpush1.msra.mxu0 0.0
  %1533 = vmatprep.subr.mxu0 0.0
  %1534 = vmatpush1.msra.mxu0 0.0
  %1535 = vmatprep.subr.mxu0 0.0
  %1536 = vmatpush1.msra.mxu0 0.0
  %1537 = vmatprep.subr.mxu0 0.0
  %1538 = vmatpush1.msra.mxu0 0.0
  %1539 = vmatprep.subr.mxu0 0.0
  %1540 = vmatpush1.msra.mxu0 0.0
  %1541 = vmatprep.subr.mxu0 0.0
  %1542 = vmatpush1.msra.mxu0 0.0
  %1543 = vmatprep.subr.mxu0 0.0
  %1544 = vmatpush1.msra.mxu0 0.0
  %1545 = vmatprep.subr.mxu0 0.0
  %1546 = vmatpush1.msra.mxu0 0.0
  %1547 = vmatprep.subr.mxu0 0.0
  %1548 = vmatpush1.msra.mxu0 0.0
  %1549 = vmatprep.subr.mxu0 0.0
  %1550 = vmatpush1.msra.mxu0 0.0
  %1551 = vmatprep.subr.mxu0 0.0
  %1552 = vmatpush1.msra.mxu0 0.0
  %1553 = vmatprep.subr.mxu0 0.0
  %1554 = vmatpush1.msra.mxu0 0.0
  %1555 = vmatprep.subr.mxu0 0.0
  %1556 = vmatpush1.msra.mxu0 0.0
  %1557 = vmatprep.subr.mxu0 0.0
  %1558 = vmatpush1.msra.mxu0 0.0
  %1559 = vmatprep.mubr.f32.mxu0 0.0
  %1560 = vmatmul.mubr.f32.gmra.mrb[0].mxu0 %v1493
  %v1561 = vpop.f32.mrb[0].mxu0
  %v1562 = vadd.f32 0.0, %v1561
  %v1563 = vpop.f32.mrb[0].mxu0
  %1564 = vdwg.mxu0
  %v1565 = vadd.f32 %v1489, %v1562
  %v1566 = vxor.u32 %v1565, 2147483648
  %v1567 = vmul.f32 %v1566, 1.442695
  %v1568 = vpow.pop %v1567
  %v1569 = vadd.f32 %v1568, 1.0
  %v1570 = vrcp.pop %v1569
  %v1571 = vmul.f32 1.0, %v1570
  %v1572 = vtanh.pop %v1565
  %1574 = vrot.lane.b32.xlu0 %v1491, 32
  %v1575 = vpop.permute.xlu0 %1574
  %v1577 = vmul.f32 %v1571, %v1575
  %1579 = vrot.lane.b32.xlu0 %v1572, 64
  %v1580 = vpop.permute.xlu0 %1579
  %v1582 = vmul.f32 %v1571, %v1580
  %1584 = vrot.lane.b32.xlu0 %v1582, 32
  %v1585 = vpop.permute.xlu0 %1584
  %v1587 = vadd.f32 %v1577, %v1585
  %v1588 = vtanh.pop %v1587
  %1590 = vrot.lane.b32.xlu0 %v1588, 64
  %v1591 = vpop.permute.xlu0 %1590
  %v1593 = vmul.f32 %v1571, %v1591
  %1595 = vrot.lane.b32.xlu0 %v1593, 32
  %v1596 = vpop.permute.xlu0 %1595
  %1598 = vst.msk [vmem:[#allocation2] sm:$0x3] %vm182, %v1596
  %1600 = vrot.lane.b32.xlu0 %v1587, 96
  %v1601 = vpop.permute.xlu0 %1600
  %1603 = vst.msk [vmem:[#allocation3] sm:$0x3] %vm182, %v1601
  %s1604 = scalar_lea.vmem %s4, 12
  %1605 = vst.msk [vmem:[%s1604] sm:$0x3] %vm182, %v1596
  %s1606 = scalar_lea.vmem %s44, 2
  %v1607 = vld [vmem:[%s1606] sm:$0x3]
  %v1608 = vld [vmem:[#allocation4] sm:$0x3]
  %v1609 = vld [vmem:[#allocation5] sm:$0x3]
  %v1611 = vsel %vm75, %v1608, 0
  %1613 = vmatprep.subr.mxu0 0.0
  %1614 = vmatpush1.msra.mxu0 %v68
  %1615 = vmatprep.subr.mxu0 0.0
  %1616 = vmatpush1.msra.mxu0 %v69
  %1617 = vmatprep.subr.mxu0 0.0
  %1618 = vmatpush1.msra.mxu0 %v70
  %1619 = vmatprep.subr.mxu0 0.0
  %1620 = vmatpush1.msra.mxu0 %v71
  %1621 = vmatprep.subr.mxu0 0.0
  %1622 = vmatpush1.msra.mxu0 0.0
  %1623 = vmatprep.subr.mxu0 0.0
  %1624 = vmatpush1.msra.mxu0 0.0
  %1625 = vmatprep.subr.mxu0 0.0
  %1626 = vmatpush1.msra.mxu0 0.0
  %1627 = vmatprep.subr.mxu0 0.0
  %1628 = vmatpush1.msra.mxu0 0.0
  %1629 = vmatprep.subr.mxu0 0.0
  %1630 = vmatpush1.msra.mxu0 0.0
  %1631 = vmatprep.subr.mxu0 0.0
  %1632 = vmatpush1.msra.mxu0 0.0
  %1633 = vmatprep.subr.mxu0 0.0
  %1634 = vmatpush1.msra.mxu0 0.0
  %1635 = vmatprep.subr.mxu0 0.0
  %1636 = vmatpush1.msra.mxu0 0.0
  %1637 = vmatprep.subr.mxu0 0.0
  %1638 = vmatpush1.msra.mxu0 0.0
  %1639 = vmatprep.subr.mxu0 0.0
  %1640 = vmatpush1.msra.mxu0 0.0
  %1641 = vmatprep.subr.mxu0 0.0
  %1642 = vmatpush1.msra.mxu0 0.0
  %1643 = vmatprep.subr.mxu0 0.0
  %1644 = vmatpush1.msra.mxu0 0.0
  %1645 = vmatprep.subr.mxu0 0.0
  %1646 = vmatpush1.msra.mxu0 0.0
  %1647 = vmatprep.subr.mxu0 0.0
  %1648 = vmatpush1.msra.mxu0 0.0
  %1649 = vmatprep.subr.mxu0 0.0
  %1650 = vmatpush1.msra.mxu0 0.0
  %1651 = vmatprep.subr.mxu0 0.0
  %1652 = vmatpush1.msra.mxu0 0.0
  %1653 = vmatprep.subr.mxu0 0.0
  %1654 = vmatpush1.msra.mxu0 0.0
  %1655 = vmatprep.subr.mxu0 0.0
  %1656 = vmatpush1.msra.mxu0 0.0
  %1657 = vmatprep.subr.mxu0 0.0
  %1658 = vmatpush1.msra.mxu0 0.0
  %1659 = vmatprep.subr.mxu0 0.0
  %1660 = vmatpush1.msra.mxu0 0.0
  %1661 = vmatprep.subr.mxu0 0.0
  %1662 = vmatpush1.msra.mxu0 0.0
  %1663 = vmatprep.subr.mxu0 0.0
  %1664 = vmatpush1.msra.mxu0 0.0
  %1665 = vmatprep.subr.mxu0 0.0
  %1666 = vmatpush1.msra.mxu0 0.0
  %1667 = vmatprep.subr.mxu0 0.0
  %1668 = vmatpush1.msra.mxu0 0.0
  %1669 = vmatprep.subr.mxu0 0.0
  %1670 = vmatpush1.msra.mxu0 0.0
  %1671 = vmatprep.subr.mxu0 0.0
  %1672 = vmatpush1.msra.mxu0 0.0
  %1673 = vmatprep.subr.mxu0 0.0
  %1674 = vmatpush1.msra.mxu0 0.0
  %1675 = vmatprep.subr.mxu0 0.0
  %1676 = vmatpush1.msra.mxu0 0.0
  %1677 = vmatprep.mubr.f32.mxu0 0.0
  %1678 = vmatmul.mubr.f32.gmra.mrb[0].mxu0 %v1611
  %v1679 = vpop.f32.mrb[0].mxu0
  %v1680 = vadd.f32 0.0, %v1679
  %v1681 = vpop.f32.mrb[0].mxu0
  %1682 = vdwg.mxu0
  %v1683 = vadd.f32 %v1607, %v1680
  %v1684 = vxor.u32 %v1683, 2147483648
  %v1685 = vmul.f32 %v1684, 1.442695
  %v1686 = vpow.pop %v1685
  %v1687 = vadd.f32 %v1686, 1.0
  %v1688 = vrcp.pop %v1687
  %v1689 = vmul.f32 1.0, %v1688
  %v1690 = vtanh.pop %v1683
  %1692 = vrot.lane.b32.xlu0 %v1609, 32
  %v1693 = vpop.permute.xlu0 %1692
  %v1695 = vmul.f32 %v1689, %v1693
  %1697 = vrot.lane.b32.xlu0 %v1690, 64
  %v1698 = vpop.permute.xlu0 %1697
  %v1700 = vmul.f32 %v1689, %v1698
  %1702 = vrot.lane.b32.xlu0 %v1700, 32
  %v1703 = vpop.permute.xlu0 %1702
  %v1705 = vadd.f32 %v1695, %v1703
  %v1706 = vtanh.pop %v1705
  %1708 = vrot.lane.b32.xlu0 %v1706, 64
  %v1709 = vpop.permute.xlu0 %1708
  %v1711 = vmul.f32 %v1689, %v1709
  %1713 = vrot.lane.b32.xlu0 %v1711, 32
  %v1714 = vpop.permute.xlu0 %1713
  %1716 = vst.msk [vmem:[#allocation4] sm:$0x3] %vm182, %v1714
  %1718 = vrot.lane.b32.xlu0 %v1705, 96
  %v1719 = vpop.permute.xlu0 %1718
  %1721 = vst.msk [vmem:[#allocation5] sm:$0x3] %vm182, %v1719
  %s1722 = scalar_lea.vmem %s52, 2
  %1723 = vst.msk [vmem:[%s1722] sm:$0x3] %vm182, %v1714
  %s1724 = scalar_lea.vmem %s0, 14
  %v1725 = vld [vmem:[%s1724] sm:$0x3]
  %v1726 = vld [vmem:[#allocation2] sm:$0x3]
  %v1727 = vld [vmem:[#allocation3] sm:$0x3]
  %v1729 = vsel %vm75, %v1726, 0
  %1731 = vmatprep.subr.mxu0 0.0
  %1732 = vmatpush1.msra.mxu0 %v64
  %1733 = vmatprep.subr.mxu0 0.0
  %1734 = vmatpush1.msra.mxu0 %v65
  %1735 = vmatprep.subr.mxu0 0.0
  %1736 = vmatpush1.msra.mxu0 %v66
  %1737 = vmatprep.subr.mxu0 0.0
  %1738 = vmatpush1.msra.mxu0 %v67
  %1739 = vmatprep.subr.mxu0 0.0
  %1740 = vmatpush1.msra.mxu0 0.0
  %1741 = vmatprep.subr.mxu0 0.0
  %1742 = vmatpush1.msra.mxu0 0.0
  %1743 = vmatprep.subr.mxu0 0.0
  %1744 = vmatpush1.msra.mxu0 0.0
  %1745 = vmatprep.subr.mxu0 0.0
  %1746 = vmatpush1.msra.mxu0 0.0
  %1747 = vmatprep.subr.mxu0 0.0
  %1748 = vmatpush1.msra.mxu0 0.0
  %1749 = vmatprep.subr.mxu0 0.0
  %1750 = vmatpush1.msra.mxu0 0.0
  %1751 = vmatprep.subr.mxu0 0.0
  %1752 = vmatpush1.msra.mxu0 0.0
  %1753 = vmatprep.subr.mxu0 0.0
  %1754 = vmatpush1.msra.mxu0 0.0
  %1755 = vmatprep.subr.mxu0 0.0
  %1756 = vmatpush1.msra.mxu0 0.0
  %1757 = vmatprep.subr.mxu0 0.0
  %1758 = vmatpush1.msra.mxu0 0.0
  %1759 = vmatprep.subr.mxu0 0.0
  %1760 = vmatpush1.msra.mxu0 0.0
  %1761 = vmatprep.subr.mxu0 0.0
  %1762 = vmatpush1.msra.mxu0 0.0
  %1763 = vmatprep.subr.mxu0 0.0
  %1764 = vmatpush1.msra.mxu0 0.0
  %1765 = vmatprep.subr.mxu0 0.0
  %1766 = vmatpush1.msra.mxu0 0.0
  %1767 = vmatprep.subr.mxu0 0.0
  %1768 = vmatpush1.msra.mxu0 0.0
  %1769 = vmatprep.subr.mxu0 0.0
  %1770 = vmatpush1.msra.mxu0 0.0
  %1771 = vmatprep.subr.mxu0 0.0
  %1772 = vmatpush1.msra.mxu0 0.0
  %1773 = vmatprep.subr.mxu0 0.0
  %1774 = vmatpush1.msra.mxu0 0.0
  %1775 = vmatprep.subr.mxu0 0.0
  %1776 = vmatpush1.msra.mxu0 0.0
  %1777 = vmatprep.subr.mxu0 0.0
  %1778 = vmatpush1.msra.mxu0 0.0
  %1779 = vmatprep.subr.mxu0 0.0
  %1780 = vmatpush1.msra.mxu0 0.0
  %1781 = vmatprep.subr.mxu0 0.0
  %1782 = vmatpush1.msra.mxu0 0.0
  %1783 = vmatprep.subr.mxu0 0.0
  %1784 = vmatpush1.msra.mxu0 0.0
  %1785 = vmatprep.subr.mxu0 0.0
  %1786 = vmatpush1.msra.mxu0 0.0
  %1787 = vmatprep.subr.mxu0 0.0
  %1788 = vmatpush1.msra.mxu0 0.0
  %1789 = vmatprep.subr.mxu0 0.0
  %1790 = vmatpush1.msra.mxu0 0.0
  %1791 = vmatprep.subr.mxu0 0.0
  %1792 = vmatpush1.msra.mxu0 0.0
  %1793 = vmatprep.subr.mxu0 0.0
  %1794 = vmatpush1.msra.mxu0 0.0
  %1795 = vmatprep.mubr.f32.mxu0 0.0
  %1796 = vmatmul.mubr.f32.gmra.mrb[0].mxu0 %v1729
  %v1797 = vpop.f32.mrb[0].mxu0
  %v1798 = vadd.f32 0.0, %v1797
  %v1799 = vpop.f32.mrb[0].mxu0
  %1800 = vdwg.mxu0
  %v1801 = vadd.f32 %v1725, %v1798
  %v1802 = vxor.u32 %v1801, 2147483648
  %v1803 = vmul.f32 %v1802, 1.442695
  %v1804 = vpow.pop %v1803
  %v1805 = vadd.f32 %v1804, 1.0
  %v1806 = vrcp.pop %v1805
  %v1807 = vmul.f32 1.0, %v1806
  %v1808 = vtanh.pop %v1801
  %1810 = vrot.lane.b32.xlu0 %v1727, 32
  %v1811 = vpop.permute.xlu0 %1810
  %v1813 = vmul.f32 %v1807, %v1811
  %1815 = vrot.lane.b32.xlu0 %v1808, 64
  %v1816 = vpop.permute.xlu0 %1815
  %v1818 = vmul.f32 %v1807, %v1816
  %1820 = vrot.lane.b32.xlu0 %v1818, 32
  %v1821 = vpop.permute.xlu0 %1820
  %v1823 = vadd.f32 %v1813, %v1821
  %v1824 = vtanh.pop %v1823
  %1826 = vrot.lane.b32.xlu0 %v1824, 64
  %v1827 = vpop.permute.xlu0 %1826
  %v1829 = vmul.f32 %v1807, %v1827
  %1831 = vrot.lane.b32.xlu0 %v1829, 32
  %v1832 = vpop.permute.xlu0 %1831
  %1834 = vst.msk [vmem:[#allocation2] sm:$0x3] %vm182, %v1832
  %1836 = vrot.lane.b32.xlu0 %v1823, 96
  %v1837 = vpop.permute.xlu0 %1836
  %1839 = vst.msk [vmem:[#allocation3] sm:$0x3] %vm182, %v1837
  %s1840 = scalar_lea.vmem %s4, 14
  %1841 = vst.msk [vmem:[%s1840] sm:$0x3] %vm182, %v1832
  %v1842 = vld [vmem:[%s44] sm:$0x3]
  %v1843 = vld [vmem:[#allocation4] sm:$0x3]
  %v1844 = vld [vmem:[#allocation5] sm:$0x3]
  %v1846 = vsel %vm75, %v1843, 0
  %1848 = vmatprep.subr.mxu0 0.0
  %1849 = vmatpush1.msra.mxu0 %v68
  %1850 = vmatprep.subr.mxu0 0.0
  %1851 = vmatpush1.msra.mxu0 %v69
  %1852 = vmatprep.subr.mxu0 0.0
  %1853 = vmatpush1.msra.mxu0 %v70
  %1854 = vmatprep.subr.mxu0 0.0
  %1855 = vmatpush1.msra.mxu0 %v71
  %1856 = vmatprep.subr.mxu0 0.0
  %1857 = vmatpush1.msra.mxu0 0.0
  %1858 = vmatprep.subr.mxu0 0.0
  %1859 = vmatpush1.msra.mxu0 0.0
  %1860 = vmatprep.subr.mxu0 0.0
  %1861 = vmatpush1.msra.mxu0 0.0
  %1862 = vmatprep.subr.mxu0 0.0
  %1863 = vmatpush1.msra.mxu0 0.0
  %1864 = vmatprep.subr.mxu0 0.0
  %1865 = vmatpush1.msra.mxu0 0.0
  %1866 = vmatprep.subr.mxu0 0.0
  %1867 = vmatpush1.msra.mxu0 0.0
  %1868 = vmatprep.subr.mxu0 0.0
  %1869 = vmatpush1.msra.mxu0 0.0
  %1870 = vmatprep.subr.mxu0 0.0
  %1871 = vmatpush1.msra.mxu0 0.0
  %1872 = vmatprep.subr.mxu0 0.0
  %1873 = vmatpush1.msra.mxu0 0.0
  %1874 = vmatprep.subr.mxu0 0.0
  %1875 = vmatpush1.msra.mxu0 0.0
  %1876 = vmatprep.subr.mxu0 0.0
  %1877 = vmatpush1.msra.mxu0 0.0
  %1878 = vmatprep.subr.mxu0 0.0
  %1879 = vmatpush1.msra.mxu0 0.0
  %1880 = vmatprep.subr.mxu0 0.0
  %1881 = vmatpush1.msra.mxu0 0.0
  %1882 = vmatprep.subr.mxu0 0.0
  %1883 = vmatpush1.msra.mxu0 0.0
  %1884 = vmatprep.subr.mxu0 0.0
  %1885 = vmatpush1.msra.mxu0 0.0
  %1886 = vmatprep.subr.mxu0 0.0
  %1887 = vmatpush1.msra.mxu0 0.0
  %1888 = vmatprep.subr.mxu0 0.0
  %1889 = vmatpush1.msra.mxu0 0.0
  %1890 = vmatprep.subr.mxu0 0.0
  %1891 = vmatpush1.msra.mxu0 0.0
  %1892 = vmatprep.subr.mxu0 0.0
  %1893 = vmatpush1.msra.mxu0 0.0
  %1894 = vmatprep.subr.mxu0 0.0
  %1895 = vmatpush1.msra.mxu0 0.0
  %1896 = vmatprep.subr.mxu0 0.0
  %1897 = vmatpush1.msra.mxu0 0.0
  %1898 = vmatprep.subr.mxu0 0.0
  %1899 = vmatpush1.msra.mxu0 0.0
  %1900 = vmatprep.subr.mxu0 0.0
  %1901 = vmatpush1.msra.mxu0 0.0
  %1902 = vmatprep.subr.mxu0 0.0
  %1903 = vmatpush1.msra.mxu0 0.0
  %1904 = vmatprep.subr.mxu0 0.0
  %1905 = vmatpush1.msra.mxu0 0.0
  %1906 = vmatprep.subr.mxu0 0.0
  %1907 = vmatpush1.msra.mxu0 0.0
  %1908 = vmatprep.subr.mxu0 0.0
  %1909 = vmatpush1.msra.mxu0 0.0
  %1910 = vmatprep.subr.mxu0 0.0
  %1911 = vmatpush1.msra.mxu0 0.0
  %1912 = vmatprep.mubr.f32.mxu0 0.0
  %1913 = vmatmul.mubr.f32.gmra.mrb[0].mxu0 %v1846
  %v1914 = vpop.f32.mrb[0].mxu0
  %v1915 = vadd.f32 0.0, %v1914
  %v1916 = vpop.f32.mrb[0].mxu0
  %1917 = vdwg.mxu0
  %v1918 = vadd.f32 %v1842, %v1915
  %v1919 = vxor.u32 %v1918, 2147483648
  %v1920 = vmul.f32 %v1919, 1.442695
  %v1921 = vpow.pop %v1920
  %v1922 = vadd.f32 %v1921, 1.0
  %v1923 = vrcp.pop %v1922
  %v1924 = vmul.f32 1.0, %v1923
  %v1925 = vtanh.pop %v1918
  %1927 = vrot.lane.b32.xlu0 %v1844, 32
  %v1928 = vpop.permute.xlu0 %1927
  %v1930 = vmul.f32 %v1924, %v1928
  %1932 = vrot.lane.b32.xlu0 %v1925, 64
  %v1933 = vpop.permute.xlu0 %1932
  %v1935 = vmul.f32 %v1924, %v1933
  %1937 = vrot.lane.b32.xlu0 %v1935, 32
  %v1938 = vpop.permute.xlu0 %1937
  %v1940 = vadd.f32 %v1930, %v1938
  %v1941 = vtanh.pop %v1940
  %1943 = vrot.lane.b32.xlu0 %v1941, 64
  %v1944 = vpop.permute.xlu0 %1943
  %v1946 = vmul.f32 %v1924, %v1944
  %1948 = vrot.lane.b32.xlu0 %v1946, 32
  %v1949 = vpop.permute.xlu0 %1948
  %1951 = vst.msk [vmem:[#allocation4] sm:$0x3] %vm182, %v1949
  %1953 = vrot.lane.b32.xlu0 %v1940, 96
  %v1954 = vpop.permute.xlu0 %1953
  %1956 = vst.msk [vmem:[#allocation5] sm:$0x3] %vm182, %v1954
  %1957 = vst.msk [vmem:[%s52] sm:$0x3] %vm182, %v1949
  %s1958 = ssub.s32 0, 0
  %s1959 = smul.u32 8, %s1958
  %p1960 = scmp.lt.s32.totalorder %s1959, 7
  %s1961 = scalar_select %p1960, %s1959, 7
  %s1962 = smul.addr %s1961, 2
  %s1963 = scalar_lea.vmem %s5, %s1962
  // Predicated region
  $region22: #{lstm_corrector_forward.3} parent=0 // pred_check
    _
  $region23: #{lstm_corrector_forward.3} parent=0 // pred_check_branch
    %1965 = sbr.rel (0) target = $region25
  $region24: #{lstm_corrector_forward.3} parent=0 // pred_region
    _
  $region25: #{lstm_corrector_forward.3} parent=0 // pred_fallthru
    _
  // Predicated region
  $region26: #{lstm_corrector_forward.3} parent=0 // pred_check
    _
  $region27: #{lstm_corrector_forward.3} parent=0 // pred_check_branch
    %1967 = sbr.rel (0) target = $region29
  $region28: #{lstm_corrector_forward.3} parent=0 // pred_region
    %s1968 = ssub.s32 0, 0
    %s1969 = smul.u32 8, %s1968
  $region29: #{lstm_corrector_forward.3} parent=0 // pred_fallthru
    _
  // Predicated region
  $region30: #{lstm_corrector_forward.3} parent=0 // pred_check
    _
  $region31: #{lstm_corrector_forward.3} parent=0 // pred_check_branch
    %1971 = sbr.rel (0) target = $region33
  $region32: #{lstm_corrector_forward.3} parent=0 // pred_region
    _
  $region33: #{lstm_corrector_forward.3} parent=0 // pred_fallthru
    _
  // Predicated region
  $region34: #{lstm_corrector_forward.3} parent=0 // pred_check
    _
  $region35: #{lstm_corrector_forward.3} parent=0 // pred_check_branch
    %1973 = sbr.rel (0) target = $region37
  $region36: #{lstm_corrector_forward.3} parent=0 // pred_region
    %s1974 = ssub.s32 0, 0
    %s1975 = smul.u32 8, %s1974
    %p1976 = scmp.lt.s32.totalorder %s1975, 7
    %s1977 = scalar_select %p1976, %s1975, 7
    %s1978 = smul.addr %s1977, 2
    %s1979 = scalar_lea.vmem %s5, %s1978
  $region37: #{lstm_corrector_forward.3} parent=0 // pred_fallthru
    _

</llo_original>
